<compile_context>
chip_gen: v7x
topology: tpu7x:2x2x1
jax: 0.10.0
libtpu: 0.0.40
codegen_flags: <defaults>
</compile_context>

<pallas_src>
import math

import jax
import jax.numpy as jnp
from jax.experimental import pallas as pl
from jax.experimental.pallas import tpu as pltpu  # noqa: F401  (TPU backend)

# ----------------------- small synthetic BERT config -----------------------
BATCH = 2
SEQ = 8            # n_enc_seq
D_HIDN = 32        # d_hidn
N_HEAD = 2         # n_head
D_HEAD = 16        # d_head
D_FF = 64          # d_ff
N_LAYER = 2        # n_layer
VOCAB = 32         # n_enc_vocab
N_SEG = 2          # n_seg_type
N_OUTPUT = 4       # n_output
I_PAD = 0          # i_pad
LN_EPS = 1e-12     # layer_norm_epsilon

# residual `x + att_out` relies on n_head*d_head == d_hidn
assert N_HEAD * D_HEAD == D_HIDN


# ------------------------------- kernel -------------------------------------
def _layernorm(x, g, b):
    mu = jnp.mean(x, axis=-1, keepdims=True)
    var = jnp.mean((x - mu) ** 2, axis=-1, keepdims=True)
    return (x - mu) * jax.lax.rsqrt(var + LN_EPS) * g + b


def _softmax_lastdim(s):
    m = jnp.max(s, axis=-1, keepdims=True)
    e = jnp.exp(s - m)
    return e * pl.reciprocal(jnp.sum(e, axis=-1, keepdims=True), approx=True)


def model_kernel(x_ref, pad_ref,
                 wqkv_ref, bqkv_ref, wo_ref, w1_ref, b1_ref, w2_ref, vecs_ref,
                 wp_ref, bp_ref, wc_ref,
                 logits_ref, attn_ref):
    """Entire MovieClassification forward pass (all layers) in one kernel."""
    B, S = pad_ref.shape
    HDH = N_HEAD * D_HEAD
    scale = 1.0 / math.sqrt(D_HEAD)

    x = x_ref[...]                      # (B*S, D), batch flattened into rows
    pad = pad_ref[...]                  # (B, S): 1.0 where the key token is PAD

    for l in range(N_LAYER):            # static unroll over layers (weights in VMEM)
        wqkv = wqkv_ref[l]              # (D, 3*H*DH)
        bqkv = bqkv_ref[l]              # (1, 3*H*DH)
        wo = wo_ref[l]                  # (H*DH, D)
        w1 = w1_ref[l]                  # (D, F)
        b1 = b1_ref[l]                  # (1, F)
        w2 = w2_ref[l]                  # (F, D)
        vecs = vecs_ref[l]              # (6, D): b_o, ln1_g, ln1_b, b_ff2, ln2_g, ln2_b
        b_o, ln1_g, ln1_b = vecs[0:1], vecs[1:2], vecs[2:3]
        b_f2, ln2_g, ln2_b = vecs[3:4], vecs[4:5], vecs[5:6]

        # fused QKV projection on the full (B*S, D) slab: one (16,32)@(32,96) matmul
        qkv = jnp.dot(x, wqkv, preferred_element_type=jnp.float32) + bqkv

        # multi-head self-attention, per (batch, head) block
        ctx_rows = []
        for b in range(B):
            rows = slice(b * S, (b + 1) * S)
            key_is_pad = pad[b:b + 1, :] > 0.5           # (1, S) -> broadcast over queries
            head_ctx = []
            for h in range(N_HEAD):
                qh = qkv[rows, h * D_HEAD:(h + 1) * D_HEAD]
                kh = qkv[rows, HDH + h * D_HEAD:HDH + (h + 1) * D_HEAD]
                vh = qkv[rows, 2 * HDH + h * D_HEAD:2 * HDH + (h + 1) * D_HEAD]
                scores = jnp.dot(qh, kh.T, preferred_element_type=jnp.float32) * scale
                scores = jnp.where(key_is_pad, -1e9, scores)   # masked_fill_(mask, -1e9)
                probs = _softmax_lastdim(scores)               # (S, S)
                attn_ref[l, b, h] = probs
                head_ctx.append(jnp.dot(probs, vh, preferred_element_type=jnp.float32))
            ctx_rows.append(jnp.concatenate(head_ctx, axis=-1))   # (S, H*DH)
        ctx = jnp.concatenate(ctx_rows, axis=0)                   # (B*S, H*DH)

        # attention output projection + residual + LayerNorm1
        att_out = jnp.dot(ctx, wo, preferred_element_type=jnp.float32) + b_o
        h1 = _layernorm(x + att_out, ln1_g, ln1_b)

        # position-wise FFN (Conv1d with k=1 == per-token linear) on the full slab
        # TODO(synk): torch.F.gelu defaults to exact (erf) gelu; tanh approximation used here.
        f = jnp.dot(h1, w1, preferred_element_type=jnp.float32) + b1
        f = jax.nn.gelu(f, approximate=True)
        f = jnp.dot(f, w2, preferred_element_type=jnp.float32) + b_f2

        # residual + LayerNorm2
        x = _layernorm(h1 + f, ln2_g, ln2_b)

    # BERT pooler (linear + tanh on the CLS token) fused with projection_cls (bias=False)
    cls_tok = jnp.concatenate([x[b * S:b * S + 1, :] for b in range(B)], axis=0)   # (B, D)
    pooled = jnp.tanh(jnp.dot(cls_tok, wp_ref[...], preferred_element_type=jnp.float32)
                      + bp_ref[...])
    logits_ref[...] = jnp.dot(pooled, wc_ref[...], preferred_element_type=jnp.float32)


# ------------------------------- wrapper ------------------------------------
def movie_classification_forward(params, inputs, segments):
    """Mirrors MovieClassification.forward -> (logits_cls, attn_probs)."""
    B, S = inputs.shape
    pad = inputs == I_PAD                                              # (B, S)
    positions = jnp.arange(1, S + 1, dtype=jnp.int32)[None, :] * (~pad).astype(jnp.int32)

    # embeddings (glue: integer gathers done in plain JAX)
    x = (params["tok_emb"][inputs]
         + params["pos_emb"][positions]
         + params["seg_emb"][segments]).astype(jnp.float32)            # (B, S, D)

    logits, attn = pl.pallas_call(
        model_kernel,
        out_shape=(
            jax.ShapeDtypeStruct((B, N_OUTPUT), jnp.float32),
            jax.ShapeDtypeStruct((N_LAYER, B, N_HEAD, S, S), jnp.float32),
        ),
    )(x.reshape(B * S, D_HIDN), pad.astype(jnp.float32),
      params["w_qkv"], params["b_qkv"], params["w_o"],
      params["w_ff1"], params["b_ff1"], params["w_ff2"], params["vec_pack"],
      params["pooler_w"], params["pooler_b"], params["cls_w"])

    attn_probs = tuple(attn[l] for l in range(N_LAYER))                # per-layer (B, H, S, S)
    return logits, attn_probs


# ----------------------------- parameters -----------------------------------
def init_params(key):
    keys = iter(jax.random.split(key, 32))

    def nrm(shape, scale=0.02):
        return (scale * jax.random.normal(next(keys), shape)).astype(jnp.float32)

    HDH = N_HEAD * D_HEAD
    # packed per-layer (1, D) vectors: [b_attn_out, ln1_g, ln1_b, b_ff2, ln2_g, ln2_b]
    vec_pack = jnp.stack([
        jnp.zeros((D_HIDN,)), jnp.ones((D_HIDN,)), jnp.zeros((D_HIDN,)),
        jnp.zeros((D_HIDN,)), jnp.ones((D_HIDN,)), jnp.zeros((D_HIDN,)),
    ], axis=0).astype(jnp.float32)                                     # (6, D)

    params = {
        "tok_emb": nrm((VOCAB, D_HIDN)),
        "pos_emb": nrm((SEQ + 1, D_HIDN)),   # index 0 reserved for PAD positions
        "seg_emb": nrm((N_SEG, D_HIDN)),
        # encoder weights, stacked over the layer axis
        "w_qkv": nrm((N_LAYER, D_HIDN, 3 * HDH)),                      # [W_Q | W_K | W_V]
        "b_qkv": jnp.zeros((N_LAYER, 1, 3 * HDH), jnp.float32),
        "w_o": nrm((N_LAYER, HDH, D_HIDN)),
        "w_ff1": nrm((N_LAYER, D_HIDN, D_FF)),                         # conv1 (k=1)
        "b_ff1": jnp.zeros((N_LAYER, 1, D_FF), jnp.float32),
        "w_ff2": nrm((N_LAYER, D_FF, D_HIDN)),                         # conv2 (k=1)
        "vec_pack": jnp.tile(vec_pack[None], (N_LAYER, 1, 1)),
        # classification head
        "pooler_w": nrm((D_HIDN, D_HIDN)),
        "pooler_b": jnp.zeros((1, D_HIDN), jnp.float32),
        "cls_w": nrm((D_HIDN, N_OUTPUT)),    # projection_cls has bias=False
    }
    return params


# --------------------------------- main --------------------------------------
if __name__ == "__main__":
    key = jax.random.PRNGKey(0)
    k_param, k_in, k_seg = jax.random.split(key, 3)

    params = init_params(k_param)

    inputs = jax.random.randint(k_in, (BATCH, SEQ), 1, VOCAB, dtype=jnp.int32)
    inputs = inputs.at[1, -2:].set(I_PAD)                 # some PAD tokens
    segments = jax.random.randint(k_seg, (BATCH, SEQ), 0, N_SEG, dtype=jnp.int32)

    fwd = jax.jit(movie_classification_forward)
    logits_cls, attn_probs = fwd(params, inputs, segments)
    jax.block_until_ready(logits_cls)
    for p in attn_probs:
        jax.block_until_ready(p)

    assert logits_cls.shape == (BATCH, N_OUTPUT)
    assert len(attn_probs) == N_LAYER
    assert attn_probs[0].shape == (BATCH, N_HEAD, SEQ, SEQ)
    print("KERNEL_OK")
</pallas_src>

<mosaic_0001>
module attributes {stable_mosaic.version = 11 : i64} {
  func.func @model_kernel(%arg0: memref<16x32xf32, #tpu.memory_space<vmem>>, %arg1: memref<2x8xf32, #tpu.memory_space<vmem>>, %arg2: memref<2x32x96xf32, #tpu.memory_space<vmem>>, %arg3: memref<2x1x96xf32, #tpu.memory_space<vmem>>, %arg4: memref<2x32x32xf32, #tpu.memory_space<vmem>>, %arg5: memref<2x32x64xf32, #tpu.memory_space<vmem>>, %arg6: memref<2x1x64xf32, #tpu.memory_space<vmem>>, %arg7: memref<2x64x32xf32, #tpu.memory_space<vmem>>, %arg8: memref<2x6x32xf32, #tpu.memory_space<vmem>>, %arg9: memref<32x32xf32, #tpu.memory_space<vmem>>, %arg10: memref<1x32xf32, #tpu.memory_space<vmem>>, %arg11: memref<32x4xf32, #tpu.memory_space<vmem>>, %arg12: memref<2x4xf32, #tpu.memory_space<vmem>>, %arg13: memref<2x2x2x8x8xf32, #tpu.memory_space<vmem>>) attributes {dimension_semantics = [], scalar_prefetch = 0 : i64, scratch_operands = 0 : i64, tpu.core_type = #tpu.core_type<tc>} {
    %c0 = arith.constant 0 : index
    %c0_0 = arith.constant 0 : index
    %0 = vector.load %arg0[%c0, %c0_0] : memref<16x32xf32, #tpu.memory_space<vmem>>, vector<16x32xf32>
    %c0_1 = arith.constant 0 : index
    %c0_2 = arith.constant 0 : index
    %1 = vector.load %arg1[%c0_1, %c0_2] : memref<2x8xf32, #tpu.memory_space<vmem>>, vector<2x8xf32>
    %c0_3 = arith.constant 0 : index
    %c0_4 = arith.constant 0 : index
    %c0_5 = arith.constant 0 : index
    %2 = vector.load %arg2[%c0_3, %c0_4, %c0_5] : memref<2x32x96xf32, #tpu.memory_space<vmem>>, vector<1x32x96xf32>
    %3 = vector.shape_cast %2 : vector<1x32x96xf32> to vector<32x96xf32>
    %c0_6 = arith.constant 0 : index
    %c0_7 = arith.constant 0 : index
    %c0_8 = arith.constant 0 : index
    %4 = vector.load %arg3[%c0_6, %c0_7, %c0_8] : memref<2x1x96xf32, #tpu.memory_space<vmem>>, vector<1x1x96xf32>
    %5 = vector.shape_cast %4 : vector<1x1x96xf32> to vector<1x96xf32>
    %c0_9 = arith.constant 0 : index
    %c0_10 = arith.constant 0 : index
    %c0_11 = arith.constant 0 : index
    %6 = vector.load %arg4[%c0_9, %c0_10, %c0_11] : memref<2x32x32xf32, #tpu.memory_space<vmem>>, vector<1x32x32xf32>
    %7 = vector.shape_cast %6 : vector<1x32x32xf32> to vector<32x32xf32>
    %c0_12 = arith.constant 0 : index
    %c0_13 = arith.constant 0 : index
    %c0_14 = arith.constant 0 : index
    %8 = vector.load %arg5[%c0_12, %c0_13, %c0_14] : memref<2x32x64xf32, #tpu.memory_space<vmem>>, vector<1x32x64xf32>
    %9 = vector.shape_cast %8 : vector<1x32x64xf32> to vector<32x64xf32>
    %c0_15 = arith.constant 0 : index
    %c0_16 = arith.constant 0 : index
    %c0_17 = arith.constant 0 : index
    %10 = vector.load %arg6[%c0_15, %c0_16, %c0_17] : memref<2x1x64xf32, #tpu.memory_space<vmem>>, vector<1x1x64xf32>
    %11 = vector.shape_cast %10 : vector<1x1x64xf32> to vector<1x64xf32>
    %c0_18 = arith.constant 0 : index
    %c0_19 = arith.constant 0 : index
    %c0_20 = arith.constant 0 : index
    %12 = vector.load %arg7[%c0_18, %c0_19, %c0_20] : memref<2x64x32xf32, #tpu.memory_space<vmem>>, vector<1x64x32xf32>
    %13 = vector.shape_cast %12 : vector<1x64x32xf32> to vector<64x32xf32>
    %c0_21 = arith.constant 0 : index
    %c0_22 = arith.constant 0 : index
    %c0_23 = arith.constant 0 : index
    %14 = vector.load %arg8[%c0_21, %c0_22, %c0_23] : memref<2x6x32xf32, #tpu.memory_space<vmem>>, vector<1x6x32xf32>
    %15 = vector.shape_cast %14 : vector<1x6x32xf32> to vector<6x32xf32>
    %16 = vector.extract_strided_slice %15 {offsets = [0, 0], sizes = [1, 32], strides = [1, 1]} : vector<6x32xf32> to vector<1x32xf32>
    %17 = vector.extract_strided_slice %15 {offsets = [1, 0], sizes = [1, 32], strides = [1, 1]} : vector<6x32xf32> to vector<1x32xf32>
    %18 = vector.extract_strided_slice %15 {offsets = [2, 0], sizes = [1, 32], strides = [1, 1]} : vector<6x32xf32> to vector<1x32xf32>
    %19 = vector.extract_strided_slice %15 {offsets = [3, 0], sizes = [1, 32], strides = [1, 1]} : vector<6x32xf32> to vector<1x32xf32>
    %20 = vector.extract_strided_slice %15 {offsets = [4, 0], sizes = [1, 32], strides = [1, 1]} : vector<6x32xf32> to vector<1x32xf32>
    %21 = vector.extract_strided_slice %15 {offsets = [5, 0], sizes = [1, 32], strides = [1, 1]} : vector<6x32xf32> to vector<1x32xf32>
    %cst = arith.constant dense<0.000000e+00> : vector<16x96xf32>
    %22 = tpu.matmul %0, %3, %cst {dimension_numbers = #tpu.dot_dimension_numbers<[1], [0], [0], [1], [0, 0, 1, 1], [], []>} : vector<16x32xf32>, vector<32x96xf32>, vector<16x96xf32> -> vector<16x96xf32>
    %23 = vector.broadcast %5 : vector<1x96xf32> to vector<16x96xf32>
    %24 = arith.addf %22, %23 : vector<16x96xf32>
    %25 = vector.extract_strided_slice %1 {offsets = [0, 0], sizes = [1, 8], strides = [1, 1]} : vector<2x8xf32> to vector<1x8xf32>
    %cst_24 = arith.constant 5.000000e-01 : f32
    %26 = vector.broadcast %cst_24 : f32 to vector<1x8xf32>
    %27 = arith.cmpf ogt, %25, %26 : vector<1x8xf32>
    %28 = vector.extract_strided_slice %24 {offsets = [0, 0], sizes = [8, 16], strides = [1, 1]} : vector<16x96xf32> to vector<8x16xf32>
    %29 = vector.extract_strided_slice %24 {offsets = [0, 32], sizes = [8, 16], strides = [1, 1]} : vector<16x96xf32> to vector<8x16xf32>
    %30 = vector.extract_strided_slice %24 {offsets = [0, 64], sizes = [8, 16], strides = [1, 1]} : vector<16x96xf32> to vector<8x16xf32>
    %31 = tpu.transpose %29, [1, 0] : vector<8x16xf32> -> vector<16x8xf32>
    %cst_25 = arith.constant dense<0.000000e+00> : vector<8x8xf32>
    %32 = tpu.matmul %28, %31, %cst_25 {dimension_numbers = #tpu.dot_dimension_numbers<[1], [0], [0], [1], [0, 0, 1, 1], [], []>} : vector<8x16xf32>, vector<16x8xf32>, vector<8x8xf32> -> vector<8x8xf32>
    %cst_26 = arith.constant 2.500000e-01 : f32
    %33 = vector.broadcast %cst_26 : f32 to vector<8x8xf32>
    %34 = arith.mulf %32, %33 : vector<8x8xf32>
    %cst_27 = arith.constant -1.000000e+09 : f32
    %35 = vector.shape_cast %27 : vector<1x8xi1> to vector<1x8xi1>
    %36 = vector.broadcast %35 : vector<1x8xi1> to vector<8x8xi1>
    %37 = vector.broadcast %cst_27 : f32 to vector<8x8xf32>
    %38 = arith.select %36, %37, %34 : vector<8x8xi1>, vector<8x8xf32>
    %cst_28 = arith.constant dense<0xFF800000> : vector<8xf32>
    %39 = vector.multi_reduction <maximumf>, %38, %cst_28 [1] : vector<8x8xf32> to vector<8xf32>
    %40 = vector.shape_cast %39 : vector<8xf32> to vector<8x1xf32>
    %41 = vector.broadcast %40 : vector<8x1xf32> to vector<8x8xf32>
    %42 = arith.subf %38, %41 : vector<8x8xf32>
    %43 = math.exp %42 : vector<8x8xf32>
    %cst_29 = arith.constant dense<0.000000e+00> : vector<8xf32>
    %44 = vector.multi_reduction <add>, %43, %cst_29 [1] : vector<8x8xf32> to vector<8xf32>
    %45 = vector.shape_cast %44 : vector<8xf32> to vector<8x1xf32>
    %46 = tpu.reciprocal %45 {approx = true} : vector<8x1xf32> -> vector<8x1xf32>
    %47 = vector.broadcast %46 : vector<8x1xf32> to vector<8x8xf32>
    %48 = arith.mulf %43, %47 : vector<8x8xf32>
    %c0_30 = arith.constant 0 : index
    %c0_31 = arith.constant 0 : index
    %c0_32 = arith.constant 0 : index
    %c0_33 = arith.constant 0 : index
    %c0_34 = arith.constant 0 : index
    %49 = vector.load %arg13[%c0_30, %c0_31, %c0_32, %c0_33, %c0_34] : memref<2x2x2x8x8xf32, #tpu.memory_space<vmem>>, vector<1x1x1x8x8xf32>
    %50 = vector.shape_cast %49 : vector<1x1x1x8x8xf32> to vector<8x8xf32>
    %51 = vector.shape_cast %48 : vector<8x8xf32> to vector<1x1x1x8x8xf32>
    tpu.vector_store %arg13[%c0_30, %c0_31, %c0_32, %c0_33, %c0_34], %51 {strides = array<i32>} : memref<2x2x2x8x8xf32, #tpu.memory_space<vmem>>, vector<1x1x1x8x8xf32>,
    %cst_35 = arith.constant dense<0.000000e+00> : vector<8x16xf32>
    %52 = tpu.matmul %48, %30, %cst_35 {dimension_numbers = #tpu.dot_dimension_numbers<[1], [0], [0], [1], [0, 0, 1, 1], [], []>} : vector<8x8xf32>, vector<8x16xf32>, vector<8x16xf32> -> vector<8x16xf32>
    %53 = vector.extract_strided_slice %24 {offsets = [0, 16], sizes = [8, 16], strides = [1, 1]} : vector<16x96xf32> to vector<8x16xf32>
    %54 = vector.extract_strided_slice %24 {offsets = [0, 48], sizes = [8, 16], strides = [1, 1]} : vector<16x96xf32> to vector<8x16xf32>
    %55 = vector.extract_strided_slice %24 {offsets = [0, 80], sizes = [8, 16], strides = [1, 1]} : vector<16x96xf32> to vector<8x16xf32>
    %56 = tpu.transpose %54, [1, 0] : vector<8x16xf32> -> vector<16x8xf32>
    %cst_36 = arith.constant dense<0.000000e+00> : vector<8x8xf32>
    %57 = tpu.matmul %53, %56, %cst_36 {dimension_numbers = #tpu.dot_dimension_numbers<[1], [0], [0], [1], [0, 0, 1, 1], [], []>} : vector<8x16xf32>, vector<16x8xf32>, vector<8x8xf32> -> vector<8x8xf32>
    %cst_37 = arith.constant 2.500000e-01 : f32
    %58 = vector.broadcast %cst_37 : f32 to vector<8x8xf32>
    %59 = arith.mulf %57, %58 : vector<8x8xf32>
    %cst_38 = arith.constant -1.000000e+09 : f32
    %60 = vector.shape_cast %27 : vector<1x8xi1> to vector<1x8xi1>
    %61 = vector.broadcast %60 : vector<1x8xi1> to vector<8x8xi1>
    %62 = vector.broadcast %cst_38 : f32 to vector<8x8xf32>
    %63 = arith.select %61, %62, %59 : vector<8x8xi1>, vector<8x8xf32>
    %cst_39 = arith.constant dense<0xFF800000> : vector<8xf32>
    %64 = vector.multi_reduction <maximumf>, %63, %cst_39 [1] : vector<8x8xf32> to vector<8xf32>
    %65 = vector.shape_cast %64 : vector<8xf32> to vector<8x1xf32>
    %66 = vector.broadcast %65 : vector<8x1xf32> to vector<8x8xf32>
    %67 = arith.subf %63, %66 : vector<8x8xf32>
    %68 = math.exp %67 : vector<8x8xf32>
    %cst_40 = arith.constant dense<0.000000e+00> : vector<8xf32>
    %69 = vector.multi_reduction <add>, %68, %cst_40 [1] : vector<8x8xf32> to vector<8xf32>
    %70 = vector.shape_cast %69 : vector<8xf32> to vector<8x1xf32>
    %71 = tpu.reciprocal %70 {approx = true} : vector<8x1xf32> -> vector<8x1xf32>
    %72 = vector.broadcast %71 : vector<8x1xf32> to vector<8x8xf32>
    %73 = arith.mulf %68, %72 : vector<8x8xf32>
    %c0_41 = arith.constant 0 : index
    %c0_42 = arith.constant 0 : index
    %c1 = arith.constant 1 : index
    %c0_43 = arith.constant 0 : index
    %c0_44 = arith.constant 0 : index
    %74 = vector.load %arg13[%c0_41, %c0_42, %c1, %c0_43, %c0_44] : memref<2x2x2x8x8xf32, #tpu.memory_space<vmem>>, vector<1x1x1x8x8xf32>
    %75 = vector.shape_cast %74 : vector<1x1x1x8x8xf32> to vector<8x8xf32>
    %76 = vector.shape_cast %73 : vector<8x8xf32> to vector<1x1x1x8x8xf32>
    tpu.vector_store %arg13[%c0_41, %c0_42, %c1, %c0_43, %c0_44], %76 {strides = array<i32>} : memref<2x2x2x8x8xf32, #tpu.memory_space<vmem>>, vector<1x1x1x8x8xf32>,
    %cst_45 = arith.constant dense<0.000000e+00> : vector<8x16xf32>
    %77 = tpu.matmul %73, %55, %cst_45 {dimension_numbers = #tpu.dot_dimension_numbers<[1], [0], [0], [1], [0, 0, 1, 1], [], []>} : vector<8x8xf32>, vector<8x16xf32>, vector<8x16xf32> -> vector<8x16xf32>
    %78 = tpu.concatenate %52, %77 in 1 : vector<8x16xf32>, vector<8x16xf32> -> vector<8x32xf32>
    %79 = vector.extract_strided_slice %1 {offsets = [1, 0], sizes = [1, 8], strides = [1, 1]} : vector<2x8xf32> to vector<1x8xf32>
    %cst_46 = arith.constant 5.000000e-01 : f32
    %80 = vector.broadcast %cst_46 : f32 to vector<1x8xf32>
    %81 = arith.cmpf ogt, %79, %80 : vector<1x8xf32>
    %82 = vector.extract_strided_slice %24 {offsets = [8, 0], sizes = [8, 16], strides = [1, 1]} : vector<16x96xf32> to vector<8x16xf32>
    %83 = vector.extract_strided_slice %24 {offsets = [8, 32], sizes = [8, 16], strides = [1, 1]} : vector<16x96xf32> to vector<8x16xf32>
    %84 = vector.extract_strided_slice %24 {offsets = [8, 64], sizes = [8, 16], strides = [1, 1]} : vector<16x96xf32> to vector<8x16xf32>
    %85 = tpu.transpose %83, [1, 0] : vector<8x16xf32> -> vector<16x8xf32>
    %cst_47 = arith.constant dense<0.000000e+00> : vector<8x8xf32>
    %86 = tpu.matmul %82, %85, %cst_47 {dimension_numbers = #tpu.dot_dimension_numbers<[1], [0], [0], [1], [0, 0, 1, 1], [], []>} : vector<8x16xf32>, vector<16x8xf32>, vector<8x8xf32> -> vector<8x8xf32>
    %cst_48 = arith.constant 2.500000e-01 : f32
    %87 = vector.broadcast %cst_48 : f32 to vector<8x8xf32>
    %88 = arith.mulf %86, %87 : vector<8x8xf32>
    %cst_49 = arith.constant -1.000000e+09 : f32
    %89 = vector.shape_cast %81 : vector<1x8xi1> to vector<1x8xi1>
    %90 = vector.broadcast %89 : vector<1x8xi1> to vector<8x8xi1>
    %91 = vector.broadcast %cst_49 : f32 to vector<8x8xf32>
    %92 = arith.select %90, %91, %88 : vector<8x8xi1>, vector<8x8xf32>
    %cst_50 = arith.constant dense<0xFF800000> : vector<8xf32>
    %93 = vector.multi_reduction <maximumf>, %92, %cst_50 [1] : vector<8x8xf32> to vector<8xf32>
    %94 = vector.shape_cast %93 : vector<8xf32> to vector<8x1xf32>
    %95 = vector.broadcast %94 : vector<8x1xf32> to vector<8x8xf32>
    %96 = arith.subf %92, %95 : vector<8x8xf32>
    %97 = math.exp %96 : vector<8x8xf32>
    %cst_51 = arith.constant dense<0.000000e+00> : vector<8xf32>
    %98 = vector.multi_reduction <add>, %97, %cst_51 [1] : vector<8x8xf32> to vector<8xf32>
    %99 = vector.shape_cast %98 : vector<8xf32> to vector<8x1xf32>
    %100 = tpu.reciprocal %99 {approx = true} : vector<8x1xf32> -> vector<8x1xf32>
    %101 = vector.broadcast %100 : vector<8x1xf32> to vector<8x8xf32>
    %102 = arith.mulf %97, %101 : vector<8x8xf32>
    %c0_52 = arith.constant 0 : index
    %c1_53 = arith.constant 1 : index
    %c0_54 = arith.constant 0 : index
    %c0_55 = arith.constant 0 : index
    %c0_56 = arith.constant 0 : index
    %103 = vector.load %arg13[%c0_52, %c1_53, %c0_54, %c0_55, %c0_56] : memref<2x2x2x8x8xf32, #tpu.memory_space<vmem>>, vector<1x1x1x8x8xf32>
    %104 = vector.shape_cast %103 : vector<1x1x1x8x8xf32> to vector<8x8xf32>
    %105 = vector.shape_cast %102 : vector<8x8xf32> to vector<1x1x1x8x8xf32>
    tpu.vector_store %arg13[%c0_52, %c1_53, %c0_54, %c0_55, %c0_56], %105 {strides = array<i32>} : memref<2x2x2x8x8xf32, #tpu.memory_space<vmem>>, vector<1x1x1x8x8xf32>,
    %cst_57 = arith.constant dense<0.000000e+00> : vector<8x16xf32>
    %106 = tpu.matmul %102, %84, %cst_57 {dimension_numbers = #tpu.dot_dimension_numbers<[1], [0], [0], [1], [0, 0, 1, 1], [], []>} : vector<8x8xf32>, vector<8x16xf32>, vector<8x16xf32> -> vector<8x16xf32>
    %107 = vector.extract_strided_slice %24 {offsets = [8, 16], sizes = [8, 16], strides = [1, 1]} : vector<16x96xf32> to vector<8x16xf32>
    %108 = vector.extract_strided_slice %24 {offsets = [8, 48], sizes = [8, 16], strides = [1, 1]} : vector<16x96xf32> to vector<8x16xf32>
    %109 = vector.extract_strided_slice %24 {offsets = [8, 80], sizes = [8, 16], strides = [1, 1]} : vector<16x96xf32> to vector<8x16xf32>
    %110 = tpu.transpose %108, [1, 0] : vector<8x16xf32> -> vector<16x8xf32>
    %cst_58 = arith.constant dense<0.000000e+00> : vector<8x8xf32>
    %111 = tpu.matmul %107, %110, %cst_58 {dimension_numbers = #tpu.dot_dimension_numbers<[1], [0], [0], [1], [0, 0, 1, 1], [], []>} : vector<8x16xf32>, vector<16x8xf32>, vector<8x8xf32> -> vector<8x8xf32>
    %cst_59 = arith.constant 2.500000e-01 : f32
    %112 = vector.broadcast %cst_59 : f32 to vector<8x8xf32>
    %113 = arith.mulf %111, %112 : vector<8x8xf32>
    %cst_60 = arith.constant -1.000000e+09 : f32
    %114 = vector.shape_cast %81 : vector<1x8xi1> to vector<1x8xi1>
    %115 = vector.broadcast %114 : vector<1x8xi1> to vector<8x8xi1>
    %116 = vector.broadcast %cst_60 : f32 to vector<8x8xf32>
    %117 = arith.select %115, %116, %113 : vector<8x8xi1>, vector<8x8xf32>
    %cst_61 = arith.constant dense<0xFF800000> : vector<8xf32>
    %118 = vector.multi_reduction <maximumf>, %117, %cst_61 [1] : vector<8x8xf32> to vector<8xf32>
    %119 = vector.shape_cast %118 : vector<8xf32> to vector<8x1xf32>
    %120 = vector.broadcast %119 : vector<8x1xf32> to vector<8x8xf32>
    %121 = arith.subf %117, %120 : vector<8x8xf32>
    %122 = math.exp %121 : vector<8x8xf32>
    %cst_62 = arith.constant dense<0.000000e+00> : vector<8xf32>
    %123 = vector.multi_reduction <add>, %122, %cst_62 [1] : vector<8x8xf32> to vector<8xf32>
    %124 = vector.shape_cast %123 : vector<8xf32> to vector<8x1xf32>
    %125 = tpu.reciprocal %124 {approx = true} : vector<8x1xf32> -> vector<8x1xf32>
    %126 = vector.broadcast %125 : vector<8x1xf32> to vector<8x8xf32>
    %127 = arith.mulf %122, %126 : vector<8x8xf32>
    %c0_63 = arith.constant 0 : index
    %c1_64 = arith.constant 1 : index
    %c1_65 = arith.constant 1 : index
    %c0_66 = arith.constant 0 : index
    %c0_67 = arith.constant 0 : index
    %128 = vector.load %arg13[%c0_63, %c1_64, %c1_65, %c0_66, %c0_67] : memref<2x2x2x8x8xf32, #tpu.memory_space<vmem>>, vector<1x1x1x8x8xf32>
    %129 = vector.shape_cast %128 : vector<1x1x1x8x8xf32> to vector<8x8xf32>
    %130 = vector.shape_cast %127 : vector<8x8xf32> to vector<1x1x1x8x8xf32>
    tpu.vector_store %arg13[%c0_63, %c1_64, %c1_65, %c0_66, %c0_67], %130 {strides = array<i32>} : memref<2x2x2x8x8xf32, #tpu.memory_space<vmem>>, vector<1x1x1x8x8xf32>,
    %cst_68 = arith.constant dense<0.000000e+00> : vector<8x16xf32>
    %131 = tpu.matmul %127, %109, %cst_68 {dimension_numbers = #tpu.dot_dimension_numbers<[1], [0], [0], [1], [0, 0, 1, 1], [], []>} : vector<8x8xf32>, vector<8x16xf32>, vector<8x16xf32> -> vector<8x16xf32>
    %132 = tpu.concatenate %106, %131 in 1 : vector<8x16xf32>, vector<8x16xf32> -> vector<8x32xf32>
    %133 = tpu.concatenate %78, %132 in 0 : vector<8x32xf32>, vector<8x32xf32> -> vector<16x32xf32>
    %cst_69 = arith.constant dense<0.000000e+00> : vector<16x32xf32>
    %134 = tpu.matmul %133, %7, %cst_69 {dimension_numbers = #tpu.dot_dimension_numbers<[1], [0], [0], [1], [0, 0, 1, 1], [], []>} : vector<16x32xf32>, vector<32x32xf32>, vector<16x32xf32> -> vector<16x32xf32>
    %135 = vector.broadcast %16 : vector<1x32xf32> to vector<16x32xf32>
    %136 = arith.addf %134, %135 : vector<16x32xf32>
    %137 = arith.addf %0, %136 : vector<16x32xf32>
    %cst_70 = arith.constant dense<0.000000e+00> : vector<16xf32>
    %138 = vector.multi_reduction <add>, %137, %cst_70 [1] : vector<16x32xf32> to vector<16xf32>
    %139 = vector.shape_cast %138 : vector<16xf32> to vector<16x1xf32>
    %cst_71 = arith.constant 3.200000e+01 : f32
    %140 = vector.broadcast %cst_71 : f32 to vector<16x1xf32>
    %141 = arith.divf %139, %140 : vector<16x1xf32>
    %142 = vector.broadcast %141 : vector<16x1xf32> to vector<16x32xf32>
    %143 = arith.subf %137, %142 : vector<16x32xf32>
    %144 = arith.mulf %143, %143 : vector<16x32xf32>
    %cst_72 = arith.constant dense<0.000000e+00> : vector<16xf32>
    %145 = vector.multi_reduction <add>, %144, %cst_72 [1] : vector<16x32xf32> to vector<16xf32>
    %146 = vector.shape_cast %145 : vector<16xf32> to vector<16x1xf32>
    %cst_73 = arith.constant 3.200000e+01 : f32
    %147 = vector.broadcast %cst_73 : f32 to vector<16x1xf32>
    %148 = arith.divf %146, %147 : vector<16x1xf32>
    %149 = vector.broadcast %141 : vector<16x1xf32> to vector<16x32xf32>
    %150 = arith.subf %137, %149 : vector<16x32xf32>
    %cst_74 = arith.constant 9.99999996E-13 : f32
    %151 = vector.broadcast %cst_74 : f32 to vector<16x1xf32>
    %152 = arith.addf %148, %151 : vector<16x1xf32>
    %153 = math.rsqrt %152 : vector<16x1xf32>
    %154 = vector.broadcast %153 : vector<16x1xf32> to vector<16x32xf32>
    %155 = arith.mulf %150, %154 : vector<16x32xf32>
    %156 = vector.broadcast %17 : vector<1x32xf32> to vector<16x32xf32>
    %157 = arith.mulf %155, %156 : vector<16x32xf32>
    %158 = vector.broadcast %18 : vector<1x32xf32> to vector<16x32xf32>
    %159 = arith.addf %157, %158 : vector<16x32xf32>
    %cst_75 = arith.constant dense<0.000000e+00> : vector<16x64xf32>
    %160 = tpu.matmul %159, %9, %cst_75 {dimension_numbers = #tpu.dot_dimension_numbers<[1], [0], [0], [1], [0, 0, 1, 1], [], []>} : vector<16x32xf32>, vector<32x64xf32>, vector<16x64xf32> -> vector<16x64xf32>
    %161 = vector.broadcast %11 : vector<1x64xf32> to vector<16x64xf32>
    %162 = arith.addf %160, %161 : vector<16x64xf32>
    %163 = arith.mulf %162, %162 : vector<16x64xf32>
    %164 = arith.mulf %162, %163 : vector<16x64xf32>
    %cst_76 = arith.constant 4.471500e-02 : f32
    %165 = vector.broadcast %cst_76 : f32 to vector<16x64xf32>
    %166 = arith.mulf %165, %164 : vector<16x64xf32>
    %167 = arith.addf %162, %166 : vector<16x64xf32>
    %cst_77 = arith.constant 0.797884583 : f32
    %168 = vector.broadcast %cst_77 : f32 to vector<16x64xf32>
    %169 = arith.mulf %168, %167 : vector<16x64xf32>
    %170 = math.tanh %169 : vector<16x64xf32>
    %cst_78 = arith.constant 1.000000e+00 : f32
    %171 = vector.broadcast %cst_78 : f32 to vector<16x64xf32>
    %172 = arith.addf %171, %170 : vector<16x64xf32>
    %cst_79 = arith.constant 5.000000e-01 : f32
    %173 = vector.broadcast %cst_79 : f32 to vector<16x64xf32>
    %174 = arith.mulf %173, %172 : vector<16x64xf32>
    %175 = arith.mulf %162, %174 : vector<16x64xf32>
    %cst_80 = arith.constant dense<0.000000e+00> : vector<16x32xf32>
    %176 = tpu.matmul %175, %13, %cst_80 {dimension_numbers = #tpu.dot_dimension_numbers<[1], [0], [0], [1], [0, 0, 1, 1], [], []>} : vector<16x64xf32>, vector<64x32xf32>, vector<16x32xf32> -> vector<16x32xf32>
    %177 = vector.broadcast %19 : vector<1x32xf32> to vector<16x32xf32>
    %178 = arith.addf %176, %177 : vector<16x32xf32>
    %179 = arith.addf %159, %178 : vector<16x32xf32>
    %cst_81 = arith.constant dense<0.000000e+00> : vector<16xf32>
    %180 = vector.multi_reduction <add>, %179, %cst_81 [1] : vector<16x32xf32> to vector<16xf32>
    %181 = vector.shape_cast %180 : vector<16xf32> to vector<16x1xf32>
    %cst_82 = arith.constant 3.200000e+01 : f32
    %182 = vector.broadcast %cst_82 : f32 to vector<16x1xf32>
    %183 = arith.divf %181, %182 : vector<16x1xf32>
    %184 = vector.broadcast %183 : vector<16x1xf32> to vector<16x32xf32>
    %185 = arith.subf %179, %184 : vector<16x32xf32>
    %186 = arith.mulf %185, %185 : vector<16x32xf32>
    %cst_83 = arith.constant dense<0.000000e+00> : vector<16xf32>
    %187 = vector.multi_reduction <add>, %186, %cst_83 [1] : vector<16x32xf32> to vector<16xf32>
    %188 = vector.shape_cast %187 : vector<16xf32> to vector<16x1xf32>
    %cst_84 = arith.constant 3.200000e+01 : f32
    %189 = vector.broadcast %cst_84 : f32 to vector<16x1xf32>
    %190 = arith.divf %188, %189 : vector<16x1xf32>
    %191 = vector.broadcast %183 : vector<16x1xf32> to vector<16x32xf32>
    %192 = arith.subf %179, %191 : vector<16x32xf32>
    %cst_85 = arith.constant 9.99999996E-13 : f32
    %193 = vector.broadcast %cst_85 : f32 to vector<16x1xf32>
    %194 = arith.addf %190, %193 : vector<16x1xf32>
    %195 = math.rsqrt %194 : vector<16x1xf32>
    %196 = vector.broadcast %195 : vector<16x1xf32> to vector<16x32xf32>
    %197 = arith.mulf %192, %196 : vector<16x32xf32>
    %198 = vector.broadcast %20 : vector<1x32xf32> to vector<16x32xf32>
    %199 = arith.mulf %197, %198 : vector<16x32xf32>
    %200 = vector.broadcast %21 : vector<1x32xf32> to vector<16x32xf32>
    %201 = arith.addf %199, %200 : vector<16x32xf32>
    %c1_86 = arith.constant 1 : index
    %c0_87 = arith.constant 0 : index
    %c0_88 = arith.constant 0 : index
    %202 = vector.load %arg2[%c1_86, %c0_87, %c0_88] : memref<2x32x96xf32, #tpu.memory_space<vmem>>, vector<1x32x96xf32>
    %203 = vector.shape_cast %202 : vector<1x32x96xf32> to vector<32x96xf32>
    %c1_89 = arith.constant 1 : index
    %c0_90 = arith.constant 0 : index
    %c0_91 = arith.constant 0 : index
    %204 = vector.load %arg3[%c1_89, %c0_90, %c0_91] : memref<2x1x96xf32, #tpu.memory_space<vmem>>, vector<1x1x96xf32>
    %205 = vector.shape_cast %204 : vector<1x1x96xf32> to vector<1x96xf32>
    %c1_92 = arith.constant 1 : index
    %c0_93 = arith.constant 0 : index
    %c0_94 = arith.constant 0 : index
    %206 = vector.load %arg4[%c1_92, %c0_93, %c0_94] : memref<2x32x32xf32, #tpu.memory_space<vmem>>, vector<1x32x32xf32>
    %207 = vector.shape_cast %206 : vector<1x32x32xf32> to vector<32x32xf32>
    %c1_95 = arith.constant 1 : index
    %c0_96 = arith.constant 0 : index
    %c0_97 = arith.constant 0 : index
    %208 = vector.load %arg5[%c1_95, %c0_96, %c0_97] : memref<2x32x64xf32, #tpu.memory_space<vmem>>, vector<1x32x64xf32>
    %209 = vector.shape_cast %208 : vector<1x32x64xf32> to vector<32x64xf32>
    %c1_98 = arith.constant 1 : index
    %c0_99 = arith.constant 0 : index
    %c0_100 = arith.constant 0 : index
    %210 = vector.load %arg6[%c1_98, %c0_99, %c0_100] : memref<2x1x64xf32, #tpu.memory_space<vmem>>, vector<1x1x64xf32>
    %211 = vector.shape_cast %210 : vector<1x1x64xf32> to vector<1x64xf32>
    %c1_101 = arith.constant 1 : index
    %c0_102 = arith.constant 0 : index
    %c0_103 = arith.constant 0 : index
    %212 = vector.load %arg7[%c1_101, %c0_102, %c0_103] : memref<2x64x32xf32, #tpu.memory_space<vmem>>, vector<1x64x32xf32>
    %213 = vector.shape_cast %212 : vector<1x64x32xf32> to vector<64x32xf32>
    %c1_104 = arith.constant 1 : index
    %c0_105 = arith.constant 0 : index
    %c0_106 = arith.constant 0 : index
    %214 = vector.load %arg8[%c1_104, %c0_105, %c0_106] : memref<2x6x32xf32, #tpu.memory_space<vmem>>, vector<1x6x32xf32>
    %215 = vector.shape_cast %214 : vector<1x6x32xf32> to vector<6x32xf32>
    %216 = vector.extract_strided_slice %215 {offsets = [0, 0], sizes = [1, 32], strides = [1, 1]} : vector<6x32xf32> to vector<1x32xf32>
    %217 = vector.extract_strided_slice %215 {offsets = [1, 0], sizes = [1, 32], strides = [1, 1]} : vector<6x32xf32> to vector<1x32xf32>
    %218 = vector.extract_strided_slice %215 {offsets = [2, 0], sizes = [1, 32], strides = [1, 1]} : vector<6x32xf32> to vector<1x32xf32>
    %219 = vector.extract_strided_slice %215 {offsets = [3, 0], sizes = [1, 32], strides = [1, 1]} : vector<6x32xf32> to vector<1x32xf32>
    %220 = vector.extract_strided_slice %215 {offsets = [4, 0], sizes = [1, 32], strides = [1, 1]} : vector<6x32xf32> to vector<1x32xf32>
    %221 = vector.extract_strided_slice %215 {offsets = [5, 0], sizes = [1, 32], strides = [1, 1]} : vector<6x32xf32> to vector<1x32xf32>
    %cst_107 = arith.constant dense<0.000000e+00> : vector<16x96xf32>
    %222 = tpu.matmul %201, %203, %cst_107 {dimension_numbers = #tpu.dot_dimension_numbers<[1], [0], [0], [1], [0, 0, 1, 1], [], []>} : vector<16x32xf32>, vector<32x96xf32>, vector<16x96xf32> -> vector<16x96xf32>
    %223 = vector.broadcast %205 : vector<1x96xf32> to vector<16x96xf32>
    %224 = arith.addf %222, %223 : vector<16x96xf32>
    %225 = vector.extract_strided_slice %1 {offsets = [0, 0], sizes = [1, 8], strides = [1, 1]} : vector<2x8xf32> to vector<1x8xf32>
    %cst_108 = arith.constant 5.000000e-01 : f32
    %226 = vector.broadcast %cst_108 : f32 to vector<1x8xf32>
    %227 = arith.cmpf ogt, %225, %226 : vector<1x8xf32>
    %228 = vector.extract_strided_slice %224 {offsets = [0, 0], sizes = [8, 16], strides = [1, 1]} : vector<16x96xf32> to vector<8x16xf32>
    %229 = vector.extract_strided_slice %224 {offsets = [0, 32], sizes = [8, 16], strides = [1, 1]} : vector<16x96xf32> to vector<8x16xf32>
    %230 = vector.extract_strided_slice %224 {offsets = [0, 64], sizes = [8, 16], strides = [1, 1]} : vector<16x96xf32> to vector<8x16xf32>
    %231 = tpu.transpose %229, [1, 0] : vector<8x16xf32> -> vector<16x8xf32>
    %cst_109 = arith.constant dense<0.000000e+00> : vector<8x8xf32>
    %232 = tpu.matmul %228, %231, %cst_109 {dimension_numbers = #tpu.dot_dimension_numbers<[1], [0], [0], [1], [0, 0, 1, 1], [], []>} : vector<8x16xf32>, vector<16x8xf32>, vector<8x8xf32> -> vector<8x8xf32>
    %cst_110 = arith.constant 2.500000e-01 : f32
    %233 = vector.broadcast %cst_110 : f32 to vector<8x8xf32>
    %234 = arith.mulf %232, %233 : vector<8x8xf32>
    %cst_111 = arith.constant -1.000000e+09 : f32
    %235 = vector.shape_cast %227 : vector<1x8xi1> to vector<1x8xi1>
    %236 = vector.broadcast %235 : vector<1x8xi1> to vector<8x8xi1>
    %237 = vector.broadcast %cst_111 : f32 to vector<8x8xf32>
    %238 = arith.select %236, %237, %234 : vector<8x8xi1>, vector<8x8xf32>
    %cst_112 = arith.constant dense<0xFF800000> : vector<8xf32>
    %239 = vector.multi_reduction <maximumf>, %238, %cst_112 [1] : vector<8x8xf32> to vector<8xf32>
    %240 = vector.shape_cast %239 : vector<8xf32> to vector<8x1xf32>
    %241 = vector.broadcast %240 : vector<8x1xf32> to vector<8x8xf32>
    %242 = arith.subf %238, %241 : vector<8x8xf32>
    %243 = math.exp %242 : vector<8x8xf32>
    %cst_113 = arith.constant dense<0.000000e+00> : vector<8xf32>
    %244 = vector.multi_reduction <add>, %243, %cst_113 [1] : vector<8x8xf32> to vector<8xf32>
    %245 = vector.shape_cast %244 : vector<8xf32> to vector<8x1xf32>
    %246 = tpu.reciprocal %245 {approx = true} : vector<8x1xf32> -> vector<8x1xf32>
    %247 = vector.broadcast %246 : vector<8x1xf32> to vector<8x8xf32>
    %248 = arith.mulf %243, %247 : vector<8x8xf32>
    %c1_114 = arith.constant 1 : index
    %c0_115 = arith.constant 0 : index
    %c0_116 = arith.constant 0 : index
    %c0_117 = arith.constant 0 : index
    %c0_118 = arith.constant 0 : index
    %249 = vector.load %arg13[%c1_114, %c0_115, %c0_116, %c0_117, %c0_118] : memref<2x2x2x8x8xf32, #tpu.memory_space<vmem>>, vector<1x1x1x8x8xf32>
    %250 = vector.shape_cast %249 : vector<1x1x1x8x8xf32> to vector<8x8xf32>
    %251 = vector.shape_cast %248 : vector<8x8xf32> to vector<1x1x1x8x8xf32>
    tpu.vector_store %arg13[%c1_114, %c0_115, %c0_116, %c0_117, %c0_118], %251 {strides = array<i32>} : memref<2x2x2x8x8xf32, #tpu.memory_space<vmem>>, vector<1x1x1x8x8xf32>,
    %cst_119 = arith.constant dense<0.000000e+00> : vector<8x16xf32>
    %252 = tpu.matmul %248, %230, %cst_119 {dimension_numbers = #tpu.dot_dimension_numbers<[1], [0], [0], [1], [0, 0, 1, 1], [], []>} : vector<8x8xf32>, vector<8x16xf32>, vector<8x16xf32> -> vector<8x16xf32>
    %253 = vector.extract_strided_slice %224 {offsets = [0, 16], sizes = [8, 16], strides = [1, 1]} : vector<16x96xf32> to vector<8x16xf32>
    %254 = vector.extract_strided_slice %224 {offsets = [0, 48], sizes = [8, 16], strides = [1, 1]} : vector<16x96xf32> to vector<8x16xf32>
    %255 = vector.extract_strided_slice %224 {offsets = [0, 80], sizes = [8, 16], strides = [1, 1]} : vector<16x96xf32> to vector<8x16xf32>
    %256 = tpu.transpose %254, [1, 0] : vector<8x16xf32> -> vector<16x8xf32>
    %cst_120 = arith.constant dense<0.000000e+00> : vector<8x8xf32>
    %257 = tpu.matmul %253, %256, %cst_120 {dimension_numbers = #tpu.dot_dimension_numbers<[1], [0], [0], [1], [0, 0, 1, 1], [], []>} : vector<8x16xf32>, vector<16x8xf32>, vector<8x8xf32> -> vector<8x8xf32>
    %cst_121 = arith.constant 2.500000e-01 : f32
    %258 = vector.broadcast %cst_121 : f32 to vector<8x8xf32>
    %259 = arith.mulf %257, %258 : vector<8x8xf32>
    %cst_122 = arith.constant -1.000000e+09 : f32
    %260 = vector.shape_cast %227 : vector<1x8xi1> to vector<1x8xi1>
    %261 = vector.broadcast %260 : vector<1x8xi1> to vector<8x8xi1>
    %262 = vector.broadcast %cst_122 : f32 to vector<8x8xf32>
    %263 = arith.select %261, %262, %259 : vector<8x8xi1>, vector<8x8xf32>
    %cst_123 = arith.constant dense<0xFF800000> : vector<8xf32>
    %264 = vector.multi_reduction <maximumf>, %263, %cst_123 [1] : vector<8x8xf32> to vector<8xf32>
    %265 = vector.shape_cast %264 : vector<8xf32> to vector<8x1xf32>
    %266 = vector.broadcast %265 : vector<8x1xf32> to vector<8x8xf32>
    %267 = arith.subf %263, %266 : vector<8x8xf32>
    %268 = math.exp %267 : vector<8x8xf32>
    %cst_124 = arith.constant dense<0.000000e+00> : vector<8xf32>
    %269 = vector.multi_reduction <add>, %268, %cst_124 [1] : vector<8x8xf32> to vector<8xf32>
    %270 = vector.shape_cast %269 : vector<8xf32> to vector<8x1xf32>
    %271 = tpu.reciprocal %270 {approx = true} : vector<8x1xf32> -> vector<8x1xf32>
    %272 = vector.broadcast %271 : vector<8x1xf32> to vector<8x8xf32>
    %273 = arith.mulf %268, %272 : vector<8x8xf32>
    %c1_125 = arith.constant 1 : index
    %c0_126 = arith.constant 0 : index
    %c1_127 = arith.constant 1 : index
    %c0_128 = arith.constant 0 : index
    %c0_129 = arith.constant 0 : index
    %274 = vector.load %arg13[%c1_125, %c0_126, %c1_127, %c0_128, %c0_129] : memref<2x2x2x8x8xf32, #tpu.memory_space<vmem>>, vector<1x1x1x8x8xf32>
    %275 = vector.shape_cast %274 : vector<1x1x1x8x8xf32> to vector<8x8xf32>
    %276 = vector.shape_cast %273 : vector<8x8xf32> to vector<1x1x1x8x8xf32>
    tpu.vector_store %arg13[%c1_125, %c0_126, %c1_127, %c0_128, %c0_129], %276 {strides = array<i32>} : memref<2x2x2x8x8xf32, #tpu.memory_space<vmem>>, vector<1x1x1x8x8xf32>,
    %cst_130 = arith.constant dense<0.000000e+00> : vector<8x16xf32>
    %277 = tpu.matmul %273, %255, %cst_130 {dimension_numbers = #tpu.dot_dimension_numbers<[1], [0], [0], [1], [0, 0, 1, 1], [], []>} : vector<8x8xf32>, vector<8x16xf32>, vector<8x16xf32> -> vector<8x16xf32>
    %278 = tpu.concatenate %252, %277 in 1 : vector<8x16xf32>, vector<8x16xf32> -> vector<8x32xf32>
    %279 = vector.extract_strided_slice %1 {offsets = [1, 0], sizes = [1, 8], strides = [1, 1]} : vector<2x8xf32> to vector<1x8xf32>
    %cst_131 = arith.constant 5.000000e-01 : f32
    %280 = vector.broadcast %cst_131 : f32 to vector<1x8xf32>
    %281 = arith.cmpf ogt, %279, %280 : vector<1x8xf32>
    %282 = vector.extract_strided_slice %224 {offsets = [8, 0], sizes = [8, 16], strides = [1, 1]} : vector<16x96xf32> to vector<8x16xf32>
    %283 = vector.extract_strided_slice %224 {offsets = [8, 32], sizes = [8, 16], strides = [1, 1]} : vector<16x96xf32> to vector<8x16xf32>
    %284 = vector.extract_strided_slice %224 {offsets = [8, 64], sizes = [8, 16], strides = [1, 1]} : vector<16x96xf32> to vector<8x16xf32>
    %285 = tpu.transpose %283, [1, 0] : vector<8x16xf32> -> vector<16x8xf32>
    %cst_132 = arith.constant dense<0.000000e+00> : vector<8x8xf32>
    %286 = tpu.matmul %282, %285, %cst_132 {dimension_numbers = #tpu.dot_dimension_numbers<[1], [0], [0], [1], [0, 0, 1, 1], [], []>} : vector<8x16xf32>, vector<16x8xf32>, vector<8x8xf32> -> vector<8x8xf32>
    %cst_133 = arith.constant 2.500000e-01 : f32
    %287 = vector.broadcast %cst_133 : f32 to vector<8x8xf32>
    %288 = arith.mulf %286, %287 : vector<8x8xf32>
    %cst_134 = arith.constant -1.000000e+09 : f32
    %289 = vector.shape_cast %281 : vector<1x8xi1> to vector<1x8xi1>
    %290 = vector.broadcast %289 : vector<1x8xi1> to vector<8x8xi1>
    %291 = vector.broadcast %cst_134 : f32 to vector<8x8xf32>
    %292 = arith.select %290, %291, %288 : vector<8x8xi1>, vector<8x8xf32>
    %cst_135 = arith.constant dense<0xFF800000> : vector<8xf32>
    %293 = vector.multi_reduction <maximumf>, %292, %cst_135 [1] : vector<8x8xf32> to vector<8xf32>
    %294 = vector.shape_cast %293 : vector<8xf32> to vector<8x1xf32>
    %295 = vector.broadcast %294 : vector<8x1xf32> to vector<8x8xf32>
    %296 = arith.subf %292, %295 : vector<8x8xf32>
    %297 = math.exp %296 : vector<8x8xf32>
    %cst_136 = arith.constant dense<0.000000e+00> : vector<8xf32>
    %298 = vector.multi_reduction <add>, %297, %cst_136 [1] : vector<8x8xf32> to vector<8xf32>
    %299 = vector.shape_cast %298 : vector<8xf32> to vector<8x1xf32>
    %300 = tpu.reciprocal %299 {approx = true} : vector<8x1xf32> -> vector<8x1xf32>
    %301 = vector.broadcast %300 : vector<8x1xf32> to vector<8x8xf32>
    %302 = arith.mulf %297, %301 : vector<8x8xf32>
    %c1_137 = arith.constant 1 : index
    %c1_138 = arith.constant 1 : index
    %c0_139 = arith.constant 0 : index
    %c0_140 = arith.constant 0 : index
    %c0_141 = arith.constant 0 : index
    %303 = vector.load %arg13[%c1_137, %c1_138, %c0_139, %c0_140, %c0_141] : memref<2x2x2x8x8xf32, #tpu.memory_space<vmem>>, vector<1x1x1x8x8xf32>
    %304 = vector.shape_cast %303 : vector<1x1x1x8x8xf32> to vector<8x8xf32>
    %305 = vector.shape_cast %302 : vector<8x8xf32> to vector<1x1x1x8x8xf32>
    tpu.vector_store %arg13[%c1_137, %c1_138, %c0_139, %c0_140, %c0_141], %305 {strides = array<i32>} : memref<2x2x2x8x8xf32, #tpu.memory_space<vmem>>, vector<1x1x1x8x8xf32>,
    %cst_142 = arith.constant dense<0.000000e+00> : vector<8x16xf32>
    %306 = tpu.matmul %302, %284, %cst_142 {dimension_numbers = #tpu.dot_dimension_numbers<[1], [0], [0], [1], [0, 0, 1, 1], [], []>} : vector<8x8xf32>, vector<8x16xf32>, vector<8x16xf32> -> vector<8x16xf32>
    %307 = vector.extract_strided_slice %224 {offsets = [8, 16], sizes = [8, 16], strides = [1, 1]} : vector<16x96xf32> to vector<8x16xf32>
    %308 = vector.extract_strided_slice %224 {offsets = [8, 48], sizes = [8, 16], strides = [1, 1]} : vector<16x96xf32> to vector<8x16xf32>
    %309 = vector.extract_strided_slice %224 {offsets = [8, 80], sizes = [8, 16], strides = [1, 1]} : vector<16x96xf32> to vector<8x16xf32>
    %310 = tpu.transpose %308, [1, 0] : vector<8x16xf32> -> vector<16x8xf32>
    %cst_143 = arith.constant dense<0.000000e+00> : vector<8x8xf32>
    %311 = tpu.matmul %307, %310, %cst_143 {dimension_numbers = #tpu.dot_dimension_numbers<[1], [0], [0], [1], [0, 0, 1, 1], [], []>} : vector<8x16xf32>, vector<16x8xf32>, vector<8x8xf32> -> vector<8x8xf32>
    %cst_144 = arith.constant 2.500000e-01 : f32
    %312 = vector.broadcast %cst_144 : f32 to vector<8x8xf32>
    %313 = arith.mulf %311, %312 : vector<8x8xf32>
    %cst_145 = arith.constant -1.000000e+09 : f32
    %314 = vector.shape_cast %281 : vector<1x8xi1> to vector<1x8xi1>
    %315 = vector.broadcast %314 : vector<1x8xi1> to vector<8x8xi1>
    %316 = vector.broadcast %cst_145 : f32 to vector<8x8xf32>
    %317 = arith.select %315, %316, %313 : vector<8x8xi1>, vector<8x8xf32>
    %cst_146 = arith.constant dense<0xFF800000> : vector<8xf32>
    %318 = vector.multi_reduction <maximumf>, %317, %cst_146 [1] : vector<8x8xf32> to vector<8xf32>
    %319 = vector.shape_cast %318 : vector<8xf32> to vector<8x1xf32>
    %320 = vector.broadcast %319 : vector<8x1xf32> to vector<8x8xf32>
    %321 = arith.subf %317, %320 : vector<8x8xf32>
    %322 = math.exp %321 : vector<8x8xf32>
    %cst_147 = arith.constant dense<0.000000e+00> : vector<8xf32>
    %323 = vector.multi_reduction <add>, %322, %cst_147 [1] : vector<8x8xf32> to vector<8xf32>
    %324 = vector.shape_cast %323 : vector<8xf32> to vector<8x1xf32>
    %325 = tpu.reciprocal %324 {approx = true} : vector<8x1xf32> -> vector<8x1xf32>
    %326 = vector.broadcast %325 : vector<8x1xf32> to vector<8x8xf32>
    %327 = arith.mulf %322, %326 : vector<8x8xf32>
    %c1_148 = arith.constant 1 : index
    %c1_149 = arith.constant 1 : index
    %c1_150 = arith.constant 1 : index
    %c0_151 = arith.constant 0 : index
    %c0_152 = arith.constant 0 : index
    %328 = vector.load %arg13[%c1_148, %c1_149, %c1_150, %c0_151, %c0_152] : memref<2x2x2x8x8xf32, #tpu.memory_space<vmem>>, vector<1x1x1x8x8xf32>
    %329 = vector.shape_cast %328 : vector<1x1x1x8x8xf32> to vector<8x8xf32>
    %330 = vector.shape_cast %327 : vector<8x8xf32> to vector<1x1x1x8x8xf32>
    tpu.vector_store %arg13[%c1_148, %c1_149, %c1_150, %c0_151, %c0_152], %330 {strides = array<i32>} : memref<2x2x2x8x8xf32, #tpu.memory_space<vmem>>, vector<1x1x1x8x8xf32>,
    %cst_153 = arith.constant dense<0.000000e+00> : vector<8x16xf32>
    %331 = tpu.matmul %327, %309, %cst_153 {dimension_numbers = #tpu.dot_dimension_numbers<[1], [0], [0], [1], [0, 0, 1, 1], [], []>} : vector<8x8xf32>, vector<8x16xf32>, vector<8x16xf32> -> vector<8x16xf32>
    %332 = tpu.concatenate %306, %331 in 1 : vector<8x16xf32>, vector<8x16xf32> -> vector<8x32xf32>
    %333 = tpu.concatenate %278, %332 in 0 : vector<8x32xf32>, vector<8x32xf32> -> vector<16x32xf32>
    %cst_154 = arith.constant dense<0.000000e+00> : vector<16x32xf32>
    %334 = tpu.matmul %333, %207, %cst_154 {dimension_numbers = #tpu.dot_dimension_numbers<[1], [0], [0], [1], [0, 0, 1, 1], [], []>} : vector<16x32xf32>, vector<32x32xf32>, vector<16x32xf32> -> vector<16x32xf32>
    %335 = vector.broadcast %216 : vector<1x32xf32> to vector<16x32xf32>
    %336 = arith.addf %334, %335 : vector<16x32xf32>
    %337 = arith.addf %201, %336 : vector<16x32xf32>
    %cst_155 = arith.constant dense<0.000000e+00> : vector<16xf32>
    %338 = vector.multi_reduction <add>, %337, %cst_155 [1] : vector<16x32xf32> to vector<16xf32>
    %339 = vector.shape_cast %338 : vector<16xf32> to vector<16x1xf32>
    %cst_156 = arith.constant 3.200000e+01 : f32
    %340 = vector.broadcast %cst_156 : f32 to vector<16x1xf32>
    %341 = arith.divf %339, %340 : vector<16x1xf32>
    %342 = vector.broadcast %341 : vector<16x1xf32> to vector<16x32xf32>
    %343 = arith.subf %337, %342 : vector<16x32xf32>
    %344 = arith.mulf %343, %343 : vector<16x32xf32>
    %cst_157 = arith.constant dense<0.000000e+00> : vector<16xf32>
    %345 = vector.multi_reduction <add>, %344, %cst_157 [1] : vector<16x32xf32> to vector<16xf32>
    %346 = vector.shape_cast %345 : vector<16xf32> to vector<16x1xf32>
    %cst_158 = arith.constant 3.200000e+01 : f32
    %347 = vector.broadcast %cst_158 : f32 to vector<16x1xf32>
    %348 = arith.divf %346, %347 : vector<16x1xf32>
    %349 = vector.broadcast %341 : vector<16x1xf32> to vector<16x32xf32>
    %350 = arith.subf %337, %349 : vector<16x32xf32>
    %cst_159 = arith.constant 9.99999996E-13 : f32
    %351 = vector.broadcast %cst_159 : f32 to vector<16x1xf32>
    %352 = arith.addf %348, %351 : vector<16x1xf32>
    %353 = math.rsqrt %352 : vector<16x1xf32>
    %354 = vector.broadcast %353 : vector<16x1xf32> to vector<16x32xf32>
    %355 = arith.mulf %350, %354 : vector<16x32xf32>
    %356 = vector.broadcast %217 : vector<1x32xf32> to vector<16x32xf32>
    %357 = arith.mulf %355, %356 : vector<16x32xf32>
    %358 = vector.broadcast %218 : vector<1x32xf32> to vector<16x32xf32>
    %359 = arith.addf %357, %358 : vector<16x32xf32>
    %cst_160 = arith.constant dense<0.000000e+00> : vector<16x64xf32>
    %360 = tpu.matmul %359, %209, %cst_160 {dimension_numbers = #tpu.dot_dimension_numbers<[1], [0], [0], [1], [0, 0, 1, 1], [], []>} : vector<16x32xf32>, vector<32x64xf32>, vector<16x64xf32> -> vector<16x64xf32>
    %361 = vector.broadcast %211 : vector<1x64xf32> to vector<16x64xf32>
    %362 = arith.addf %360, %361 : vector<16x64xf32>
    %363 = arith.mulf %362, %362 : vector<16x64xf32>
    %364 = arith.mulf %362, %363 : vector<16x64xf32>
    %cst_161 = arith.constant 4.471500e-02 : f32
    %365 = vector.broadcast %cst_161 : f32 to vector<16x64xf32>
    %366 = arith.mulf %365, %364 : vector<16x64xf32>
    %367 = arith.addf %362, %366 : vector<16x64xf32>
    %cst_162 = arith.constant 0.797884583 : f32
    %368 = vector.broadcast %cst_162 : f32 to vector<16x64xf32>
    %369 = arith.mulf %368, %367 : vector<16x64xf32>
    %370 = math.tanh %369 : vector<16x64xf32>
    %cst_163 = arith.constant 1.000000e+00 : f32
    %371 = vector.broadcast %cst_163 : f32 to vector<16x64xf32>
    %372 = arith.addf %371, %370 : vector<16x64xf32>
    %cst_164 = arith.constant 5.000000e-01 : f32
    %373 = vector.broadcast %cst_164 : f32 to vector<16x64xf32>
    %374 = arith.mulf %373, %372 : vector<16x64xf32>
    %375 = arith.mulf %362, %374 : vector<16x64xf32>
    %cst_165 = arith.constant dense<0.000000e+00> : vector<16x32xf32>
    %376 = tpu.matmul %375, %213, %cst_165 {dimension_numbers = #tpu.dot_dimension_numbers<[1], [0], [0], [1], [0, 0, 1, 1], [], []>} : vector<16x64xf32>, vector<64x32xf32>, vector<16x32xf32> -> vector<16x32xf32>
    %377 = vector.broadcast %219 : vector<1x32xf32> to vector<16x32xf32>
    %378 = arith.addf %376, %377 : vector<16x32xf32>
    %379 = arith.addf %359, %378 : vector<16x32xf32>
    %cst_166 = arith.constant dense<0.000000e+00> : vector<16xf32>
    %380 = vector.multi_reduction <add>, %379, %cst_166 [1] : vector<16x32xf32> to vector<16xf32>
    %381 = vector.shape_cast %380 : vector<16xf32> to vector<16x1xf32>
    %cst_167 = arith.constant 3.200000e+01 : f32
    %382 = vector.broadcast %cst_167 : f32 to vector<16x1xf32>
    %383 = arith.divf %381, %382 : vector<16x1xf32>
    %384 = vector.broadcast %383 : vector<16x1xf32> to vector<16x32xf32>
    %385 = arith.subf %379, %384 : vector<16x32xf32>
    %386 = arith.mulf %385, %385 : vector<16x32xf32>
    %cst_168 = arith.constant dense<0.000000e+00> : vector<16xf32>
    %387 = vector.multi_reduction <add>, %386, %cst_168 [1] : vector<16x32xf32> to vector<16xf32>
    %388 = vector.shape_cast %387 : vector<16xf32> to vector<16x1xf32>
    %cst_169 = arith.constant 3.200000e+01 : f32
    %389 = vector.broadcast %cst_169 : f32 to vector<16x1xf32>
    %390 = arith.divf %388, %389 : vector<16x1xf32>
    %391 = vector.broadcast %383 : vector<16x1xf32> to vector<16x32xf32>
    %392 = arith.subf %379, %391 : vector<16x32xf32>
    %cst_170 = arith.constant 9.99999996E-13 : f32
    %393 = vector.broadcast %cst_170 : f32 to vector<16x1xf32>
    %394 = arith.addf %390, %393 : vector<16x1xf32>
    %395 = math.rsqrt %394 : vector<16x1xf32>
    %396 = vector.broadcast %395 : vector<16x1xf32> to vector<16x32xf32>
    %397 = arith.mulf %392, %396 : vector<16x32xf32>
    %398 = vector.broadcast %220 : vector<1x32xf32> to vector<16x32xf32>
    %399 = arith.mulf %397, %398 : vector<16x32xf32>
    %400 = vector.broadcast %221 : vector<1x32xf32> to vector<16x32xf32>
    %401 = arith.addf %399, %400 : vector<16x32xf32>
    %402 = vector.extract_strided_slice %401 {offsets = [0, 0], sizes = [1, 32], strides = [1, 1]} : vector<16x32xf32> to vector<1x32xf32>
    %403 = vector.extract_strided_slice %401 {offsets = [8, 0], sizes = [1, 32], strides = [1, 1]} : vector<16x32xf32> to vector<1x32xf32>
    %404 = tpu.concatenate %402, %403 in 0 : vector<1x32xf32>, vector<1x32xf32> -> vector<2x32xf32>
    %c0_171 = arith.constant 0 : index
    %c0_172 = arith.constant 0 : index
    %405 = vector.load %arg9[%c0_171, %c0_172] : memref<32x32xf32, #tpu.memory_space<vmem>>, vector<32x32xf32>
    %cst_173 = arith.constant dense<0.000000e+00> : vector<2x32xf32>
    %406 = tpu.matmul %404, %405, %cst_173 {dimension_numbers = #tpu.dot_dimension_numbers<[1], [0], [0], [1], [0, 0, 1, 1], [], []>} : vector<2x32xf32>, vector<32x32xf32>, vector<2x32xf32> -> vector<2x32xf32>
    %c0_174 = arith.constant 0 : index
    %c0_175 = arith.constant 0 : index
    %407 = vector.load %arg10[%c0_174, %c0_175] : memref<1x32xf32, #tpu.memory_space<vmem>>, vector<1x32xf32>
    %408 = vector.broadcast %407 : vector<1x32xf32> to vector<2x32xf32>
    %409 = arith.addf %406, %408 : vector<2x32xf32>
    %410 = math.tanh %409 : vector<2x32xf32>
    %c0_176 = arith.constant 0 : index
    %c0_177 = arith.constant 0 : index
    %411 = vector.load %arg11[%c0_176, %c0_177] : memref<32x4xf32, #tpu.memory_space<vmem>>, vector<32x4xf32>
    %cst_178 = arith.constant dense<0.000000e+00> : vector<2x4xf32>
    %412 = tpu.matmul %410, %411, %cst_178 {dimension_numbers = #tpu.dot_dimension_numbers<[1], [0], [0], [1], [0, 0, 1, 1], [], []>} : vector<2x32xf32>, vector<32x4xf32>, vector<2x4xf32> -> vector<2x4xf32>
    %c0_179 = arith.constant 0 : index
    %c0_180 = arith.constant 0 : index
    %413 = vector.load %arg12[%c0_179, %c0_180] : memref<2x4xf32, #tpu.memory_space<vmem>>, vector<2x4xf32>
    tpu.vector_store %arg12[%c0_179, %c0_180], %412 {strides = array<i32>} : memref<2x4xf32, #tpu.memory_space<vmem>>, vector<2x4xf32>,
    return
  }
}

</mosaic_0001>

<llo_original>
// kernel: movie_classification_forward.1
$region0: #{movie_classification_forward.1}
  #allocation0 [shape = 'u32[]', space=smem, size = 0x4, offset = 0x4, fixed_abs, tag = 'smem constant byte address 0x4 - core index']
  #allocation1 [shape = 'u32[144,128]{1,0:T(1,128)}', space=vmem, size = 0x12000, scoped, tag = 'internal scratch']
  %s0 = inlined_call_operand.vmem [shape: f32[16,32], index: 0, kind: input, shape index: {}]
  %s1 = inlined_call_operand.vmem [shape: f32[2,8], index: 1, kind: input, shape index: {}]
  %s2 = inlined_call_operand.vmem [shape: f32[2,32,96], index: 2, kind: input, shape index: {}]
  %s3 = inlined_call_operand.vmem [shape: f32[2,1,96], index: 3, kind: input, shape index: {}]
  %s4 = inlined_call_operand.vmem [shape: f32[2,32,32], index: 4, kind: input, shape index: {}]
  %s5 = inlined_call_operand.vmem [shape: f32[2,32,64], index: 5, kind: input, shape index: {}]
  %s6 = inlined_call_operand.vmem [shape: f32[2,1,64], index: 6, kind: input, shape index: {}]
  %s7 = inlined_call_operand.vmem [shape: f32[2,64,32], index: 7, kind: input, shape index: {}]
  %s8 = inlined_call_operand.vmem [shape: f32[2,6,32], index: 8, kind: input, shape index: {}]
  %s9 = inlined_call_operand.vmem [shape: f32[32,32], index: 9, kind: input, shape index: {}]
  %s10 = inlined_call_operand.vmem [shape: f32[1,32], index: 10, kind: input, shape index: {}]
  %s11 = inlined_call_operand.vmem [shape: f32[32,4], index: 11, kind: input, shape index: {}]
  %s12 = inlined_call_operand.hbm [shape: f32[2,4], index: 12, kind: output, shape index: {0}]
  %s13 = inlined_call_operand.vmem [shape: f32[2,2,2,8,8], index: 13, kind: output, shape index: {1}]
  %14 = xla_tuple %s12, %s13
  %s15 = sld [smem:[#allocation0]]
  $region66: #{movie_classification_forward.1} parent=0
    _
  %s17 = ssub.s32 1, %s15
  %s18 = scalar_select 0, %s17, %s15
  $region1: #{movie_classification_forward.1} parent=0
    #allocation2 [shape = 'u8[1024]{0}', space=vmem, size = 0x400, scoped, tag = 'output window, operand 0, single buffered']
    #allocation3 [shape = 's32[1]{0}', space=sflag, size = 0x4, scoped, tag = 'scoped memory for movie_classification_forward.1']
    %19 = vsyncpa [#allocation3], 0
    // Predicated region
    $region2: #{movie_classification_forward.1} parent=1 // pred_check
      _
    $region3: #{movie_classification_forward.1} parent=1 // pred_check_branch
      %21 = sbr.rel (0) target = $region5
    $region4: #{movie_classification_forward.1} parent=1 // pred_region
      _
    $region5: #{movie_classification_forward.1} parent=1 // pred_fallthru
      _
    // Predicated region
    $region6: #{movie_classification_forward.1} parent=1 // pred_check
      _
    $region7: #{movie_classification_forward.1} parent=1 // pred_check_branch
      %23 = sbr.rel (0) target = $region9
    $region8: #{movie_classification_forward.1} parent=1 // pred_region
      _
    $region9: #{movie_classification_forward.1} parent=1 // pred_fallthru
      _
    // Predicated region
    $region10: #{movie_classification_forward.1} parent=1 // pred_check
      _
    $region11: #{movie_classification_forward.1} parent=1 // pred_check_branch
      %25 = sbr.rel (0) target = $region13
    $region12: #{movie_classification_forward.1} parent=1 // pred_region
      _
    $region13: #{movie_classification_forward.1} parent=1 // pred_fallthru
      _
    // Predicated region
    $region14: #{movie_classification_forward.1} parent=1 // pred_check
      _
    $region15: #{movie_classification_forward.1} parent=1 // pred_check_branch
      %27 = sbr.rel (0) target = $region17
    $region16: #{movie_classification_forward.1} parent=1 // pred_region
      _
    $region17: #{movie_classification_forward.1} parent=1 // pred_fallthru
      _
    // Predicated region
    $region18: #{movie_classification_forward.1} parent=1 // pred_check
      _
    $region19: #{movie_classification_forward.1} parent=1 // pred_check_branch
      %29 = sbr.rel (0) target = $region21
    $region20: #{movie_classification_forward.1} parent=1 // pred_region
      _
    $region21: #{movie_classification_forward.1} parent=1 // pred_fallthru
      _
    // Predicated region
    $region22: #{movie_classification_forward.1} parent=1 // pred_check
      _
    $region23: #{movie_classification_forward.1} parent=1 // pred_check_branch
      %31 = sbr.rel (0) target = $region25
    $region24: #{movie_classification_forward.1} parent=1 // pred_region
      _
    $region25: #{movie_classification_forward.1} parent=1 // pred_fallthru
      _
    // Predicated region
    $region26: #{movie_classification_forward.1} parent=1 // pred_check
      _
    $region27: #{movie_classification_forward.1} parent=1 // pred_check_branch
      %33 = sbr.rel (0) target = $region29
    $region28: #{movie_classification_forward.1} parent=1 // pred_region
      _
    $region29: #{movie_classification_forward.1} parent=1 // pred_fallthru
      _
    // Predicated region
    $region30: #{movie_classification_forward.1} parent=1 // pred_check
      _
    $region31: #{movie_classification_forward.1} parent=1 // pred_check_branch
      %35 = sbr.rel (0) target = $region33
    $region32: #{movie_classification_forward.1} parent=1 // pred_region
      _
    $region33: #{movie_classification_forward.1} parent=1 // pred_fallthru
      _
    // Predicated region
    $region34: #{movie_classification_forward.1} parent=1 // pred_check
      _
    $region35: #{movie_classification_forward.1} parent=1 // pred_check_branch
      %37 = sbr.rel (0) target = $region37
    $region36: #{movie_classification_forward.1} parent=1 // pred_region
      _
    $region37: #{movie_classification_forward.1} parent=1 // pred_fallthru
      _
    // Predicated region
    $region38: #{movie_classification_forward.1} parent=1 // pred_check
      _
    $region39: #{movie_classification_forward.1} parent=1 // pred_check_branch
      %39 = sbr.rel (0) target = $region41
    $region40: #{movie_classification_forward.1} parent=1 // pred_region
      _
    $region41: #{movie_classification_forward.1} parent=1 // pred_fallthru
      _
    // Predicated region
    $region42: #{movie_classification_forward.1} parent=1 // pred_check
      _
    $region43: #{movie_classification_forward.1} parent=1 // pred_check_branch
      %41 = sbr.rel (0) target = $region45
    $region44: #{movie_classification_forward.1} parent=1 // pred_region
      _
    $region45: #{movie_classification_forward.1} parent=1 // pred_fallthru
      _
    // Predicated region
    $region46: #{movie_classification_forward.1} parent=1 // pred_check
      _
    $region47: #{movie_classification_forward.1} parent=1 // pred_check_branch
      %43 = sbr.rel (0) target = $region49
    $region48: #{movie_classification_forward.1} parent=1 // pred_region
      _
    $region49: #{movie_classification_forward.1} parent=1 // pred_fallthru
      _
    %v44 = vld [vmem:[%s0] sm:$0xff]
    %v45 = vld [vmem:[%s0 + $0x8] sm:$0xff]
    %v46 = vld [vmem:[%s1] sm:$0x3]
    %v47 = vld [vmem:[%s2] sm:$0xff]
    %v48 = vld [vmem:[%s2 + $0x8] sm:$0xff]
    %v49 = vld [vmem:[%s2 + $0x10] sm:$0xff]
    %v50 = vld [vmem:[%s2 + $0x18] sm:$0xff]
    %v51 = vld [vmem:[%s3] sm:$0x1]
    %v52 = vld [vmem:[%s4] sm:$0xff]
    %v53 = vld [vmem:[%s4 + $0x8] sm:$0xff]
    %v54 = vld [vmem:[%s4 + $0x10] sm:$0xff]
    %v55 = vld [vmem:[%s4 + $0x18] sm:$0xff]
    %v56 = vld [vmem:[%s5] sm:$0xff]
    %v57 = vld [vmem:[%s5 + $0x8] sm:$0xff]
    %v58 = vld [vmem:[%s5 + $0x10] sm:$0xff]
    %v59 = vld [vmem:[%s5 + $0x18] sm:$0xff]
    %v60 = vld [vmem:[%s6] sm:$0x1]
    %v61 = vld [vmem:[%s7] sm:$0xff]
    %v62 = vld [vmem:[%s7 + $0x8] sm:$0xff]
    %v63 = vld [vmem:[%s7 + $0x10] sm:$0xff]
    %v64 = vld [vmem:[%s7 + $0x18] sm:$0xff]
    %v65 = vld [vmem:[%s7 + $0x20] sm:$0xff]
    %v66 = vld [vmem:[%s7 + $0x28] sm:$0xff]
    %v67 = vld [vmem:[%s7 + $0x30] sm:$0xff]
    %v68 = vld [vmem:[%s7 + $0x38] sm:$0xff]
    %v69 = vld [vmem:[%s8] sm:$0x3f]
    %v71 = vlaneseq
    %v72 = vshrl.u32 %v71, 7
    %v73 = vsub.s32 0, %v72
    %v74 = vrot.slane %v51, %v73
    %vm76 = vcmask 261120
    %v78 = vsel %vm76, %v44, 0
    %v81 = vsel %vm76, %v45, 0
    %83 = vmatprep.subr.mxu0 0.0
    %84 = vmatpush1.msra.mxu0 %v47
    %85 = vmatprep.subr.mxu0 0.0
    %86 = vmatpush1.msra.mxu0 %v48
    %87 = vmatprep.subr.mxu0 0.0
    %88 = vmatpush1.msra.mxu0 %v49
    %89 = vmatprep.subr.mxu0 0.0
    %90 = vmatpush1.msra.mxu0 %v50
    %91 = vmatprep.subr.mxu0 0.0
    %92 = vmatpush1.msra.mxu0 0.0
    %93 = vmatprep.subr.mxu0 0.0
    %94 = vmatpush1.msra.mxu0 0.0
    %95 = vmatprep.subr.mxu0 0.0
    %96 = vmatpush1.msra.mxu0 0.0
    %97 = vmatprep.subr.mxu0 0.0
    %98 = vmatpush1.msra.mxu0 0.0
    %99 = vmatprep.subr.mxu0 0.0
    %100 = vmatpush1.msra.mxu0 0.0
    %101 = vmatprep.subr.mxu0 0.0
    %102 = vmatpush1.msra.mxu0 0.0
    %103 = vmatprep.subr.mxu0 0.0
    %104 = vmatpush1.msra.mxu0 0.0
    %105 = vmatprep.subr.mxu0 0.0
    %106 = vmatpush1.msra.mxu0 0.0
    %107 = vmatprep.subr.mxu0 0.0
    %108 = vmatpush1.msra.mxu0 0.0
    %109 = vmatprep.subr.mxu0 0.0
    %110 = vmatpush1.msra.mxu0 0.0
    %111 = vmatprep.subr.mxu0 0.0
    %112 = vmatpush1.msra.mxu0 0.0
    %113 = vmatprep.subr.mxu0 0.0
    %114 = vmatpush1.msra.mxu0 0.0
    %115 = vmatprep.subr.mxu0 0.0
    %116 = vmatpush1.msra.mxu0 0.0
    %117 = vmatprep.subr.mxu0 0.0
    %118 = vmatpush1.msra.mxu0 0.0
    %119 = vmatprep.subr.mxu0 0.0
    %120 = vmatpush1.msra.mxu0 0.0
    %121 = vmatprep.subr.mxu0 0.0
    %122 = vmatpush1.msra.mxu0 0.0
    %123 = vmatprep.subr.mxu0 0.0
    %124 = vmatpush1.msra.mxu0 0.0
    %125 = vmatprep.subr.mxu0 0.0
    %126 = vmatpush1.msra.mxu0 0.0
    %127 = vmatprep.subr.mxu0 0.0
    %128 = vmatpush1.msra.mxu0 0.0
    %129 = vmatprep.subr.mxu0 0.0
    %130 = vmatpush1.msra.mxu0 0.0
    %131 = vmatprep.subr.mxu0 0.0
    %132 = vmatpush1.msra.mxu0 0.0
    %133 = vmatprep.subr.mxu0 0.0
    %134 = vmatpush1.msra.mxu0 0.0
    %135 = vmatprep.subr.mxu0 0.0
    %136 = vmatpush1.msra.mxu0 0.0
    %137 = vmatprep.subr.mxu0 0.0
    %138 = vmatpush1.msra.mxu0 0.0
    %139 = vmatprep.subr.mxu0 0.0
    %140 = vmatpush1.msra.mxu0 0.0
    %141 = vmatprep.subr.mxu0 0.0
    %142 = vmatpush1.msra.mxu0 0.0
    %143 = vmatprep.subr.mxu0 0.0
    %144 = vmatpush1.msra.mxu0 0.0
    %145 = vmatprep.subr.mxu0 0.0
    %146 = vmatpush1.msra.mxu0 0.0
    %147 = vmatprep.mubr.f32.mxu0 0.0
    %148 = vmatmul.mubr.f32.gmra.mrb[0].mxu0 %v78
    %v149 = vpop.f32.mrb[0].mxu0
    %v150 = vadd.f32 %v74, %v149
    %v151 = vpop.f32.mrb[0].mxu0
    %152 = vmatprep.mubr.f32.mxu0 0.0
    %153 = vmatmul.mubr.f32.gmra.mrb[0].mxu0 %v81
    %v154 = vpop.f32.mrb[0].mxu0
    %v155 = vadd.f32 %v74, %v154
    %v156 = vpop.f32.mrb[0].mxu0
    %157 = vdwg.mxu0
    %vm158 = vcmp.gt.f32.partialorder %v46, 0.5
    %160 = vrot.lane.b32.xlu0 %v150, 96
    %v161 = vpop.permute.xlu0 %160
    %vm162 = vcmask 130048
    %v163 = vsel %vm162, %v150, 0
    %v165 = vsel %vm162, %v161, 0
    %167 = vmatprep.subr.mxu0 0.0
    %168 = vmatpush1.xpose.msra.mxu0 %v165
    %169 = vmatprep.subr.mxu0 0.0
    %170 = vmatpush1.xpose.msra.mxu0 0.0
    %171 = vmatprep.subr.mxu0 0.0
    %172 = vmatpush1.xpose.msra.mxu0 0.0
    %173 = vmatprep.subr.mxu0 0.0
    %174 = vmatpush1.xpose.msra.mxu0 0.0
    %175 = vmatprep.subr.mxu0 0.0
    %176 = vmatpush1.xpose.msra.mxu0 0.0
    %177 = vmatprep.subr.mxu0 0.0
    %178 = vmatpush1.xpose.msra.mxu0 0.0
    %179 = vmatprep.subr.mxu0 0.0
    %180 = vmatpush1.xpose.msra.mxu0 0.0
    %181 = vmatprep.subr.mxu0 0.0
    %182 = vmatpush1.xpose.msra.mxu0 0.0
    %183 = vmatprep.subr.mxu0 0.0
    %184 = vmatpush1.xpose.msra.mxu0 0.0
    %185 = vmatprep.subr.mxu0 0.0
    %186 = vmatpush1.xpose.msra.mxu0 0.0
    %187 = vmatprep.subr.mxu0 0.0
    %188 = vmatpush1.xpose.msra.mxu0 0.0
    %189 = vmatprep.subr.mxu0 0.0
    %190 = vmatpush1.xpose.msra.mxu0 0.0
    %191 = vmatprep.subr.mxu0 0.0
    %192 = vmatpush1.xpose.msra.mxu0 0.0
    %193 = vmatprep.subr.mxu0 0.0
    %194 = vmatpush1.xpose.msra.mxu0 0.0
    %195 = vmatprep.subr.mxu0 0.0
    %196 = vmatpush1.xpose.msra.mxu0 0.0
    %197 = vmatprep.subr.mxu0 0.0
    %198 = vmatpush1.xpose.msra.mxu0 0.0
    %199 = vmatprep.subr.mxu0 0.0
    %200 = vmatpush1.xpose.msra.mxu0 0.0
    %201 = vmatprep.subr.mxu0 0.0
    %202 = vmatpush1.xpose.msra.mxu0 0.0
    %203 = vmatprep.subr.mxu0 0.0
    %204 = vmatpush1.xpose.msra.mxu0 0.0
    %205 = vmatprep.subr.mxu0 0.0
    %206 = vmatpush1.xpose.msra.mxu0 0.0
    %207 = vmatprep.subr.mxu0 0.0
    %208 = vmatpush1.xpose.msra.mxu0 0.0
    %209 = vmatprep.subr.mxu0 0.0
    %210 = vmatpush1.xpose.msra.mxu0 0.0
    %211 = vmatprep.subr.mxu0 0.0
    %212 = vmatpush1.xpose.msra.mxu0 0.0
    %213 = vmatprep.subr.mxu0 0.0
    %214 = vmatpush1.xpose.msra.mxu0 0.0
    %215 = vmatprep.subr.mxu0 0.0
    %216 = vmatpush1.xpose.msra.mxu0 0.0
    %217 = vmatprep.subr.mxu0 0.0
    %218 = vmatpush1.xpose.msra.mxu0 0.0
    %219 = vmatprep.subr.mxu0 0.0
    %220 = vmatpush1.xpose.msra.mxu0 0.0
    %221 = vmatprep.subr.mxu0 0.0
    %222 = vmatpush1.xpose.msra.mxu0 0.0
    %223 = vmatprep.subr.mxu0 0.0
    %224 = vmatpush1.xpose.msra.mxu0 0.0
    %225 = vmatprep.subr.mxu0 0.0
    %226 = vmatpush1.xpose.msra.mxu0 0.0
    %227 = vmatprep.subr.mxu0 0.0
    %228 = vmatpush1.xpose.msra.mxu0 0.0
    %229 = vmatprep.subr.mxu0 0.0
    %230 = vmatpush1.xpose.msra.mxu0 0.0
    %231 = vmatprep.mubr.f32.mxu0 0.0
    %232 = vmatmul.mubr.f32.gmra.mrb[0].mxu0 %v163
    %v233 = vpop.f32.mrb[0].mxu0
    %v234 = vadd.f32 0.0, %v233
    %v235 = vpop.f32.mrb[0].mxu0
    %236 = vdwg.mxu0
    %v237 = vmul.f32 %v234, 0.25
    %v238 = vsel %vm158, 1, 0
    %v239 = vlaneseq
    %v240 = vshrl.u32 %v239, 7
    %v241 = vsub.s32 0, %v240
    %v242 = vrot.slane %v238, %v241
    %vm243 = vcmp.eq.s32.totalorder %v242, 1
    %v244 = vsel %vm243, -1e+09, %v237
    %vm245 = vcmask 64512
    %v246 = vsel %vm245, %v244, -inf
    %247 = vmax.xlane.f32.xlu0 %v246
    %v248 = vpop.xlane.xlu0 %247
    %v249 = vsub.f32 %v244, %v248
    %v250 = vmul.f32 %v249, 1.442695
    %v251 = vpow.pop %v250
    %v252 = vsel %vm245, %v251, 0.0
    %253 = vadd.xlane.f32.xlu0 %v252
    %v254 = vpop.xlane.xlu0 %253
    %v255 = vrcp.pop %v254
    %v256 = vmul.f32 %v251, %v255
    %257 = vst.msk [vmem:[%s13] sm:$0xff] %vm245, %v256
    %258 = vrot.lane.b32.xlu0 %v150, 64
    %v259 = vpop.permute.xlu0 %258
    %v262 = vsel %vm245, %v256, 0
    %264 = vmatprep.subr.mxu0 0.0
    %265 = vmatpush1.msra.mxu0 %v259
    %266 = vmatprep.subr.mxu0 0.0
    %267 = vmatpush1.msra.mxu0 0.0
    %268 = vmatprep.subr.mxu0 0.0
    %269 = vmatpush1.msra.mxu0 0.0
    %270 = vmatprep.subr.mxu0 0.0
    %271 = vmatpush1.msra.mxu0 0.0
    %272 = vmatprep.subr.mxu0 0.0
    %273 = vmatpush1.msra.mxu0 0.0
    %274 = vmatprep.subr.mxu0 0.0
    %275 = vmatpush1.msra.mxu0 0.0
    %276 = vmatprep.subr.mxu0 0.0
    %277 = vmatpush1.msra.mxu0 0.0
    %278 = vmatprep.subr.mxu0 0.0
    %279 = vmatpush1.msra.mxu0 0.0
    %280 = vmatprep.subr.mxu0 0.0
    %281 = vmatpush1.msra.mxu0 0.0
    %282 = vmatprep.subr.mxu0 0.0
    %283 = vmatpush1.msra.mxu0 0.0
    %284 = vmatprep.subr.mxu0 0.0
    %285 = vmatpush1.msra.mxu0 0.0
    %286 = vmatprep.subr.mxu0 0.0
    %287 = vmatpush1.msra.mxu0 0.0
    %288 = vmatprep.subr.mxu0 0.0
    %289 = vmatpush1.msra.mxu0 0.0
    %290 = vmatprep.subr.mxu0 0.0
    %291 = vmatpush1.msra.mxu0 0.0
    %292 = vmatprep.subr.mxu0 0.0
    %293 = vmatpush1.msra.mxu0 0.0
    %294 = vmatprep.subr.mxu0 0.0
    %295 = vmatpush1.msra.mxu0 0.0
    %296 = vmatprep.subr.mxu0 0.0
    %297 = vmatpush1.msra.mxu0 0.0
    %298 = vmatprep.subr.mxu0 0.0
    %299 = vmatpush1.msra.mxu0 0.0
    %300 = vmatprep.subr.mxu0 0.0
    %301 = vmatpush1.msra.mxu0 0.0
    %302 = vmatprep.subr.mxu0 0.0
    %303 = vmatpush1.msra.mxu0 0.0
    %304 = vmatprep.subr.mxu0 0.0
    %305 = vmatpush1.msra.mxu0 0.0
    %306 = vmatprep.subr.mxu0 0.0
    %307 = vmatpush1.msra.mxu0 0.0
    %308 = vmatprep.subr.mxu0 0.0
    %309 = vmatpush1.msra.mxu0 0.0
    %310 = vmatprep.subr.mxu0 0.0
    %311 = vmatpush1.msra.mxu0 0.0
    %312 = vmatprep.subr.mxu0 0.0
    %313 = vmatpush1.msra.mxu0 0.0
    %314 = vmatprep.subr.mxu0 0.0
    %315 = vmatpush1.msra.mxu0 0.0
    %316 = vmatprep.subr.mxu0 0.0
    %317 = vmatpush1.msra.mxu0 0.0
    %318 = vmatprep.subr.mxu0 0.0
    %319 = vmatpush1.msra.mxu0 0.0
    %320 = vmatprep.subr.mxu0 0.0
    %321 = vmatpush1.msra.mxu0 0.0
    %322 = vmatprep.subr.mxu0 0.0
    %323 = vmatpush1.msra.mxu0 0.0
    %324 = vmatprep.subr.mxu0 0.0
    %325 = vmatpush1.msra.mxu0 0.0
    %326 = vmatprep.subr.mxu0 0.0
    %327 = vmatpush1.msra.mxu0 0.0
    %328 = vmatprep.mubr.f32.mxu0 0.0
    %329 = vmatmul.mubr.f32.gmra.mrb[0].mxu0 %v262
    %v330 = vpop.f32.mrb[0].mxu0
    %v331 = vadd.f32 0.0, %v330
    %v332 = vpop.f32.mrb[0].mxu0
    %333 = vdwg.mxu0
    %334 = vrot.lane.b32.xlu0 %v150, 112
    %v335 = vpop.permute.xlu0 %334
    %336 = vrot.lane.b32.xlu0 %v150, 80
    %v337 = vpop.permute.xlu0 %336
    %v338 = vsel %vm162, %v335, 0
    %v340 = vsel %vm162, %v337, 0
    %342 = vmatprep.subr.mxu0 0.0
    %343 = vmatpush1.xpose.msra.mxu0 %v340
    %344 = vmatprep.subr.mxu0 0.0
    %345 = vmatpush1.xpose.msra.mxu0 0.0
    %346 = vmatprep.subr.mxu0 0.0
    %347 = vmatpush1.xpose.msra.mxu0 0.0
    %348 = vmatprep.subr.mxu0 0.0
    %349 = vmatpush1.xpose.msra.mxu0 0.0
    %350 = vmatprep.subr.mxu0 0.0
    %351 = vmatpush1.xpose.msra.mxu0 0.0
    %352 = vmatprep.subr.mxu0 0.0
    %353 = vmatpush1.xpose.msra.mxu0 0.0
    %354 = vmatprep.subr.mxu0 0.0
    %355 = vmatpush1.xpose.msra.mxu0 0.0
    %356 = vmatprep.subr.mxu0 0.0
    %357 = vmatpush1.xpose.msra.mxu0 0.0
    %358 = vmatprep.subr.mxu0 0.0
    %359 = vmatpush1.xpose.msra.mxu0 0.0
    %360 = vmatprep.subr.mxu0 0.0
    %361 = vmatpush1.xpose.msra.mxu0 0.0
    %362 = vmatprep.subr.mxu0 0.0
    %363 = vmatpush1.xpose.msra.mxu0 0.0
    %364 = vmatprep.subr.mxu0 0.0
    %365 = vmatpush1.xpose.msra.mxu0 0.0
    %366 = vmatprep.subr.mxu0 0.0
    %367 = vmatpush1.xpose.msra.mxu0 0.0
    %368 = vmatprep.subr.mxu0 0.0
    %369 = vmatpush1.xpose.msra.mxu0 0.0
    %370 = vmatprep.subr.mxu0 0.0
    %371 = vmatpush1.xpose.msra.mxu0 0.0
    %372 = vmatprep.subr.mxu0 0.0
    %373 = vmatpush1.xpose.msra.mxu0 0.0
    %374 = vmatprep.subr.mxu0 0.0
    %375 = vmatpush1.xpose.msra.mxu0 0.0
    %376 = vmatprep.subr.mxu0 0.0
    %377 = vmatpush1.xpose.msra.mxu0 0.0
    %378 = vmatprep.subr.mxu0 0.0
    %379 = vmatpush1.xpose.msra.mxu0 0.0
    %380 = vmatprep.subr.mxu0 0.0
    %381 = vmatpush1.xpose.msra.mxu0 0.0
    %382 = vmatprep.subr.mxu0 0.0
    %383 = vmatpush1.xpose.msra.mxu0 0.0
    %384 = vmatprep.subr.mxu0 0.0
    %385 = vmatpush1.xpose.msra.mxu0 0.0
    %386 = vmatprep.subr.mxu0 0.0
    %387 = vmatpush1.xpose.msra.mxu0 0.0
    %388 = vmatprep.subr.mxu0 0.0
    %389 = vmatpush1.xpose.msra.mxu0 0.0
    %390 = vmatprep.subr.mxu0 0.0
    %391 = vmatpush1.xpose.msra.mxu0 0.0
    %392 = vmatprep.subr.mxu0 0.0
    %393 = vmatpush1.xpose.msra.mxu0 0.0
    %394 = vmatprep.subr.mxu0 0.0
    %395 = vmatpush1.xpose.msra.mxu0 0.0
    %396 = vmatprep.subr.mxu0 0.0
    %397 = vmatpush1.xpose.msra.mxu0 0.0
    %398 = vmatprep.subr.mxu0 0.0
    %399 = vmatpush1.xpose.msra.mxu0 0.0
    %400 = vmatprep.subr.mxu0 0.0
    %401 = vmatpush1.xpose.msra.mxu0 0.0
    %402 = vmatprep.subr.mxu0 0.0
    %403 = vmatpush1.xpose.msra.mxu0 0.0
    %404 = vmatprep.subr.mxu0 0.0
    %405 = vmatpush1.xpose.msra.mxu0 0.0
    %406 = vmatprep.mubr.f32.mxu0 0.0
    %407 = vmatmul.mubr.f32.gmra.mrb[0].mxu0 %v338
    %v408 = vpop.f32.mrb[0].mxu0
    %v409 = vadd.f32 0.0, %v408
    %v410 = vpop.f32.mrb[0].mxu0
    %411 = vdwg.mxu0
    %v412 = vmul.f32 %v409, 0.25
    %v413 = vsel %vm243, -1e+09, %v412
    %v414 = vsel %vm245, %v413, -inf
    %415 = vmax.xlane.f32.xlu0 %v414
    %v416 = vpop.xlane.xlu0 %415
    %v417 = vsub.f32 %v413, %v416
    %v418 = vmul.f32 %v417, 1.442695
    %v419 = vpow.pop %v418
    %v420 = vsel %vm245, %v419, 0.0
    %421 = vadd.xlane.f32.xlu0 %v420
    %v422 = vpop.xlane.xlu0 %421
    %v423 = vrcp.pop %v422
    %v424 = vmul.f32 %v419, %v423
    %s425 = scalar_lea.vmem %s13, 8
    %426 = vst.msk [vmem:[%s425] sm:$0xff] %vm245, %v424
    %427 = vrot.lane.b32.xlu0 %v150, 48
    %v428 = vpop.permute.xlu0 %427
    %v431 = vsel %vm245, %v424, 0
    %433 = vmatprep.subr.mxu0 0.0
    %434 = vmatpush1.msra.mxu0 %v428
    %435 = vmatprep.subr.mxu0 0.0
    %436 = vmatpush1.msra.mxu0 0.0
    %437 = vmatprep.subr.mxu0 0.0
    %438 = vmatpush1.msra.mxu0 0.0
    %439 = vmatprep.subr.mxu0 0.0
    %440 = vmatpush1.msra.mxu0 0.0
    %441 = vmatprep.subr.mxu0 0.0
    %442 = vmatpush1.msra.mxu0 0.0
    %443 = vmatprep.subr.mxu0 0.0
    %444 = vmatpush1.msra.mxu0 0.0
    %445 = vmatprep.subr.mxu0 0.0
    %446 = vmatpush1.msra.mxu0 0.0
    %447 = vmatprep.subr.mxu0 0.0
    %448 = vmatpush1.msra.mxu0 0.0
    %449 = vmatprep.subr.mxu0 0.0
    %450 = vmatpush1.msra.mxu0 0.0
    %451 = vmatprep.subr.mxu0 0.0
    %452 = vmatpush1.msra.mxu0 0.0
    %453 = vmatprep.subr.mxu0 0.0
    %454 = vmatpush1.msra.mxu0 0.0
    %455 = vmatprep.subr.mxu0 0.0
    %456 = vmatpush1.msra.mxu0 0.0
    %457 = vmatprep.subr.mxu0 0.0
    %458 = vmatpush1.msra.mxu0 0.0
    %459 = vmatprep.subr.mxu0 0.0
    %460 = vmatpush1.msra.mxu0 0.0
    %461 = vmatprep.subr.mxu0 0.0
    %462 = vmatpush1.msra.mxu0 0.0
    %463 = vmatprep.subr.mxu0 0.0
    %464 = vmatpush1.msra.mxu0 0.0
    %465 = vmatprep.subr.mxu0 0.0
    %466 = vmatpush1.msra.mxu0 0.0
    %467 = vmatprep.subr.mxu0 0.0
    %468 = vmatpush1.msra.mxu0 0.0
    %469 = vmatprep.subr.mxu0 0.0
    %470 = vmatpush1.msra.mxu0 0.0
    %471 = vmatprep.subr.mxu0 0.0
    %472 = vmatpush1.msra.mxu0 0.0
    %473 = vmatprep.subr.mxu0 0.0
    %474 = vmatpush1.msra.mxu0 0.0
    %475 = vmatprep.subr.mxu0 0.0
    %476 = vmatpush1.msra.mxu0 0.0
    %477 = vmatprep.subr.mxu0 0.0
    %478 = vmatpush1.msra.mxu0 0.0
    %479 = vmatprep.subr.mxu0 0.0
    %480 = vmatpush1.msra.mxu0 0.0
    %481 = vmatprep.subr.mxu0 0.0
    %482 = vmatpush1.msra.mxu0 0.0
    %483 = vmatprep.subr.mxu0 0.0
    %484 = vmatpush1.msra.mxu0 0.0
    %485 = vmatprep.subr.mxu0 0.0
    %486 = vmatpush1.msra.mxu0 0.0
    %487 = vmatprep.subr.mxu0 0.0
    %488 = vmatpush1.msra.mxu0 0.0
    %489 = vmatprep.subr.mxu0 0.0
    %490 = vmatpush1.msra.mxu0 0.0
    %491 = vmatprep.subr.mxu0 0.0
    %492 = vmatpush1.msra.mxu0 0.0
    %493 = vmatprep.subr.mxu0 0.0
    %494 = vmatpush1.msra.mxu0 0.0
    %495 = vmatprep.subr.mxu0 0.0
    %496 = vmatpush1.msra.mxu0 0.0
    %497 = vmatprep.mubr.f32.mxu0 0.0
    %498 = vmatmul.mubr.f32.gmra.mrb[0].mxu0 %v431
    %v499 = vpop.f32.mrb[0].mxu0
    %v500 = vadd.f32 0.0, %v499
    %v501 = vpop.f32.mrb[0].mxu0
    %502 = vdwg.mxu0
    %504 = vrot.lane.b32.xlu0 %v500, 16
    %v505 = vpop.permute.xlu0 %504
    %v507 = vsel %vm162, %v331, %v505
    %509 = vrot.lane.b32.xlu0 %v155, 96
    %v510 = vpop.permute.xlu0 %509
    %v511 = vsel %vm162, %v155, 0
    %v513 = vsel %vm162, %v510, 0
    %515 = vmatprep.subr.mxu0 0.0
    %516 = vmatpush1.xpose.msra.mxu0 %v513
    %517 = vmatprep.subr.mxu0 0.0
    %518 = vmatpush1.xpose.msra.mxu0 0.0
    %519 = vmatprep.subr.mxu0 0.0
    %520 = vmatpush1.xpose.msra.mxu0 0.0
    %521 = vmatprep.subr.mxu0 0.0
    %522 = vmatpush1.xpose.msra.mxu0 0.0
    %523 = vmatprep.subr.mxu0 0.0
    %524 = vmatpush1.xpose.msra.mxu0 0.0
    %525 = vmatprep.subr.mxu0 0.0
    %526 = vmatpush1.xpose.msra.mxu0 0.0
    %527 = vmatprep.subr.mxu0 0.0
    %528 = vmatpush1.xpose.msra.mxu0 0.0
    %529 = vmatprep.subr.mxu0 0.0
    %530 = vmatpush1.xpose.msra.mxu0 0.0
    %531 = vmatprep.subr.mxu0 0.0
    %532 = vmatpush1.xpose.msra.mxu0 0.0
    %533 = vmatprep.subr.mxu0 0.0
    %534 = vmatpush1.xpose.msra.mxu0 0.0
    %535 = vmatprep.subr.mxu0 0.0
    %536 = vmatpush1.xpose.msra.mxu0 0.0
    %537 = vmatprep.subr.mxu0 0.0
    %538 = vmatpush1.xpose.msra.mxu0 0.0
    %539 = vmatprep.subr.mxu0 0.0
    %540 = vmatpush1.xpose.msra.mxu0 0.0
    %541 = vmatprep.subr.mxu0 0.0
    %542 = vmatpush1.xpose.msra.mxu0 0.0
    %543 = vmatprep.subr.mxu0 0.0
    %544 = vmatpush1.xpose.msra.mxu0 0.0
    %545 = vmatprep.subr.mxu0 0.0
    %546 = vmatpush1.xpose.msra.mxu0 0.0
    %547 = vmatprep.subr.mxu0 0.0
    %548 = vmatpush1.xpose.msra.mxu0 0.0
    %549 = vmatprep.subr.mxu0 0.0
    %550 = vmatpush1.xpose.msra.mxu0 0.0
    %551 = vmatprep.subr.mxu0 0.0
    %552 = vmatpush1.xpose.msra.mxu0 0.0
    %553 = vmatprep.subr.mxu0 0.0
    %554 = vmatpush1.xpose.msra.mxu0 0.0
    %555 = vmatprep.subr.mxu0 0.0
    %556 = vmatpush1.xpose.msra.mxu0 0.0
    %557 = vmatprep.subr.mxu0 0.0
    %558 = vmatpush1.xpose.msra.mxu0 0.0
    %559 = vmatprep.subr.mxu0 0.0
    %560 = vmatpush1.xpose.msra.mxu0 0.0
    %561 = vmatprep.subr.mxu0 0.0
    %562 = vmatpush1.xpose.msra.mxu0 0.0
    %563 = vmatprep.subr.mxu0 0.0
    %564 = vmatpush1.xpose.msra.mxu0 0.0
    %565 = vmatprep.subr.mxu0 0.0
    %566 = vmatpush1.xpose.msra.mxu0 0.0
    %567 = vmatprep.subr.mxu0 0.0
    %568 = vmatpush1.xpose.msra.mxu0 0.0
    %569 = vmatprep.subr.mxu0 0.0
    %570 = vmatpush1.xpose.msra.mxu0 0.0
    %571 = vmatprep.subr.mxu0 0.0
    %572 = vmatpush1.xpose.msra.mxu0 0.0
    %573 = vmatprep.subr.mxu0 0.0
    %574 = vmatpush1.xpose.msra.mxu0 0.0
    %575 = vmatprep.subr.mxu0 0.0
    %576 = vmatpush1.xpose.msra.mxu0 0.0
    %577 = vmatprep.subr.mxu0 0.0
    %578 = vmatpush1.xpose.msra.mxu0 0.0
    %579 = vmatprep.mubr.f32.mxu0 0.0
    %580 = vmatmul.mubr.f32.gmra.mrb[0].mxu0 %v511
    %v581 = vpop.f32.mrb[0].mxu0
    %v582 = vadd.f32 0.0, %v581
    %v583 = vpop.f32.mrb[0].mxu0
    %584 = vdwg.mxu0
    %v585 = vmul.f32 %v582, 0.25
    %v586 = vlaneseq
    %v587 = vshrl.u32 %v586, 7
    %v588 = vsub.s32 1, %v587
    %v589 = vrot.slane %v238, %v588
    %vm590 = vcmp.eq.s32.totalorder %v589, 1
    %v591 = vsel %vm590, -1e+09, %v585
    %v592 = vsel %vm245, %v591, -inf
    %593 = vmax.xlane.f32.xlu0 %v592
    %v594 = vpop.xlane.xlu0 %593
    %v595 = vsub.f32 %v591, %v594
    %v596 = vmul.f32 %v595, 1.442695
    %v597 = vpow.pop %v596
    %v598 = vsel %vm245, %v597, 0.0
    %599 = vadd.xlane.f32.xlu0 %v598
    %v600 = vpop.xlane.xlu0 %599
    %v601 = vrcp.pop %v600
    %v602 = vmul.f32 %v597, %v601
    %s603 = scalar_lea.vmem %s13, 16
    %604 = vst.msk [vmem:[%s603] sm:$0xff] %vm245, %v602
    %605 = vrot.lane.b32.xlu0 %v155, 64
    %v606 = vpop.permute.xlu0 %605
    %v609 = vsel %vm245, %v602, 0
    %611 = vmatprep.subr.mxu0 0.0
    %612 = vmatpush1.msra.mxu0 %v606
    %613 = vmatprep.subr.mxu0 0.0
    %614 = vmatpush1.msra.mxu0 0.0
    %615 = vmatprep.subr.mxu0 0.0
    %616 = vmatpush1.msra.mxu0 0.0
    %617 = vmatprep.subr.mxu0 0.0
    %618 = vmatpush1.msra.mxu0 0.0
    %619 = vmatprep.subr.mxu0 0.0
    %620 = vmatpush1.msra.mxu0 0.0
    %621 = vmatprep.subr.mxu0 0.0
    %622 = vmatpush1.msra.mxu0 0.0
    %623 = vmatprep.subr.mxu0 0.0
    %624 = vmatpush1.msra.mxu0 0.0
    %625 = vmatprep.subr.mxu0 0.0
    %626 = vmatpush1.msra.mxu0 0.0
    %627 = vmatprep.subr.mxu0 0.0
    %628 = vmatpush1.msra.mxu0 0.0
    %629 = vmatprep.subr.mxu0 0.0
    %630 = vmatpush1.msra.mxu0 0.0
    %631 = vmatprep.subr.mxu0 0.0
    %632 = vmatpush1.msra.mxu0 0.0
    %633 = vmatprep.subr.mxu0 0.0
    %634 = vmatpush1.msra.mxu0 0.0
    %635 = vmatprep.subr.mxu0 0.0
    %636 = vmatpush1.msra.mxu0 0.0
    %637 = vmatprep.subr.mxu0 0.0
    %638 = vmatpush1.msra.mxu0 0.0
    %639 = vmatprep.subr.mxu0 0.0
    %640 = vmatpush1.msra.mxu0 0.0
    %641 = vmatprep.subr.mxu0 0.0
    %642 = vmatpush1.msra.mxu0 0.0
    %643 = vmatprep.subr.mxu0 0.0
    %644 = vmatpush1.msra.mxu0 0.0
    %645 = vmatprep.subr.mxu0 0.0
    %646 = vmatpush1.msra.mxu0 0.0
    %647 = vmatprep.subr.mxu0 0.0
    %648 = vmatpush1.msra.mxu0 0.0
    %649 = vmatprep.subr.mxu0 0.0
    %650 = vmatpush1.msra.mxu0 0.0
    %651 = vmatprep.subr.mxu0 0.0
    %652 = vmatpush1.msra.mxu0 0.0
    %653 = vmatprep.subr.mxu0 0.0
    %654 = vmatpush1.msra.mxu0 0.0
    %655 = vmatprep.subr.mxu0 0.0
    %656 = vmatpush1.msra.mxu0 0.0
    %657 = vmatprep.subr.mxu0 0.0
    %658 = vmatpush1.msra.mxu0 0.0
    %659 = vmatprep.subr.mxu0 0.0
    %660 = vmatpush1.msra.mxu0 0.0
    %661 = vmatprep.subr.mxu0 0.0
    %662 = vmatpush1.msra.mxu0 0.0
    %663 = vmatprep.subr.mxu0 0.0
    %664 = vmatpush1.msra.mxu0 0.0
    %665 = vmatprep.subr.mxu0 0.0
    %666 = vmatpush1.msra.mxu0 0.0
    %667 = vmatprep.subr.mxu0 0.0
    %668 = vmatpush1.msra.mxu0 0.0
    %669 = vmatprep.subr.mxu0 0.0
    %670 = vmatpush1.msra.mxu0 0.0
    %671 = vmatprep.subr.mxu0 0.0
    %672 = vmatpush1.msra.mxu0 0.0
    %673 = vmatprep.subr.mxu0 0.0
    %674 = vmatpush1.msra.mxu0 0.0
    %675 = vmatprep.mubr.f32.mxu0 0.0
    %676 = vmatmul.mubr.f32.gmra.mrb[0].mxu0 %v609
    %v677 = vpop.f32.mrb[0].mxu0
    %v678 = vadd.f32 0.0, %v677
    %v679 = vpop.f32.mrb[0].mxu0
    %680 = vdwg.mxu0
    %681 = vrot.lane.b32.xlu0 %v155, 112
    %v682 = vpop.permute.xlu0 %681
    %683 = vrot.lane.b32.xlu0 %v155, 80
    %v684 = vpop.permute.xlu0 %683
    %v685 = vsel %vm162, %v682, 0
    %v687 = vsel %vm162, %v684, 0
    %689 = vmatprep.subr.mxu0 0.0
    %690 = vmatpush1.xpose.msra.mxu0 %v687
    %691 = vmatprep.subr.mxu0 0.0
    %692 = vmatpush1.xpose.msra.mxu0 0.0
    %693 = vmatprep.subr.mxu0 0.0
    %694 = vmatpush1.xpose.msra.mxu0 0.0
    %695 = vmatprep.subr.mxu0 0.0
    %696 = vmatpush1.xpose.msra.mxu0 0.0
    %697 = vmatprep.subr.mxu0 0.0
    %698 = vmatpush1.xpose.msra.mxu0 0.0
    %699 = vmatprep.subr.mxu0 0.0
    %700 = vmatpush1.xpose.msra.mxu0 0.0
    %701 = vmatprep.subr.mxu0 0.0
    %702 = vmatpush1.xpose.msra.mxu0 0.0
    %703 = vmatprep.subr.mxu0 0.0
    %704 = vmatpush1.xpose.msra.mxu0 0.0
    %705 = vmatprep.subr.mxu0 0.0
    %706 = vmatpush1.xpose.msra.mxu0 0.0
    %707 = vmatprep.subr.mxu0 0.0
    %708 = vmatpush1.xpose.msra.mxu0 0.0
    %709 = vmatprep.subr.mxu0 0.0
    %710 = vmatpush1.xpose.msra.mxu0 0.0
    %711 = vmatprep.subr.mxu0 0.0
    %712 = vmatpush1.xpose.msra.mxu0 0.0
    %713 = vmatprep.subr.mxu0 0.0
    %714 = vmatpush1.xpose.msra.mxu0 0.0
    %715 = vmatprep.subr.mxu0 0.0
    %716 = vmatpush1.xpose.msra.mxu0 0.0
    %717 = vmatprep.subr.mxu0 0.0
    %718 = vmatpush1.xpose.msra.mxu0 0.0
    %719 = vmatprep.subr.mxu0 0.0
    %720 = vmatpush1.xpose.msra.mxu0 0.0
    %721 = vmatprep.subr.mxu0 0.0
    %722 = vmatpush1.xpose.msra.mxu0 0.0
    %723 = vmatprep.subr.mxu0 0.0
    %724 = vmatpush1.xpose.msra.mxu0 0.0
    %725 = vmatprep.subr.mxu0 0.0
    %726 = vmatpush1.xpose.msra.mxu0 0.0
    %727 = vmatprep.subr.mxu0 0.0
    %728 = vmatpush1.xpose.msra.mxu0 0.0
    %729 = vmatprep.subr.mxu0 0.0
    %730 = vmatpush1.xpose.msra.mxu0 0.0
    %731 = vmatprep.subr.mxu0 0.0
    %732 = vmatpush1.xpose.msra.mxu0 0.0
    %733 = vmatprep.subr.mxu0 0.0
    %734 = vmatpush1.xpose.msra.mxu0 0.0
    %735 = vmatprep.subr.mxu0 0.0
    %736 = vmatpush1.xpose.msra.mxu0 0.0
    %737 = vmatprep.subr.mxu0 0.0
    %738 = vmatpush1.xpose.msra.mxu0 0.0
    %739 = vmatprep.subr.mxu0 0.0
    %740 = vmatpush1.xpose.msra.mxu0 0.0
    %741 = vmatprep.subr.mxu0 0.0
    %742 = vmatpush1.xpose.msra.mxu0 0.0
    %743 = vmatprep.subr.mxu0 0.0
    %744 = vmatpush1.xpose.msra.mxu0 0.0
    %745 = vmatprep.subr.mxu0 0.0
    %746 = vmatpush1.xpose.msra.mxu0 0.0
    %747 = vmatprep.subr.mxu0 0.0
    %748 = vmatpush1.xpose.msra.mxu0 0.0
    %749 = vmatprep.subr.mxu0 0.0
    %750 = vmatpush1.xpose.msra.mxu0 0.0
    %751 = vmatprep.subr.mxu0 0.0
    %752 = vmatpush1.xpose.msra.mxu0 0.0
    %753 = vmatprep.mubr.f32.mxu0 0.0
    %754 = vmatmul.mubr.f32.gmra.mrb[0].mxu0 %v685
    %v755 = vpop.f32.mrb[0].mxu0
    %v756 = vadd.f32 0.0, %v755
    %v757 = vpop.f32.mrb[0].mxu0
    %758 = vdwg.mxu0
    %v759 = vmul.f32 %v756, 0.25
    %v760 = vsel %vm590, -1e+09, %v759
    %v761 = vsel %vm245, %v760, -inf
    %762 = vmax.xlane.f32.xlu0 %v761
    %v763 = vpop.xlane.xlu0 %762
    %v764 = vsub.f32 %v760, %v763
    %v765 = vmul.f32 %v764, 1.442695
    %v766 = vpow.pop %v765
    %v767 = vsel %vm245, %v766, 0.0
    %768 = vadd.xlane.f32.xlu0 %v767
    %v769 = vpop.xlane.xlu0 %768
    %v770 = vrcp.pop %v769
    %v771 = vmul.f32 %v766, %v770
    %s772 = scalar_lea.vmem %s13, 24
    %773 = vst.msk [vmem:[%s772] sm:$0xff] %vm245, %v771
    %774 = vrot.lane.b32.xlu0 %v155, 48
    %v775 = vpop.permute.xlu0 %774
    %v778 = vsel %vm245, %v771, 0
    %780 = vmatprep.subr.mxu0 0.0
    %781 = vmatpush1.msra.mxu0 %v775
    %782 = vmatprep.subr.mxu0 0.0
    %783 = vmatpush1.msra.mxu0 0.0
    %784 = vmatprep.subr.mxu0 0.0
    %785 = vmatpush1.msra.mxu0 0.0
    %786 = vmatprep.subr.mxu0 0.0
    %787 = vmatpush1.msra.mxu0 0.0
    %788 = vmatprep.subr.mxu0 0.0
    %789 = vmatpush1.msra.mxu0 0.0
    %790 = vmatprep.subr.mxu0 0.0
    %791 = vmatpush1.msra.mxu0 0.0
    %792 = vmatprep.subr.mxu0 0.0
    %793 = vmatpush1.msra.mxu0 0.0
    %794 = vmatprep.subr.mxu0 0.0
    %795 = vmatpush1.msra.mxu0 0.0
    %796 = vmatprep.subr.mxu0 0.0
    %797 = vmatpush1.msra.mxu0 0.0
    %798 = vmatprep.subr.mxu0 0.0
    %799 = vmatpush1.msra.mxu0 0.0
    %800 = vmatprep.subr.mxu0 0.0
    %801 = vmatpush1.msra.mxu0 0.0
    %802 = vmatprep.subr.mxu0 0.0
    %803 = vmatpush1.msra.mxu0 0.0
    %804 = vmatprep.subr.mxu0 0.0
    %805 = vmatpush1.msra.mxu0 0.0
    %806 = vmatprep.subr.mxu0 0.0
    %807 = vmatpush1.msra.mxu0 0.0
    %808 = vmatprep.subr.mxu0 0.0
    %809 = vmatpush1.msra.mxu0 0.0
    %810 = vmatprep.subr.mxu0 0.0
    %811 = vmatpush1.msra.mxu0 0.0
    %812 = vmatprep.subr.mxu0 0.0
    %813 = vmatpush1.msra.mxu0 0.0
    %814 = vmatprep.subr.mxu0 0.0
    %815 = vmatpush1.msra.mxu0 0.0
    %816 = vmatprep.subr.mxu0 0.0
    %817 = vmatpush1.msra.mxu0 0.0
    %818 = vmatprep.subr.mxu0 0.0
    %819 = vmatpush1.msra.mxu0 0.0
    %820 = vmatprep.subr.mxu0 0.0
    %821 = vmatpush1.msra.mxu0 0.0
    %822 = vmatprep.subr.mxu0 0.0
    %823 = vmatpush1.msra.mxu0 0.0
    %824 = vmatprep.subr.mxu0 0.0
    %825 = vmatpush1.msra.mxu0 0.0
    %826 = vmatprep.subr.mxu0 0.0
    %827 = vmatpush1.msra.mxu0 0.0
    %828 = vmatprep.subr.mxu0 0.0
    %829 = vmatpush1.msra.mxu0 0.0
    %830 = vmatprep.subr.mxu0 0.0
    %831 = vmatpush1.msra.mxu0 0.0
    %832 = vmatprep.subr.mxu0 0.0
    %833 = vmatpush1.msra.mxu0 0.0
    %834 = vmatprep.subr.mxu0 0.0
    %835 = vmatpush1.msra.mxu0 0.0
    %836 = vmatprep.subr.mxu0 0.0
    %837 = vmatpush1.msra.mxu0 0.0
    %838 = vmatprep.subr.mxu0 0.0
    %839 = vmatpush1.msra.mxu0 0.0
    %840 = vmatprep.subr.mxu0 0.0
    %841 = vmatpush1.msra.mxu0 0.0
    %842 = vmatprep.subr.mxu0 0.0
    %843 = vmatpush1.msra.mxu0 0.0
    %844 = vmatprep.mubr.f32.mxu0 0.0
    %845 = vmatmul.mubr.f32.gmra.mrb[0].mxu0 %v778
    %v846 = vpop.f32.mrb[0].mxu0
    %v847 = vadd.f32 0.0, %v846
    %v848 = vpop.f32.mrb[0].mxu0
    %849 = vdwg.mxu0
    %851 = vrot.lane.b32.xlu0 %v847, 16
    %v852 = vpop.permute.xlu0 %851
    %v854 = vsel %vm162, %v678, %v852
    %v855 = vlaneseq
    %v856 = vshrl.u32 %v855, 7
    %v857 = vsub.s32 0, %v856
    %v858 = vrot.slane %v69, %v857
    %v860 = vsel %vm76, %v507, 0
    %v863 = vsel %vm76, %v854, 0
    %865 = vmatprep.subr.mxu0 0.0
    %866 = vmatpush1.msra.mxu0 %v52
    %867 = vmatprep.subr.mxu0 0.0
    %868 = vmatpush1.msra.mxu0 %v53
    %869 = vmatprep.subr.mxu0 0.0
    %870 = vmatpush1.msra.mxu0 %v54
    %871 = vmatprep.subr.mxu0 0.0
    %872 = vmatpush1.msra.mxu0 %v55
    %873 = vmatprep.subr.mxu0 0.0
    %874 = vmatpush1.msra.mxu0 0.0
    %875 = vmatprep.subr.mxu0 0.0
    %876 = vmatpush1.msra.mxu0 0.0
    %877 = vmatprep.subr.mxu0 0.0
    %878 = vmatpush1.msra.mxu0 0.0
    %879 = vmatprep.subr.mxu0 0.0
    %880 = vmatpush1.msra.mxu0 0.0
    %881 = vmatprep.subr.mxu0 0.0
    %882 = vmatpush1.msra.mxu0 0.0
    %883 = vmatprep.subr.mxu0 0.0
    %884 = vmatpush1.msra.mxu0 0.0
    %885 = vmatprep.subr.mxu0 0.0
    %886 = vmatpush1.msra.mxu0 0.0
    %887 = vmatprep.subr.mxu0 0.0
    %888 = vmatpush1.msra.mxu0 0.0
    %889 = vmatprep.subr.mxu0 0.0
    %890 = vmatpush1.msra.mxu0 0.0
    %891 = vmatprep.subr.mxu0 0.0
    %892 = vmatpush1.msra.mxu0 0.0
    %893 = vmatprep.subr.mxu0 0.0
    %894 = vmatpush1.msra.mxu0 0.0
    %895 = vmatprep.subr.mxu0 0.0
    %896 = vmatpush1.msra.mxu0 0.0
    %897 = vmatprep.subr.mxu0 0.0
    %898 = vmatpush1.msra.mxu0 0.0
    %899 = vmatprep.subr.mxu0 0.0
    %900 = vmatpush1.msra.mxu0 0.0
    %901 = vmatprep.subr.mxu0 0.0
    %902 = vmatpush1.msra.mxu0 0.0
    %903 = vmatprep.subr.mxu0 0.0
    %904 = vmatpush1.msra.mxu0 0.0
    %905 = vmatprep.subr.mxu0 0.0
    %906 = vmatpush1.msra.mxu0 0.0
    %907 = vmatprep.subr.mxu0 0.0
    %908 = vmatpush1.msra.mxu0 0.0
    %909 = vmatprep.subr.mxu0 0.0
    %910 = vmatpush1.msra.mxu0 0.0
    %911 = vmatprep.subr.mxu0 0.0
    %912 = vmatpush1.msra.mxu0 0.0
    %913 = vmatprep.subr.mxu0 0.0
    %914 = vmatpush1.msra.mxu0 0.0
    %915 = vmatprep.subr.mxu0 0.0
    %916 = vmatpush1.msra.mxu0 0.0
    %917 = vmatprep.subr.mxu0 0.0
    %918 = vmatpush1.msra.mxu0 0.0
    %919 = vmatprep.subr.mxu0 0.0
    %920 = vmatpush1.msra.mxu0 0.0
    %921 = vmatprep.subr.mxu0 0.0
    %922 = vmatpush1.msra.mxu0 0.0
    %923 = vmatprep.subr.mxu0 0.0
    %924 = vmatpush1.msra.mxu0 0.0
    %925 = vmatprep.subr.mxu0 0.0
    %926 = vmatpush1.msra.mxu0 0.0
    %927 = vmatprep.subr.mxu0 0.0
    %928 = vmatpush1.msra.mxu0 0.0
    %929 = vmatprep.mubr.f32.mxu0 0.0
    %930 = vmatmul.mubr.f32.gmra.mrb[0].mxu0 %v860
    %v931 = vpop.f32.mrb[0].mxu0
    %v932 = vadd.f32 %v858, %v931
    %v933 = vpop.f32.mrb[0].mxu0
    %934 = vmatprep.mubr.f32.mxu0 0.0
    %935 = vmatmul.mubr.f32.gmra.mrb[0].mxu0 %v863
    %v936 = vpop.f32.mrb[0].mxu0
    %v937 = vadd.f32 %v858, %v936
    %v938 = vpop.f32.mrb[0].mxu0
    %939 = vdwg.mxu0
    %v940 = vadd.f32 %v44, %v932
    %v941 = vadd.f32 %v45, %v937
    %v942 = vsel %vm76, %v940, 0.0
    %943 = vadd.xlane.f32.xlu0 %v942
    %v944 = vpop.xlane.xlu0 %943
    %v945 = vsel %vm76, %v941, 0.0
    %946 = vadd.xlane.f32.xlu0 %v945
    %v947 = vpop.xlane.xlu0 %946
    %v948 = vrcp.pop 32.0
    %v949 = vmul.f32 %v944, %v948
    %v950 = vmul.f32 %v947, %v948
    %v951 = vsub.f32 %v940, %v949
    %v952 = vsub.f32 %v941, %v950
    %v953 = vmul.f32 %v951, %v951
    %v954 = vmul.f32 %v952, %v952
    %v955 = vsel %vm76, %v953, 0.0
    %956 = vadd.xlane.f32.xlu0 %v955
    %v957 = vpop.xlane.xlu0 %956
    %v958 = vsel %vm76, %v954, 0.0
    %959 = vadd.xlane.f32.xlu0 %v958
    %v960 = vpop.xlane.xlu0 %959
    %v961 = vmul.f32 %v957, %v948
    %v962 = vmul.f32 %v960, %v948
    %v963 = vadd.f32 %v961, 1e-12
    %v964 = vadd.f32 %v962, 1e-12
    %v965 = vrsqrt.pop %v963
    %v966 = vrsqrt.pop %v964
    %v967 = vmul.f32 %v951, %v965
    %v968 = vmul.f32 %v952, %v966
    %v969 = vlaneseq
    %v970 = vshrl.u32 %v969, 7
    %v971 = vsub.s32 1, %v970
    %v972 = vrot.slane %v69, %v971
    %v973 = vmul.f32 %v967, %v972
    %v974 = vmul.f32 %v968, %v972
    %v975 = vlaneseq
    %v976 = vshrl.u32 %v975, 7
    %v977 = vsub.s32 2, %v976
    %v978 = vrot.slane %v69, %v977
    %v979 = vadd.f32 %v973, %v978
    %v980 = vadd.f32 %v974, %v978
    %v982 = vlaneseq
    %v983 = vshrl.u32 %v982, 7
    %v984 = vsub.s32 0, %v983
    %v985 = vrot.slane %v60, %v984
    %v988 = vsel %vm76, %v979, 0
    %v991 = vsel %vm76, %v980, 0
    %993 = vmatprep.subr.mxu0 0.0
    %994 = vmatpush1.msra.mxu0 %v56
    %995 = vmatprep.subr.mxu0 0.0
    %996 = vmatpush1.msra.mxu0 %v57
    %997 = vmatprep.subr.mxu0 0.0
    %998 = vmatpush1.msra.mxu0 %v58
    %999 = vmatprep.subr.mxu0 0.0
    %1000 = vmatpush1.msra.mxu0 %v59
    %1001 = vmatprep.subr.mxu0 0.0
    %1002 = vmatpush1.msra.mxu0 0.0
    %1003 = vmatprep.subr.mxu0 0.0
    %1004 = vmatpush1.msra.mxu0 0.0
    %1005 = vmatprep.subr.mxu0 0.0
    %1006 = vmatpush1.msra.mxu0 0.0
    %1007 = vmatprep.subr.mxu0 0.0
    %1008 = vmatpush1.msra.mxu0 0.0
    %1009 = vmatprep.subr.mxu0 0.0
    %1010 = vmatpush1.msra.mxu0 0.0
    %1011 = vmatprep.subr.mxu0 0.0
    %1012 = vmatpush1.msra.mxu0 0.0
    %1013 = vmatprep.subr.mxu0 0.0
    %1014 = vmatpush1.msra.mxu0 0.0
    %1015 = vmatprep.subr.mxu0 0.0
    %1016 = vmatpush1.msra.mxu0 0.0
    %1017 = vmatprep.subr.mxu0 0.0
    %1018 = vmatpush1.msra.mxu0 0.0
    %1019 = vmatprep.subr.mxu0 0.0
    %1020 = vmatpush1.msra.mxu0 0.0
    %1021 = vmatprep.subr.mxu0 0.0
    %1022 = vmatpush1.msra.mxu0 0.0
    %1023 = vmatprep.subr.mxu0 0.0
    %1024 = vmatpush1.msra.mxu0 0.0
    %1025 = vmatprep.subr.mxu0 0.0
    %1026 = vmatpush1.msra.mxu0 0.0
    %1027 = vmatprep.subr.mxu0 0.0
    %1028 = vmatpush1.msra.mxu0 0.0
    %1029 = vmatprep.subr.mxu0 0.0
    %1030 = vmatpush1.msra.mxu0 0.0
    %1031 = vmatprep.subr.mxu0 0.0
    %1032 = vmatpush1.msra.mxu0 0.0
    %1033 = vmatprep.subr.mxu0 0.0
    %1034 = vmatpush1.msra.mxu0 0.0
    %1035 = vmatprep.subr.mxu0 0.0
    %1036 = vmatpush1.msra.mxu0 0.0
    %1037 = vmatprep.subr.mxu0 0.0
    %1038 = vmatpush1.msra.mxu0 0.0
    %1039 = vmatprep.subr.mxu0 0.0
    %1040 = vmatpush1.msra.mxu0 0.0
    %1041 = vmatprep.subr.mxu0 0.0
    %1042 = vmatpush1.msra.mxu0 0.0
    %1043 = vmatprep.subr.mxu0 0.0
    %1044 = vmatpush1.msra.mxu0 0.0
    %1045 = vmatprep.subr.mxu0 0.0
    %1046 = vmatpush1.msra.mxu0 0.0
    %1047 = vmatprep.subr.mxu0 0.0
    %1048 = vmatpush1.msra.mxu0 0.0
    %1049 = vmatprep.subr.mxu0 0.0
    %1050 = vmatpush1.msra.mxu0 0.0
    %1051 = vmatprep.subr.mxu0 0.0
    %1052 = vmatpush1.msra.mxu0 0.0
    %1053 = vmatprep.subr.mxu0 0.0
    %1054 = vmatpush1.msra.mxu0 0.0
    %1055 = vmatprep.subr.mxu0 0.0
    %1056 = vmatpush1.msra.mxu0 0.0
    %1057 = vmatprep.mubr.f32.mxu0 0.0
    %1058 = vmatmul.mubr.f32.gmra.mrb[0].mxu0 %v988
    %v1059 = vpop.f32.mrb[0].mxu0
    %v1060 = vadd.f32 %v985, %v1059
    %v1061 = vpop.f32.mrb[0].mxu0
    %1062 = vmatprep.mubr.f32.mxu0 0.0
    %1063 = vmatmul.mubr.f32.gmra.mrb[0].mxu0 %v991
    %v1064 = vpop.f32.mrb[0].mxu0
    %v1065 = vadd.f32 %v985, %v1064
    %v1066 = vpop.f32.mrb[0].mxu0
    %1067 = vdwg.mxu0
    %v1068 = vmul.f32 %v1060, %v1060
    %v1069 = vmul.f32 %v1065, %v1065
    %v1070 = vmul.f32 %v1060, %v1068
    %v1071 = vmul.f32 %v1065, %v1069
    %v1072 = vmul.f32 %v1070, 0.044715
    %v1073 = vmul.f32 %v1071, 0.044715
    %v1074 = vadd.f32 %v1060, %v1072
    %v1075 = vadd.f32 %v1065, %v1073
    %v1076 = vmul.f32 %v1074, 0.7978846
    %v1077 = vmul.f32 %v1075, 0.7978846
    %v1078 = vtanh.pop %v1076
    %v1079 = vtanh.pop %v1077
    %v1080 = vadd.f32 %v1078, 1.0
    %v1081 = vadd.f32 %v1079, 1.0
    %v1082 = vmul.f32 %v1080, 0.5
    %v1083 = vmul.f32 %v1081, 0.5
    %v1084 = vmul.f32 %v1060, %v1082
    %v1085 = vmul.f32 %v1065, %v1083
    %v1086 = vlaneseq
    %v1087 = vshrl.u32 %v1086, 7
    %v1088 = vsub.s32 3, %v1087
    %v1089 = vrot.slane %v69, %v1088
    %vm1090 = vcmask 523264
    %v1092 = vsel %vm1090, %v1084, 0
    %v1095 = vsel %vm1090, %v1085, 0
    %1097 = vmatprep.subr.mxu0 0.0
    %1098 = vmatpush1.msra.mxu0 %v61
    %1099 = vmatprep.subr.mxu0 0.0
    %1100 = vmatpush1.msra.mxu0 %v62
    %1101 = vmatprep.subr.mxu0 0.0
    %1102 = vmatpush1.msra.mxu0 %v63
    %1103 = vmatprep.subr.mxu0 0.0
    %1104 = vmatpush1.msra.mxu0 %v64
    %1105 = vmatprep.subr.mxu0 0.0
    %1106 = vmatpush1.msra.mxu0 %v65
    %1107 = vmatprep.subr.mxu0 0.0
    %1108 = vmatpush1.msra.mxu0 %v66
    %1109 = vmatprep.subr.mxu0 0.0
    %1110 = vmatpush1.msra.mxu0 %v67
    %1111 = vmatprep.subr.mxu0 0.0
    %1112 = vmatpush1.msra.mxu0 %v68
    %1113 = vmatprep.subr.mxu0 0.0
    %1114 = vmatpush1.msra.mxu0 0.0
    %1115 = vmatprep.subr.mxu0 0.0
    %1116 = vmatpush1.msra.mxu0 0.0
    %1117 = vmatprep.subr.mxu0 0.0
    %1118 = vmatpush1.msra.mxu0 0.0
    %1119 = vmatprep.subr.mxu0 0.0
    %1120 = vmatpush1.msra.mxu0 0.0
    %1121 = vmatprep.subr.mxu0 0.0
    %1122 = vmatpush1.msra.mxu0 0.0
    %1123 = vmatprep.subr.mxu0 0.0
    %1124 = vmatpush1.msra.mxu0 0.0
    %1125 = vmatprep.subr.mxu0 0.0
    %1126 = vmatpush1.msra.mxu0 0.0
    %1127 = vmatprep.subr.mxu0 0.0
    %1128 = vmatpush1.msra.mxu0 0.0
    %1129 = vmatprep.subr.mxu0 0.0
    %1130 = vmatpush1.msra.mxu0 0.0
    %1131 = vmatprep.subr.mxu0 0.0
    %1132 = vmatpush1.msra.mxu0 0.0
    %1133 = vmatprep.subr.mxu0 0.0
    %1134 = vmatpush1.msra.mxu0 0.0
    %1135 = vmatprep.subr.mxu0 0.0
    %1136 = vmatpush1.msra.mxu0 0.0
    %1137 = vmatprep.subr.mxu0 0.0
    %1138 = vmatpush1.msra.mxu0 0.0
    %1139 = vmatprep.subr.mxu0 0.0
    %1140 = vmatpush1.msra.mxu0 0.0
    %1141 = vmatprep.subr.mxu0 0.0
    %1142 = vmatpush1.msra.mxu0 0.0
    %1143 = vmatprep.subr.mxu0 0.0
    %1144 = vmatpush1.msra.mxu0 0.0
    %1145 = vmatprep.subr.mxu0 0.0
    %1146 = vmatpush1.msra.mxu0 0.0
    %1147 = vmatprep.subr.mxu0 0.0
    %1148 = vmatpush1.msra.mxu0 0.0
    %1149 = vmatprep.subr.mxu0 0.0
    %1150 = vmatpush1.msra.mxu0 0.0
    %1151 = vmatprep.subr.mxu0 0.0
    %1152 = vmatpush1.msra.mxu0 0.0
    %1153 = vmatprep.subr.mxu0 0.0
    %1154 = vmatpush1.msra.mxu0 0.0
    %1155 = vmatprep.subr.mxu0 0.0
    %1156 = vmatpush1.msra.mxu0 0.0
    %1157 = vmatprep.subr.mxu0 0.0
    %1158 = vmatpush1.msra.mxu0 0.0
    %1159 = vmatprep.subr.mxu0 0.0
    %1160 = vmatpush1.msra.mxu0 0.0
    %1161 = vmatprep.mubr.f32.mxu0 0.0
    %1162 = vmatmul.mubr.f32.gmra.mrb[0].mxu0 %v1092
    %v1163 = vpop.f32.mrb[0].mxu0
    %v1164 = vadd.f32 %v1089, %v1163
    %v1165 = vpop.f32.mrb[0].mxu0
    %1166 = vmatprep.mubr.f32.mxu0 0.0
    %1167 = vmatmul.mubr.f32.gmra.mrb[0].mxu0 %v1095
    %v1168 = vpop.f32.mrb[0].mxu0
    %v1169 = vadd.f32 %v1089, %v1168
    %v1170 = vpop.f32.mrb[0].mxu0
    %1171 = vdwg.mxu0
    %v1172 = vadd.f32 %v979, %v1164
    %v1173 = vadd.f32 %v980, %v1169
    %v1174 = vsel %vm76, %v1172, 0.0
    %1175 = vadd.xlane.f32.xlu0 %v1174
    %v1176 = vpop.xlane.xlu0 %1175
    %v1177 = vsel %vm76, %v1173, 0.0
    %1178 = vadd.xlane.f32.xlu0 %v1177
    %v1179 = vpop.xlane.xlu0 %1178
    %v1180 = vmul.f32 %v1176, %v948
    %v1181 = vmul.f32 %v1179, %v948
    %v1182 = vsub.f32 %v1172, %v1180
    %v1183 = vsub.f32 %v1173, %v1181
    %v1184 = vmul.f32 %v1182, %v1182
    %v1185 = vmul.f32 %v1183, %v1183
    %v1186 = vsel %vm76, %v1184, 0.0
    %1187 = vadd.xlane.f32.xlu0 %v1186
    %v1188 = vpop.xlane.xlu0 %1187
    %v1189 = vsel %vm76, %v1185, 0.0
    %1190 = vadd.xlane.f32.xlu0 %v1189
    %v1191 = vpop.xlane.xlu0 %1190
    %v1192 = vmul.f32 %v1188, %v948
    %v1193 = vmul.f32 %v1191, %v948
    %v1194 = vadd.f32 %v1192, 1e-12
    %v1195 = vadd.f32 %v1193, 1e-12
    %v1196 = vrsqrt.pop %v1194
    %v1197 = vrsqrt.pop %v1195
    %v1198 = vmul.f32 %v1182, %v1196
    %v1199 = vmul.f32 %v1183, %v1197
    %v1200 = vlaneseq
    %v1201 = vshrl.u32 %v1200, 7
    %v1202 = vsub.s32 4, %v1201
    %v1203 = vrot.slane %v69, %v1202
    %v1204 = vmul.f32 %v1198, %v1203
    %v1205 = vmul.f32 %v1199, %v1203
    %v1206 = vlaneseq
    %v1207 = vshrl.u32 %v1206, 7
    %v1208 = vsub.s32 5, %v1207
    %v1209 = vrot.slane %v69, %v1208
    %v1210 = vadd.f32 %v1204, %v1209
    %v1211 = vadd.f32 %v1205, %v1209
    %s1212 = scalar_lea.vmem %s2, 32
    %v1213 = vld [vmem:[%s1212] sm:$0xff]
    %v1214 = vld [vmem:[%s1212 + $0x8] sm:$0xff]
    %v1215 = vld [vmem:[%s1212 + $0x10] sm:$0xff]
    %v1216 = vld [vmem:[%s1212 + $0x18] sm:$0xff]
    %s1217 = scalar_lea.vmem %s3, 1
    %v1218 = vld [vmem:[%s1217] sm:$0x1]
    %s1219 = scalar_lea.vmem %s4, 32
    %v1220 = vld [vmem:[%s1219] sm:$0xff]
    %v1221 = vld [vmem:[%s1219 + $0x8] sm:$0xff]
    %v1222 = vld [vmem:[%s1219 + $0x10] sm:$0xff]
    %v1223 = vld [vmem:[%s1219 + $0x18] sm:$0xff]
    %s1224 = scalar_lea.vmem %s5, 32
    %v1225 = vld [vmem:[%s1224] sm:$0xff]
    %v1226 = vld [vmem:[%s1224 + $0x8] sm:$0xff]
    %v1227 = vld [vmem:[%s1224 + $0x10] sm:$0xff]
    %v1228 = vld [vmem:[%s1224 + $0x18] sm:$0xff]
    %s1229 = scalar_lea.vmem %s6, 1
    %v1230 = vld [vmem:[%s1229] sm:$0x1]
    %s1231 = scalar_lea.vmem %s7, 64
    %v1232 = vld [vmem:[%s1231] sm:$0xff]
    %v1233 = vld [vmem:[%s1231 + $0x8] sm:$0xff]
    %v1234 = vld [vmem:[%s1231 + $0x10] sm:$0xff]
    %v1235 = vld [vmem:[%s1231 + $0x18] sm:$0xff]
    %v1236 = vld [vmem:[%s1231 + $0x20] sm:$0xff]
    %v1237 = vld [vmem:[%s1231 + $0x28] sm:$0xff]
    %v1238 = vld [vmem:[%s1231 + $0x30] sm:$0xff]
    %v1239 = vld [vmem:[%s1231 + $0x38] sm:$0xff]
    %s1240 = scalar_lea.vmem %s8, 8
    %v1241 = vld [vmem:[%s1240] sm:$0x3f]
    %v1243 = vlaneseq
    %v1244 = vshrl.u32 %v1243, 7
    %v1245 = vsub.s32 0, %v1244
    %v1246 = vrot.slane %v1218, %v1245
    %v1249 = vsel %vm76, %v1210, 0
    %v1252 = vsel %vm76, %v1211, 0
    %1254 = vmatprep.subr.mxu0 0.0
    %1255 = vmatpush1.msra.mxu0 %v1213
    %1256 = vmatprep.subr.mxu0 0.0
    %1257 = vmatpush1.msra.mxu0 %v1214
    %1258 = vmatprep.subr.mxu0 0.0
    %1259 = vmatpush1.msra.mxu0 %v1215
    %1260 = vmatprep.subr.mxu0 0.0
    %1261 = vmatpush1.msra.mxu0 %v1216
    %1262 = vmatprep.subr.mxu0 0.0
    %1263 = vmatpush1.msra.mxu0 0.0
    %1264 = vmatprep.subr.mxu0 0.0
    %1265 = vmatpush1.msra.mxu0 0.0
    %1266 = vmatprep.subr.mxu0 0.0
    %1267 = vmatpush1.msra.mxu0 0.0
    %1268 = vmatprep.subr.mxu0 0.0
    %1269 = vmatpush1.msra.mxu0 0.0
    %1270 = vmatprep.subr.mxu0 0.0
    %1271 = vmatpush1.msra.mxu0 0.0
    %1272 = vmatprep.subr.mxu0 0.0
    %1273 = vmatpush1.msra.mxu0 0.0
    %1274 = vmatprep.subr.mxu0 0.0
    %1275 = vmatpush1.msra.mxu0 0.0
    %1276 = vmatprep.subr.mxu0 0.0
    %1277 = vmatpush1.msra.mxu0 0.0
    %1278 = vmatprep.subr.mxu0 0.0
    %1279 = vmatpush1.msra.mxu0 0.0
    %1280 = vmatprep.subr.mxu0 0.0
    %1281 = vmatpush1.msra.mxu0 0.0
    %1282 = vmatprep.subr.mxu0 0.0
    %1283 = vmatpush1.msra.mxu0 0.0
    %1284 = vmatprep.subr.mxu0 0.0
    %1285 = vmatpush1.msra.mxu0 0.0
    %1286 = vmatprep.subr.mxu0 0.0
    %1287 = vmatpush1.msra.mxu0 0.0
    %1288 = vmatprep.subr.mxu0 0.0
    %1289 = vmatpush1.msra.mxu0 0.0
    %1290 = vmatprep.subr.mxu0 0.0
    %1291 = vmatpush1.msra.mxu0 0.0
    %1292 = vmatprep.subr.mxu0 0.0
    %1293 = vmatpush1.msra.mxu0 0.0
    %1294 = vmatprep.subr.mxu0 0.0
    %1295 = vmatpush1.msra.mxu0 0.0
    %1296 = vmatprep.subr.mxu0 0.0
    %1297 = vmatpush1.msra.mxu0 0.0
    %1298 = vmatprep.subr.mxu0 0.0
    %1299 = vmatpush1.msra.mxu0 0.0
    %1300 = vmatprep.subr.mxu0 0.0
    %1301 = vmatpush1.msra.mxu0 0.0
    %1302 = vmatprep.subr.mxu0 0.0
    %1303 = vmatpush1.msra.mxu0 0.0
    %1304 = vmatprep.subr.mxu0 0.0
    %1305 = vmatpush1.msra.mxu0 0.0
    %1306 = vmatprep.subr.mxu0 0.0
    %1307 = vmatpush1.msra.mxu0 0.0
    %1308 = vmatprep.subr.mxu0 0.0
    %1309 = vmatpush1.msra.mxu0 0.0
    %1310 = vmatprep.subr.mxu0 0.0
    %1311 = vmatpush1.msra.mxu0 0.0
    %1312 = vmatprep.subr.mxu0 0.0
    %1313 = vmatpush1.msra.mxu0 0.0
    %1314 = vmatprep.subr.mxu0 0.0
    %1315 = vmatpush1.msra.mxu0 0.0
    %1316 = vmatprep.subr.mxu0 0.0
    %1317 = vmatpush1.msra.mxu0 0.0
    %1318 = vmatprep.mubr.f32.mxu0 0.0
    %1319 = vmatmul.mubr.f32.gmra.mrb[0].mxu0 %v1249
    %v1320 = vpop.f32.mrb[0].mxu0
    %v1321 = vadd.f32 %v1246, %v1320
    %v1322 = vpop.f32.mrb[0].mxu0
    %1323 = vmatprep.mubr.f32.mxu0 0.0
    %1324 = vmatmul.mubr.f32.gmra.mrb[0].mxu0 %v1252
    %v1325 = vpop.f32.mrb[0].mxu0
    %v1326 = vadd.f32 %v1246, %v1325
    %v1327 = vpop.f32.mrb[0].mxu0
    %1328 = vdwg.mxu0
    %1330 = vrot.lane.b32.xlu0 %v1321, 96
    %v1331 = vpop.permute.xlu0 %1330
    %v1332 = vsel %vm162, %v1321, 0
    %v1334 = vsel %vm162, %v1331, 0
    %1336 = vmatprep.subr.mxu0 0.0
    %1337 = vmatpush1.xpose.msra.mxu0 %v1334
    %1338 = vmatprep.subr.mxu0 0.0
    %1339 = vmatpush1.xpose.msra.mxu0 0.0
    %1340 = vmatprep.subr.mxu0 0.0
    %1341 = vmatpush1.xpose.msra.mxu0 0.0
    %1342 = vmatprep.subr.mxu0 0.0
    %1343 = vmatpush1.xpose.msra.mxu0 0.0
    %1344 = vmatprep.subr.mxu0 0.0
    %1345 = vmatpush1.xpose.msra.mxu0 0.0
    %1346 = vmatprep.subr.mxu0 0.0
    %1347 = vmatpush1.xpose.msra.mxu0 0.0
    %1348 = vmatprep.subr.mxu0 0.0
    %1349 = vmatpush1.xpose.msra.mxu0 0.0
    %1350 = vmatprep.subr.mxu0 0.0
    %1351 = vmatpush1.xpose.msra.mxu0 0.0
    %1352 = vmatprep.subr.mxu0 0.0
    %1353 = vmatpush1.xpose.msra.mxu0 0.0
    %1354 = vmatprep.subr.mxu0 0.0
    %1355 = vmatpush1.xpose.msra.mxu0 0.0
    %1356 = vmatprep.subr.mxu0 0.0
    %1357 = vmatpush1.xpose.msra.mxu0 0.0
    %1358 = vmatprep.subr.mxu0 0.0
    %1359 = vmatpush1.xpose.msra.mxu0 0.0
    %1360 = vmatprep.subr.mxu0 0.0
    %1361 = vmatpush1.xpose.msra.mxu0 0.0
    %1362 = vmatprep.subr.mxu0 0.0
    %1363 = vmatpush1.xpose.msra.mxu0 0.0
    %1364 = vmatprep.subr.mxu0 0.0
    %1365 = vmatpush1.xpose.msra.mxu0 0.0
    %1366 = vmatprep.subr.mxu0 0.0
    %1367 = vmatpush1.xpose.msra.mxu0 0.0
    %1368 = vmatprep.subr.mxu0 0.0
    %1369 = vmatpush1.xpose.msra.mxu0 0.0
    %1370 = vmatprep.subr.mxu0 0.0
    %1371 = vmatpush1.xpose.msra.mxu0 0.0
    %1372 = vmatprep.subr.mxu0 0.0
    %1373 = vmatpush1.xpose.msra.mxu0 0.0
    %1374 = vmatprep.subr.mxu0 0.0
    %1375 = vmatpush1.xpose.msra.mxu0 0.0
    %1376 = vmatprep.subr.mxu0 0.0
    %1377 = vmatpush1.xpose.msra.mxu0 0.0
    %1378 = vmatprep.subr.mxu0 0.0
    %1379 = vmatpush1.xpose.msra.mxu0 0.0
    %1380 = vmatprep.subr.mxu0 0.0
    %1381 = vmatpush1.xpose.msra.mxu0 0.0
    %1382 = vmatprep.subr.mxu0 0.0
    %1383 = vmatpush1.xpose.msra.mxu0 0.0
    %1384 = vmatprep.subr.mxu0 0.0
    %1385 = vmatpush1.xpose.msra.mxu0 0.0
    %1386 = vmatprep.subr.mxu0 0.0
    %1387 = vmatpush1.xpose.msra.mxu0 0.0
    %1388 = vmatprep.subr.mxu0 0.0
    %1389 = vmatpush1.xpose.msra.mxu0 0.0
    %1390 = vmatprep.subr.mxu0 0.0
    %1391 = vmatpush1.xpose.msra.mxu0 0.0
    %1392 = vmatprep.subr.mxu0 0.0
    %1393 = vmatpush1.xpose.msra.mxu0 0.0
    %1394 = vmatprep.subr.mxu0 0.0
    %1395 = vmatpush1.xpose.msra.mxu0 0.0
    %1396 = vmatprep.subr.mxu0 0.0
    %1397 = vmatpush1.xpose.msra.mxu0 0.0
    %1398 = vmatprep.subr.mxu0 0.0
    %1399 = vmatpush1.xpose.msra.mxu0 0.0
    %1400 = vmatprep.mubr.f32.mxu0 0.0
    %1401 = vmatmul.mubr.f32.gmra.mrb[0].mxu0 %v1332
    %v1402 = vpop.f32.mrb[0].mxu0
    %v1403 = vadd.f32 0.0, %v1402
    %v1404 = vpop.f32.mrb[0].mxu0
    %1405 = vdwg.mxu0
    %v1406 = vmul.f32 %v1403, 0.25
    %v1407 = vsel %vm243, -1e+09, %v1406
    %v1408 = vsel %vm245, %v1407, -inf
    %1409 = vmax.xlane.f32.xlu0 %v1408
    %v1410 = vpop.xlane.xlu0 %1409
    %v1411 = vsub.f32 %v1407, %v1410
    %v1412 = vmul.f32 %v1411, 1.442695
    %v1413 = vpow.pop %v1412
    %v1414 = vsel %vm245, %v1413, 0.0
    %1415 = vadd.xlane.f32.xlu0 %v1414
    %v1416 = vpop.xlane.xlu0 %1415
    %v1417 = vrcp.pop %v1416
    %v1418 = vmul.f32 %v1413, %v1417
    %s1419 = scalar_lea.vmem %s13, 32
    %1420 = vst.msk [vmem:[%s1419] sm:$0xff] %vm245, %v1418
    %1421 = vrot.lane.b32.xlu0 %v1321, 64
    %v1422 = vpop.permute.xlu0 %1421
    %v1425 = vsel %vm245, %v1418, 0
    %1427 = vmatprep.subr.mxu0 0.0
    %1428 = vmatpush1.msra.mxu0 %v1422
    %1429 = vmatprep.subr.mxu0 0.0
    %1430 = vmatpush1.msra.mxu0 0.0
    %1431 = vmatprep.subr.mxu0 0.0
    %1432 = vmatpush1.msra.mxu0 0.0
    %1433 = vmatprep.subr.mxu0 0.0
    %1434 = vmatpush1.msra.mxu0 0.0
    %1435 = vmatprep.subr.mxu0 0.0
    %1436 = vmatpush1.msra.mxu0 0.0
    %1437 = vmatprep.subr.mxu0 0.0
    %1438 = vmatpush1.msra.mxu0 0.0
    %1439 = vmatprep.subr.mxu0 0.0
    %1440 = vmatpush1.msra.mxu0 0.0
    %1441 = vmatprep.subr.mxu0 0.0
    %1442 = vmatpush1.msra.mxu0 0.0
    %1443 = vmatprep.subr.mxu0 0.0
    %1444 = vmatpush1.msra.mxu0 0.0
    %1445 = vmatprep.subr.mxu0 0.0
    %1446 = vmatpush1.msra.mxu0 0.0
    %1447 = vmatprep.subr.mxu0 0.0
    %1448 = vmatpush1.msra.mxu0 0.0
    %1449 = vmatprep.subr.mxu0 0.0
    %1450 = vmatpush1.msra.mxu0 0.0
    %1451 = vmatprep.subr.mxu0 0.0
    %1452 = vmatpush1.msra.mxu0 0.0
    %1453 = vmatprep.subr.mxu0 0.0
    %1454 = vmatpush1.msra.mxu0 0.0
    %1455 = vmatprep.subr.mxu0 0.0
    %1456 = vmatpush1.msra.mxu0 0.0
    %1457 = vmatprep.subr.mxu0 0.0
    %1458 = vmatpush1.msra.mxu0 0.0
    %1459 = vmatprep.subr.mxu0 0.0
    %1460 = vmatpush1.msra.mxu0 0.0
    %1461 = vmatprep.subr.mxu0 0.0
    %1462 = vmatpush1.msra.mxu0 0.0
    %1463 = vmatprep.subr.mxu0 0.0
    %1464 = vmatpush1.msra.mxu0 0.0
    %1465 = vmatprep.subr.mxu0 0.0
    %1466 = vmatpush1.msra.mxu0 0.0
    %1467 = vmatprep.subr.mxu0 0.0
    %1468 = vmatpush1.msra.mxu0 0.0
    %1469 = vmatprep.subr.mxu0 0.0
    %1470 = vmatpush1.msra.mxu0 0.0
    %1471 = vmatprep.subr.mxu0 0.0
    %1472 = vmatpush1.msra.mxu0 0.0
    %1473 = vmatprep.subr.mxu0 0.0
    %1474 = vmatpush1.msra.mxu0 0.0
    %1475 = vmatprep.subr.mxu0 0.0
    %1476 = vmatpush1.msra.mxu0 0.0
    %1477 = vmatprep.subr.mxu0 0.0
    %1478 = vmatpush1.msra.mxu0 0.0
    %1479 = vmatprep.subr.mxu0 0.0
    %1480 = vmatpush1.msra.mxu0 0.0
    %1481 = vmatprep.subr.mxu0 0.0
    %1482 = vmatpush1.msra.mxu0 0.0
    %1483 = vmatprep.subr.mxu0 0.0
    %1484 = vmatpush1.msra.mxu0 0.0
    %1485 = vmatprep.subr.mxu0 0.0
    %1486 = vmatpush1.msra.mxu0 0.0
    %1487 = vmatprep.subr.mxu0 0.0
    %1488 = vmatpush1.msra.mxu0 0.0
    %1489 = vmatprep.subr.mxu0 0.0
    %1490 = vmatpush1.msra.mxu0 0.0
    %1491 = vmatprep.mubr.f32.mxu0 0.0
    %1492 = vmatmul.mubr.f32.gmra.mrb[0].mxu0 %v1425
    %v1493 = vpop.f32.mrb[0].mxu0
    %v1494 = vadd.f32 0.0, %v1493
    %v1495 = vpop.f32.mrb[0].mxu0
    %1496 = vdwg.mxu0
    %1497 = vrot.lane.b32.xlu0 %v1321, 112
    %v1498 = vpop.permute.xlu0 %1497
    %1499 = vrot.lane.b32.xlu0 %v1321, 80
    %v1500 = vpop.permute.xlu0 %1499
    %v1501 = vsel %vm162, %v1498, 0
    %v1503 = vsel %vm162, %v1500, 0
    %1505 = vmatprep.subr.mxu0 0.0
    %1506 = vmatpush1.xpose.msra.mxu0 %v1503
    %1507 = vmatprep.subr.mxu0 0.0
    %1508 = vmatpush1.xpose.msra.mxu0 0.0
    %1509 = vmatprep.subr.mxu0 0.0
    %1510 = vmatpush1.xpose.msra.mxu0 0.0
    %1511 = vmatprep.subr.mxu0 0.0
    %1512 = vmatpush1.xpose.msra.mxu0 0.0
    %1513 = vmatprep.subr.mxu0 0.0
    %1514 = vmatpush1.xpose.msra.mxu0 0.0
    %1515 = vmatprep.subr.mxu0 0.0
    %1516 = vmatpush1.xpose.msra.mxu0 0.0
    %1517 = vmatprep.subr.mxu0 0.0
    %1518 = vmatpush1.xpose.msra.mxu0 0.0
    %1519 = vmatprep.subr.mxu0 0.0
    %1520 = vmatpush1.xpose.msra.mxu0 0.0
    %1521 = vmatprep.subr.mxu0 0.0
    %1522 = vmatpush1.xpose.msra.mxu0 0.0
    %1523 = vmatprep.subr.mxu0 0.0
    %1524 = vmatpush1.xpose.msra.mxu0 0.0
    %1525 = vmatprep.subr.mxu0 0.0
    %1526 = vmatpush1.xpose.msra.mxu0 0.0
    %1527 = vmatprep.subr.mxu0 0.0
    %1528 = vmatpush1.xpose.msra.mxu0 0.0
    %1529 = vmatprep.subr.mxu0 0.0
    %1530 = vmatpush1.xpose.msra.mxu0 0.0
    %1531 = vmatprep.subr.mxu0 0.0
    %1532 = vmatpush1.xpose.msra.mxu0 0.0
    %1533 = vmatprep.subr.mxu0 0.0
    %1534 = vmatpush1.xpose.msra.mxu0 0.0
    %1535 = vmatprep.subr.mxu0 0.0
    %1536 = vmatpush1.xpose.msra.mxu0 0.0
    %1537 = vmatprep.subr.mxu0 0.0
    %1538 = vmatpush1.xpose.msra.mxu0 0.0
    %1539 = vmatprep.subr.mxu0 0.0
    %1540 = vmatpush1.xpose.msra.mxu0 0.0
    %1541 = vmatprep.subr.mxu0 0.0
    %1542 = vmatpush1.xpose.msra.mxu0 0.0
    %1543 = vmatprep.subr.mxu0 0.0
    %1544 = vmatpush1.xpose.msra.mxu0 0.0
    %1545 = vmatprep.subr.mxu0 0.0
    %1546 = vmatpush1.xpose.msra.mxu0 0.0
    %1547 = vmatprep.subr.mxu0 0.0
    %1548 = vmatpush1.xpose.msra.mxu0 0.0
    %1549 = vmatprep.subr.mxu0 0.0
    %1550 = vmatpush1.xpose.msra.mxu0 0.0
    %1551 = vmatprep.subr.mxu0 0.0
    %1552 = vmatpush1.xpose.msra.mxu0 0.0
    %1553 = vmatprep.subr.mxu0 0.0
    %1554 = vmatpush1.xpose.msra.mxu0 0.0
    %1555 = vmatprep.subr.mxu0 0.0
    %1556 = vmatpush1.xpose.msra.mxu0 0.0
    %1557 = vmatprep.subr.mxu0 0.0
    %1558 = vmatpush1.xpose.msra.mxu0 0.0
    %1559 = vmatprep.subr.mxu0 0.0
    %1560 = vmatpush1.xpose.msra.mxu0 0.0
    %1561 = vmatprep.subr.mxu0 0.0
    %1562 = vmatpush1.xpose.msra.mxu0 0.0
    %1563 = vmatprep.subr.mxu0 0.0
    %1564 = vmatpush1.xpose.msra.mxu0 0.0
    %1565 = vmatprep.subr.mxu0 0.0
    %1566 = vmatpush1.xpose.msra.mxu0 0.0
    %1567 = vmatprep.subr.mxu0 0.0
    %1568 = vmatpush1.xpose.msra.mxu0 0.0
    %1569 = vmatprep.mubr.f32.mxu0 0.0
    %1570 = vmatmul.mubr.f32.gmra.mrb[0].mxu0 %v1501
    %v1571 = vpop.f32.mrb[0].mxu0
    %v1572 = vadd.f32 0.0, %v1571
    %v1573 = vpop.f32.mrb[0].mxu0
    %1574 = vdwg.mxu0
    %v1575 = vmul.f32 %v1572, 0.25
    %v1576 = vsel %vm243, -1e+09, %v1575
    %v1577 = vsel %vm245, %v1576, -inf
    %1578 = vmax.xlane.f32.xlu0 %v1577
    %v1579 = vpop.xlane.xlu0 %1578
    %v1580 = vsub.f32 %v1576, %v1579
    %v1581 = vmul.f32 %v1580, 1.442695
    %v1582 = vpow.pop %v1581
    %v1583 = vsel %vm245, %v1582, 0.0
    %1584 = vadd.xlane.f32.xlu0 %v1583
    %v1585 = vpop.xlane.xlu0 %1584
    %v1586 = vrcp.pop %v1585
    %v1587 = vmul.f32 %v1582, %v1586
    %s1588 = scalar_lea.vmem %s13, 40
    %1589 = vst.msk [vmem:[%s1588] sm:$0xff] %vm245, %v1587
    %1590 = vrot.lane.b32.xlu0 %v1321, 48
    %v1591 = vpop.permute.xlu0 %1590
    %v1594 = vsel %vm245, %v1587, 0
    %1596 = vmatprep.subr.mxu0 0.0
    %1597 = vmatpush1.msra.mxu0 %v1591
    %1598 = vmatprep.subr.mxu0 0.0
    %1599 = vmatpush1.msra.mxu0 0.0
    %1600 = vmatprep.subr.mxu0 0.0
    %1601 = vmatpush1.msra.mxu0 0.0
    %1602 = vmatprep.subr.mxu0 0.0
    %1603 = vmatpush1.msra.mxu0 0.0
    %1604 = vmatprep.subr.mxu0 0.0
    %1605 = vmatpush1.msra.mxu0 0.0
    %1606 = vmatprep.subr.mxu0 0.0
    %1607 = vmatpush1.msra.mxu0 0.0
    %1608 = vmatprep.subr.mxu0 0.0
    %1609 = vmatpush1.msra.mxu0 0.0
    %1610 = vmatprep.subr.mxu0 0.0
    %1611 = vmatpush1.msra.mxu0 0.0
    %1612 = vmatprep.subr.mxu0 0.0
    %1613 = vmatpush1.msra.mxu0 0.0
    %1614 = vmatprep.subr.mxu0 0.0
    %1615 = vmatpush1.msra.mxu0 0.0
    %1616 = vmatprep.subr.mxu0 0.0
    %1617 = vmatpush1.msra.mxu0 0.0
    %1618 = vmatprep.subr.mxu0 0.0
    %1619 = vmatpush1.msra.mxu0 0.0
    %1620 = vmatprep.subr.mxu0 0.0
    %1621 = vmatpush1.msra.mxu0 0.0
    %1622 = vmatprep.subr.mxu0 0.0
    %1623 = vmatpush1.msra.mxu0 0.0
    %1624 = vmatprep.subr.mxu0 0.0
    %1625 = vmatpush1.msra.mxu0 0.0
    %1626 = vmatprep.subr.mxu0 0.0
    %1627 = vmatpush1.msra.mxu0 0.0
    %1628 = vmatprep.subr.mxu0 0.0
    %1629 = vmatpush1.msra.mxu0 0.0
    %1630 = vmatprep.subr.mxu0 0.0
    %1631 = vmatpush1.msra.mxu0 0.0
    %1632 = vmatprep.subr.mxu0 0.0
    %1633 = vmatpush1.msra.mxu0 0.0
    %1634 = vmatprep.subr.mxu0 0.0
    %1635 = vmatpush1.msra.mxu0 0.0
    %1636 = vmatprep.subr.mxu0 0.0
    %1637 = vmatpush1.msra.mxu0 0.0
    %1638 = vmatprep.subr.mxu0 0.0
    %1639 = vmatpush1.msra.mxu0 0.0
    %1640 = vmatprep.subr.mxu0 0.0
    %1641 = vmatpush1.msra.mxu0 0.0
    %1642 = vmatprep.subr.mxu0 0.0
    %1643 = vmatpush1.msra.mxu0 0.0
    %1644 = vmatprep.subr.mxu0 0.0
    %1645 = vmatpush1.msra.mxu0 0.0
    %1646 = vmatprep.subr.mxu0 0.0
    %1647 = vmatpush1.msra.mxu0 0.0
    %1648 = vmatprep.subr.mxu0 0.0
    %1649 = vmatpush1.msra.mxu0 0.0
    %1650 = vmatprep.subr.mxu0 0.0
    %1651 = vmatpush1.msra.mxu0 0.0
    %1652 = vmatprep.subr.mxu0 0.0
    %1653 = vmatpush1.msra.mxu0 0.0
    %1654 = vmatprep.subr.mxu0 0.0
    %1655 = vmatpush1.msra.mxu0 0.0
    %1656 = vmatprep.subr.mxu0 0.0
    %1657 = vmatpush1.msra.mxu0 0.0
    %1658 = vmatprep.subr.mxu0 0.0
    %1659 = vmatpush1.msra.mxu0 0.0
    %1660 = vmatprep.mubr.f32.mxu0 0.0
    %1661 = vmatmul.mubr.f32.gmra.mrb[0].mxu0 %v1594
    %v1662 = vpop.f32.mrb[0].mxu0
    %v1663 = vadd.f32 0.0, %v1662
    %v1664 = vpop.f32.mrb[0].mxu0
    %1665 = vdwg.mxu0
    %1667 = vrot.lane.b32.xlu0 %v1663, 16
    %v1668 = vpop.permute.xlu0 %1667
    %v1670 = vsel %vm162, %v1494, %v1668
    %1672 = vrot.lane.b32.xlu0 %v1326, 96
    %v1673 = vpop.permute.xlu0 %1672
    %v1674 = vsel %vm162, %v1326, 0
    %v1676 = vsel %vm162, %v1673, 0
    %1678 = vmatprep.subr.mxu0 0.0
    %1679 = vmatpush1.xpose.msra.mxu0 %v1676
    %1680 = vmatprep.subr.mxu0 0.0
    %1681 = vmatpush1.xpose.msra.mxu0 0.0
    %1682 = vmatprep.subr.mxu0 0.0
    %1683 = vmatpush1.xpose.msra.mxu0 0.0
    %1684 = vmatprep.subr.mxu0 0.0
    %1685 = vmatpush1.xpose.msra.mxu0 0.0
    %1686 = vmatprep.subr.mxu0 0.0
    %1687 = vmatpush1.xpose.msra.mxu0 0.0
    %1688 = vmatprep.subr.mxu0 0.0
    %1689 = vmatpush1.xpose.msra.mxu0 0.0
    %1690 = vmatprep.subr.mxu0 0.0
    %1691 = vmatpush1.xpose.msra.mxu0 0.0
    %1692 = vmatprep.subr.mxu0 0.0
    %1693 = vmatpush1.xpose.msra.mxu0 0.0
    %1694 = vmatprep.subr.mxu0 0.0
    %1695 = vmatpush1.xpose.msra.mxu0 0.0
    %1696 = vmatprep.subr.mxu0 0.0
    %1697 = vmatpush1.xpose.msra.mxu0 0.0
    %1698 = vmatprep.subr.mxu0 0.0
    %1699 = vmatpush1.xpose.msra.mxu0 0.0
    %1700 = vmatprep.subr.mxu0 0.0
    %1701 = vmatpush1.xpose.msra.mxu0 0.0
    %1702 = vmatprep.subr.mxu0 0.0
    %1703 = vmatpush1.xpose.msra.mxu0 0.0
    %1704 = vmatprep.subr.mxu0 0.0
    %1705 = vmatpush1.xpose.msra.mxu0 0.0
    %1706 = vmatprep.subr.mxu0 0.0
    %1707 = vmatpush1.xpose.msra.mxu0 0.0
    %1708 = vmatprep.subr.mxu0 0.0
    %1709 = vmatpush1.xpose.msra.mxu0 0.0
    %1710 = vmatprep.subr.mxu0 0.0
    %1711 = vmatpush1.xpose.msra.mxu0 0.0
    %1712 = vmatprep.subr.mxu0 0.0
    %1713 = vmatpush1.xpose.msra.mxu0 0.0
    %1714 = vmatprep.subr.mxu0 0.0
    %1715 = vmatpush1.xpose.msra.mxu0 0.0
    %1716 = vmatprep.subr.mxu0 0.0
    %1717 = vmatpush1.xpose.msra.mxu0 0.0
    %1718 = vmatprep.subr.mxu0 0.0
    %1719 = vmatpush1.xpose.msra.mxu0 0.0
    %1720 = vmatprep.subr.mxu0 0.0
    %1721 = vmatpush1.xpose.msra.mxu0 0.0
    %1722 = vmatprep.subr.mxu0 0.0
    %1723 = vmatpush1.xpose.msra.mxu0 0.0
    %1724 = vmatprep.subr.mxu0 0.0
    %1725 = vmatpush1.xpose.msra.mxu0 0.0
    %1726 = vmatprep.subr.mxu0 0.0
    %1727 = vmatpush1.xpose.msra.mxu0 0.0
    %1728 = vmatprep.subr.mxu0 0.0
    %1729 = vmatpush1.xpose.msra.mxu0 0.0
    %1730 = vmatprep.subr.mxu0 0.0
    %1731 = vmatpush1.xpose.msra.mxu0 0.0
    %1732 = vmatprep.subr.mxu0 0.0
    %1733 = vmatpush1.xpose.msra.mxu0 0.0
    %1734 = vmatprep.subr.mxu0 0.0
    %1735 = vmatpush1.xpose.msra.mxu0 0.0
    %1736 = vmatprep.subr.mxu0 0.0
    %1737 = vmatpush1.xpose.msra.mxu0 0.0
    %1738 = vmatprep.subr.mxu0 0.0
    %1739 = vmatpush1.xpose.msra.mxu0 0.0
    %1740 = vmatprep.subr.mxu0 0.0
    %1741 = vmatpush1.xpose.msra.mxu0 0.0
    %1742 = vmatprep.mubr.f32.mxu0 0.0
    %1743 = vmatmul.mubr.f32.gmra.mrb[0].mxu0 %v1674
    %v1744 = vpop.f32.mrb[0].mxu0
    %v1745 = vadd.f32 0.0, %v1744
    %v1746 = vpop.f32.mrb[0].mxu0
    %1747 = vdwg.mxu0
    %v1748 = vmul.f32 %v1745, 0.25
    %v1749 = vsel %vm590, -1e+09, %v1748
    %v1750 = vsel %vm245, %v1749, -inf
    %1751 = vmax.xlane.f32.xlu0 %v1750
    %v1752 = vpop.xlane.xlu0 %1751
    %v1753 = vsub.f32 %v1749, %v1752
    %v1754 = vmul.f32 %v1753, 1.442695
    %v1755 = vpow.pop %v1754
    %v1756 = vsel %vm245, %v1755, 0.0
    %1757 = vadd.xlane.f32.xlu0 %v1756
    %v1758 = vpop.xlane.xlu0 %1757
    %v1759 = vrcp.pop %v1758
    %v1760 = vmul.f32 %v1755, %v1759
    %s1761 = scalar_lea.vmem %s13, 48
    %1762 = vst.msk [vmem:[%s1761] sm:$0xff] %vm245, %v1760
    %1763 = vrot.lane.b32.xlu0 %v1326, 64
    %v1764 = vpop.permute.xlu0 %1763
    %v1767 = vsel %vm245, %v1760, 0
    %1769 = vmatprep.subr.mxu0 0.0
    %1770 = vmatpush1.msra.mxu0 %v1764
    %1771 = vmatprep.subr.mxu0 0.0
    %1772 = vmatpush1.msra.mxu0 0.0
    %1773 = vmatprep.subr.mxu0 0.0
    %1774 = vmatpush1.msra.mxu0 0.0
    %1775 = vmatprep.subr.mxu0 0.0
    %1776 = vmatpush1.msra.mxu0 0.0
    %1777 = vmatprep.subr.mxu0 0.0
    %1778 = vmatpush1.msra.mxu0 0.0
    %1779 = vmatprep.subr.mxu0 0.0
    %1780 = vmatpush1.msra.mxu0 0.0
    %1781 = vmatprep.subr.mxu0 0.0
    %1782 = vmatpush1.msra.mxu0 0.0
    %1783 = vmatprep.subr.mxu0 0.0
    %1784 = vmatpush1.msra.mxu0 0.0
    %1785 = vmatprep.subr.mxu0 0.0
    %1786 = vmatpush1.msra.mxu0 0.0
    %1787 = vmatprep.subr.mxu0 0.0
    %1788 = vmatpush1.msra.mxu0 0.0
    %1789 = vmatprep.subr.mxu0 0.0
    %1790 = vmatpush1.msra.mxu0 0.0
    %1791 = vmatprep.subr.mxu0 0.0
    %1792 = vmatpush1.msra.mxu0 0.0
    %1793 = vmatprep.subr.mxu0 0.0
    %1794 = vmatpush1.msra.mxu0 0.0
    %1795 = vmatprep.subr.mxu0 0.0
    %1796 = vmatpush1.msra.mxu0 0.0
    %1797 = vmatprep.subr.mxu0 0.0
    %1798 = vmatpush1.msra.mxu0 0.0
    %1799 = vmatprep.subr.mxu0 0.0
    %1800 = vmatpush1.msra.mxu0 0.0
    %1801 = vmatprep.subr.mxu0 0.0
    %1802 = vmatpush1.msra.mxu0 0.0
    %1803 = vmatprep.subr.mxu0 0.0
    %1804 = vmatpush1.msra.mxu0 0.0
    %1805 = vmatprep.subr.mxu0 0.0
    %1806 = vmatpush1.msra.mxu0 0.0
    %1807 = vmatprep.subr.mxu0 0.0
    %1808 = vmatpush1.msra.mxu0 0.0
    %1809 = vmatprep.subr.mxu0 0.0
    %1810 = vmatpush1.msra.mxu0 0.0
    %1811 = vmatprep.subr.mxu0 0.0
    %1812 = vmatpush1.msra.mxu0 0.0
    %1813 = vmatprep.subr.mxu0 0.0
    %1814 = vmatpush1.msra.mxu0 0.0
    %1815 = vmatprep.subr.mxu0 0.0
    %1816 = vmatpush1.msra.mxu0 0.0
    %1817 = vmatprep.subr.mxu0 0.0
    %1818 = vmatpush1.msra.mxu0 0.0
    %1819 = vmatprep.subr.mxu0 0.0
    %1820 = vmatpush1.msra.mxu0 0.0
    %1821 = vmatprep.subr.mxu0 0.0
    %1822 = vmatpush1.msra.mxu0 0.0
    %1823 = vmatprep.subr.mxu0 0.0
    %1824 = vmatpush1.msra.mxu0 0.0
    %1825 = vmatprep.subr.mxu0 0.0
    %1826 = vmatpush1.msra.mxu0 0.0
    %1827 = vmatprep.subr.mxu0 0.0
    %1828 = vmatpush1.msra.mxu0 0.0
    %1829 = vmatprep.subr.mxu0 0.0
    %1830 = vmatpush1.msra.mxu0 0.0
    %1831 = vmatprep.subr.mxu0 0.0
    %1832 = vmatpush1.msra.mxu0 0.0
    %1833 = vmatprep.mubr.f32.mxu0 0.0
    %1834 = vmatmul.mubr.f32.gmra.mrb[0].mxu0 %v1767
    %v1835 = vpop.f32.mrb[0].mxu0
    %v1836 = vadd.f32 0.0, %v1835
    %v1837 = vpop.f32.mrb[0].mxu0
    %1838 = vdwg.mxu0
    %1839 = vrot.lane.b32.xlu0 %v1326, 112
    %v1840 = vpop.permute.xlu0 %1839
    %1841 = vrot.lane.b32.xlu0 %v1326, 80
    %v1842 = vpop.permute.xlu0 %1841
    %v1843 = vsel %vm162, %v1840, 0
    %v1845 = vsel %vm162, %v1842, 0
    %1847 = vmatprep.subr.mxu0 0.0
    %1848 = vmatpush1.xpose.msra.mxu0 %v1845
    %1849 = vmatprep.subr.mxu0 0.0
    %1850 = vmatpush1.xpose.msra.mxu0 0.0
    %1851 = vmatprep.subr.mxu0 0.0
    %1852 = vmatpush1.xpose.msra.mxu0 0.0
    %1853 = vmatprep.subr.mxu0 0.0
    %1854 = vmatpush1.xpose.msra.mxu0 0.0
    %1855 = vmatprep.subr.mxu0 0.0
    %1856 = vmatpush1.xpose.msra.mxu0 0.0
    %1857 = vmatprep.subr.mxu0 0.0
    %1858 = vmatpush1.xpose.msra.mxu0 0.0
    %1859 = vmatprep.subr.mxu0 0.0
    %1860 = vmatpush1.xpose.msra.mxu0 0.0
    %1861 = vmatprep.subr.mxu0 0.0
    %1862 = vmatpush1.xpose.msra.mxu0 0.0
    %1863 = vmatprep.subr.mxu0 0.0
    %1864 = vmatpush1.xpose.msra.mxu0 0.0
    %1865 = vmatprep.subr.mxu0 0.0
    %1866 = vmatpush1.xpose.msra.mxu0 0.0
    %1867 = vmatprep.subr.mxu0 0.0
    %1868 = vmatpush1.xpose.msra.mxu0 0.0
    %1869 = vmatprep.subr.mxu0 0.0
    %1870 = vmatpush1.xpose.msra.mxu0 0.0
    %1871 = vmatprep.subr.mxu0 0.0
    %1872 = vmatpush1.xpose.msra.mxu0 0.0
    %1873 = vmatprep.subr.mxu0 0.0
    %1874 = vmatpush1.xpose.msra.mxu0 0.0
    %1875 = vmatprep.subr.mxu0 0.0
    %1876 = vmatpush1.xpose.msra.mxu0 0.0
    %1877 = vmatprep.subr.mxu0 0.0
    %1878 = vmatpush1.xpose.msra.mxu0 0.0
    %1879 = vmatprep.subr.mxu0 0.0
    %1880 = vmatpush1.xpose.msra.mxu0 0.0
    %1881 = vmatprep.subr.mxu0 0.0
    %1882 = vmatpush1.xpose.msra.mxu0 0.0
    %1883 = vmatprep.subr.mxu0 0.0
    %1884 = vmatpush1.xpose.msra.mxu0 0.0
    %1885 = vmatprep.subr.mxu0 0.0
    %1886 = vmatpush1.xpose.msra.mxu0 0.0
    %1887 = vmatprep.subr.mxu0 0.0
    %1888 = vmatpush1.xpose.msra.mxu0 0.0
    %1889 = vmatprep.subr.mxu0 0.0
    %1890 = vmatpush1.xpose.msra.mxu0 0.0
    %1891 = vmatprep.subr.mxu0 0.0
    %1892 = vmatpush1.xpose.msra.mxu0 0.0
    %1893 = vmatprep.subr.mxu0 0.0
    %1894 = vmatpush1.xpose.msra.mxu0 0.0
    %1895 = vmatprep.subr.mxu0 0.0
    %1896 = vmatpush1.xpose.msra.mxu0 0.0
    %1897 = vmatprep.subr.mxu0 0.0
    %1898 = vmatpush1.xpose.msra.mxu0 0.0
    %1899 = vmatprep.subr.mxu0 0.0
    %1900 = vmatpush1.xpose.msra.mxu0 0.0
    %1901 = vmatprep.subr.mxu0 0.0
    %1902 = vmatpush1.xpose.msra.mxu0 0.0
    %1903 = vmatprep.subr.mxu0 0.0
    %1904 = vmatpush1.xpose.msra.mxu0 0.0
    %1905 = vmatprep.subr.mxu0 0.0
    %1906 = vmatpush1.xpose.msra.mxu0 0.0
    %1907 = vmatprep.subr.mxu0 0.0
    %1908 = vmatpush1.xpose.msra.mxu0 0.0
    %1909 = vmatprep.subr.mxu0 0.0
    %1910 = vmatpush1.xpose.msra.mxu0 0.0
    %1911 = vmatprep.mubr.f32.mxu0 0.0
    %1912 = vmatmul.mubr.f32.gmra.mrb[0].mxu0 %v1843
    %v1913 = vpop.f32.mrb[0].mxu0
    %v1914 = vadd.f32 0.0, %v1913
    %v1915 = vpop.f32.mrb[0].mxu0
    %1916 = vdwg.mxu0
    %v1917 = vmul.f32 %v1914, 0.25
    %v1918 = vsel %vm590, -1e+09, %v1917
    %v1919 = vsel %vm245, %v1918, -inf
    %1920 = vmax.xlane.f32.xlu0 %v1919
    %v1921 = vpop.xlane.xlu0 %1920
    %v1922 = vsub.f32 %v1918, %v1921
    %v1923 = vmul.f32 %v1922, 1.442695
    %v1924 = vpow.pop %v1923
    %v1925 = vsel %vm245, %v1924, 0.0
    %1926 = vadd.xlane.f32.xlu0 %v1925
    %v1927 = vpop.xlane.xlu0 %1926
    %v1928 = vrcp.pop %v1927
    %v1929 = vmul.f32 %v1924, %v1928
    %s1930 = scalar_lea.vmem %s13, 56
    %1931 = vst.msk [vmem:[%s1930] sm:$0xff] %vm245, %v1929
    %1932 = vrot.lane.b32.xlu0 %v1326, 48
    %v1933 = vpop.permute.xlu0 %1932
    %v1936 = vsel %vm245, %v1929, 0
    %1938 = vmatprep.subr.mxu0 0.0
    %1939 = vmatpush1.msra.mxu0 %v1933
    %1940 = vmatprep.subr.mxu0 0.0
    %1941 = vmatpush1.msra.mxu0 0.0
    %1942 = vmatprep.subr.mxu0 0.0
    %1943 = vmatpush1.msra.mxu0 0.0
    %1944 = vmatprep.subr.mxu0 0.0
    %1945 = vmatpush1.msra.mxu0 0.0
    %1946 = vmatprep.subr.mxu0 0.0
    %1947 = vmatpush1.msra.mxu0 0.0
    %1948 = vmatprep.subr.mxu0 0.0
    %1949 = vmatpush1.msra.mxu0 0.0
    %1950 = vmatprep.subr.mxu0 0.0
    %1951 = vmatpush1.msra.mxu0 0.0
    %1952 = vmatprep.subr.mxu0 0.0
    %1953 = vmatpush1.msra.mxu0 0.0
    %1954 = vmatprep.subr.mxu0 0.0
    %1955 = vmatpush1.msra.mxu0 0.0
    %1956 = vmatprep.subr.mxu0 0.0
    %1957 = vmatpush1.msra.mxu0 0.0
    %1958 = vmatprep.subr.mxu0 0.0
    %1959 = vmatpush1.msra.mxu0 0.0
    %1960 = vmatprep.subr.mxu0 0.0
    %1961 = vmatpush1.msra.mxu0 0.0
    %1962 = vmatprep.subr.mxu0 0.0
    %1963 = vmatpush1.msra.mxu0 0.0
    %1964 = vmatprep.subr.mxu0 0.0
    %1965 = vmatpush1.msra.mxu0 0.0
    %1966 = vmatprep.subr.mxu0 0.0
    %1967 = vmatpush1.msra.mxu0 0.0
    %1968 = vmatprep.subr.mxu0 0.0
    %1969 = vmatpush1.msra.mxu0 0.0
    %1970 = vmatprep.subr.mxu0 0.0
    %1971 = vmatpush1.msra.mxu0 0.0
    %1972 = vmatprep.subr.mxu0 0.0
    %1973 = vmatpush1.msra.mxu0 0.0
    %1974 = vmatprep.subr.mxu0 0.0
    %1975 = vmatpush1.msra.mxu0 0.0
    %1976 = vmatprep.subr.mxu0 0.0
    %1977 = vmatpush1.msra.mxu0 0.0
    %1978 = vmatprep.subr.mxu0 0.0
    %1979 = vmatpush1.msra.mxu0 0.0
    %1980 = vmatprep.subr.mxu0 0.0
    %1981 = vmatpush1.msra.mxu0 0.0
    %1982 = vmatprep.subr.mxu0 0.0
    %1983 = vmatpush1.msra.mxu0 0.0
    %1984 = vmatprep.subr.mxu0 0.0
    %1985 = vmatpush1.msra.mxu0 0.0
    %1986 = vmatprep.subr.mxu0 0.0
    %1987 = vmatpush1.msra.mxu0 0.0
    %1988 = vmatprep.subr.mxu0 0.0
    %1989 = vmatpush1.msra.mxu0 0.0
    %1990 = vmatprep.subr.mxu0 0.0
    %1991 = vmatpush1.msra.mxu0 0.0
    %1992 = vmatprep.subr.mxu0 0.0
    %1993 = vmatpush1.msra.mxu0 0.0
    %1994 = vmatprep.subr.mxu0 0.0
    %1995 = vmatpush1.msra.mxu0 0.0
    %1996 = vmatprep.subr.mxu0 0.0
    %1997 = vmatpush1.msra.mxu0 0.0
    %1998 = vmatprep.subr.mxu0 0.0
    %1999 = vmatpush1.msra.mxu0 0.0
    %2000 = vmatprep.subr.mxu0 0.0
    %2001 = vmatpush1.msra.mxu0 0.0
    %2002 = vmatprep.mubr.f32.mxu0 0.0
    %2003 = vmatmul.mubr.f32.gmra.mrb[0].mxu0 %v1936
    %v2004 = vpop.f32.mrb[0].mxu0
    %v2005 = vadd.f32 0.0, %v2004
    %v2006 = vpop.f32.mrb[0].mxu0
    %2007 = vdwg.mxu0
    %2009 = vrot.lane.b32.xlu0 %v2005, 16
    %v2010 = vpop.permute.xlu0 %2009
    %v2012 = vsel %vm162, %v1836, %v2010
    %v2013 = vlaneseq
    %v2014 = vshrl.u32 %v2013, 7
    %v2015 = vsub.s32 0, %v2014
    %v2016 = vrot.slane %v1241, %v2015
    %v2018 = vsel %vm76, %v1670, 0
    %v2021 = vsel %vm76, %v2012, 0
    %2023 = vmatprep.subr.mxu0 0.0
    %2024 = vmatpush1.msra.mxu0 %v1220
    %2025 = vmatprep.subr.mxu0 0.0
    %2026 = vmatpush1.msra.mxu0 %v1221
    %2027 = vmatprep.subr.mxu0 0.0
    %2028 = vmatpush1.msra.mxu0 %v1222
    %2029 = vmatprep.subr.mxu0 0.0
    %2030 = vmatpush1.msra.mxu0 %v1223
    %2031 = vmatprep.subr.mxu0 0.0
    %2032 = vmatpush1.msra.mxu0 0.0
    %2033 = vmatprep.subr.mxu0 0.0
    %2034 = vmatpush1.msra.mxu0 0.0
    %2035 = vmatprep.subr.mxu0 0.0
    %2036 = vmatpush1.msra.mxu0 0.0
    %2037 = vmatprep.subr.mxu0 0.0
    %2038 = vmatpush1.msra.mxu0 0.0
    %2039 = vmatprep.subr.mxu0 0.0
    %2040 = vmatpush1.msra.mxu0 0.0
    %2041 = vmatprep.subr.mxu0 0.0
    %2042 = vmatpush1.msra.mxu0 0.0
    %2043 = vmatprep.subr.mxu0 0.0
    %2044 = vmatpush1.msra.mxu0 0.0
    %2045 = vmatprep.subr.mxu0 0.0
    %2046 = vmatpush1.msra.mxu0 0.0
    %2047 = vmatprep.subr.mxu0 0.0
    %2048 = vmatpush1.msra.mxu0 0.0
    %2049 = vmatprep.subr.mxu0 0.0
    %2050 = vmatpush1.msra.mxu0 0.0
    %2051 = vmatprep.subr.mxu0 0.0
    %2052 = vmatpush1.msra.mxu0 0.0
    %2053 = vmatprep.subr.mxu0 0.0
    %2054 = vmatpush1.msra.mxu0 0.0
    %2055 = vmatprep.subr.mxu0 0.0
    %2056 = vmatpush1.msra.mxu0 0.0
    %2057 = vmatprep.subr.mxu0 0.0
    %2058 = vmatpush1.msra.mxu0 0.0
    %2059 = vmatprep.subr.mxu0 0.0
    %2060 = vmatpush1.msra.mxu0 0.0
    %2061 = vmatprep.subr.mxu0 0.0
    %2062 = vmatpush1.msra.mxu0 0.0
    %2063 = vmatprep.subr.mxu0 0.0
    %2064 = vmatpush1.msra.mxu0 0.0
    %2065 = vmatprep.subr.mxu0 0.0
    %2066 = vmatpush1.msra.mxu0 0.0
    %2067 = vmatprep.subr.mxu0 0.0
    %2068 = vmatpush1.msra.mxu0 0.0
    %2069 = vmatprep.subr.mxu0 0.0
    %2070 = vmatpush1.msra.mxu0 0.0
    %2071 = vmatprep.subr.mxu0 0.0
    %2072 = vmatpush1.msra.mxu0 0.0
    %2073 = vmatprep.subr.mxu0 0.0
    %2074 = vmatpush1.msra.mxu0 0.0
    %2075 = vmatprep.subr.mxu0 0.0
    %2076 = vmatpush1.msra.mxu0 0.0
    %2077 = vmatprep.subr.mxu0 0.0
    %2078 = vmatpush1.msra.mxu0 0.0
    %2079 = vmatprep.subr.mxu0 0.0
    %2080 = vmatpush1.msra.mxu0 0.0
    %2081 = vmatprep.subr.mxu0 0.0
    %2082 = vmatpush1.msra.mxu0 0.0
    %2083 = vmatprep.subr.mxu0 0.0
    %2084 = vmatpush1.msra.mxu0 0.0
    %2085 = vmatprep.subr.mxu0 0.0
    %2086 = vmatpush1.msra.mxu0 0.0
    %2087 = vmatprep.mubr.f32.mxu0 0.0
    %2088 = vmatmul.mubr.f32.gmra.mrb[0].mxu0 %v2018
    %v2089 = vpop.f32.mrb[0].mxu0
    %v2090 = vadd.f32 %v2016, %v2089
    %v2091 = vpop.f32.mrb[0].mxu0
    %2092 = vmatprep.mubr.f32.mxu0 0.0
    %2093 = vmatmul.mubr.f32.gmra.mrb[0].mxu0 %v2021
    %v2094 = vpop.f32.mrb[0].mxu0
    %v2095 = vadd.f32 %v2016, %v2094
    %v2096 = vpop.f32.mrb[0].mxu0
    %2097 = vdwg.mxu0
    %v2098 = vadd.f32 %v1210, %v2090
    %v2099 = vadd.f32 %v1211, %v2095
    %v2100 = vsel %vm76, %v2098, 0.0
    %2101 = vadd.xlane.f32.xlu0 %v2100
    %v2102 = vpop.xlane.xlu0 %2101
    %v2103 = vsel %vm76, %v2099, 0.0
    %2104 = vadd.xlane.f32.xlu0 %v2103
    %v2105 = vpop.xlane.xlu0 %2104
    %v2106 = vmul.f32 %v2102, %v948
    %v2107 = vmul.f32 %v2105, %v948
    %v2108 = vsub.f32 %v2098, %v2106
    %v2109 = vsub.f32 %v2099, %v2107
    %v2110 = vmul.f32 %v2108, %v2108
    %v2111 = vmul.f32 %v2109, %v2109
    %v2112 = vsel %vm76, %v2110, 0.0
    %2113 = vadd.xlane.f32.xlu0 %v2112
    %v2114 = vpop.xlane.xlu0 %2113
    %v2115 = vsel %vm76, %v2111, 0.0
    %2116 = vadd.xlane.f32.xlu0 %v2115
    %v2117 = vpop.xlane.xlu0 %2116
    %v2118 = vmul.f32 %v2114, %v948
    %v2119 = vmul.f32 %v2117, %v948
    %v2120 = vadd.f32 %v2118, 1e-12
    %v2121 = vadd.f32 %v2119, 1e-12
    %v2122 = vrsqrt.pop %v2120
    %v2123 = vrsqrt.pop %v2121
    %v2124 = vmul.f32 %v2108, %v2122
    %v2125 = vmul.f32 %v2109, %v2123
    %v2126 = vlaneseq
    %v2127 = vshrl.u32 %v2126, 7
    %v2128 = vsub.s32 1, %v2127
    %v2129 = vrot.slane %v1241, %v2128
    %v2130 = vmul.f32 %v2124, %v2129
    %v2131 = vmul.f32 %v2125, %v2129
    %v2132 = vlaneseq
    %v2133 = vshrl.u32 %v2132, 7
    %v2134 = vsub.s32 2, %v2133
    %v2135 = vrot.slane %v1241, %v2134
    %v2136 = vadd.f32 %v2130, %v2135
    %v2137 = vadd.f32 %v2131, %v2135
    %v2139 = vlaneseq
    %v2140 = vshrl.u32 %v2139, 7
    %v2141 = vsub.s32 0, %v2140
    %v2142 = vrot.slane %v1230, %v2141
    %v2145 = vsel %vm76, %v2136, 0
    %v2148 = vsel %vm76, %v2137, 0
    %2150 = vmatprep.subr.mxu0 0.0
    %2151 = vmatpush1.msra.mxu0 %v1225
    %2152 = vmatprep.subr.mxu0 0.0
    %2153 = vmatpush1.msra.mxu0 %v1226
    %2154 = vmatprep.subr.mxu0 0.0
    %2155 = vmatpush1.msra.mxu0 %v1227
    %2156 = vmatprep.subr.mxu0 0.0
    %2157 = vmatpush1.msra.mxu0 %v1228
    %2158 = vmatprep.subr.mxu0 0.0
    %2159 = vmatpush1.msra.mxu0 0.0
    %2160 = vmatprep.subr.mxu0 0.0
    %2161 = vmatpush1.msra.mxu0 0.0
    %2162 = vmatprep.subr.mxu0 0.0
    %2163 = vmatpush1.msra.mxu0 0.0
    %2164 = vmatprep.subr.mxu0 0.0
    %2165 = vmatpush1.msra.mxu0 0.0
    %2166 = vmatprep.subr.mxu0 0.0
    %2167 = vmatpush1.msra.mxu0 0.0
    %2168 = vmatprep.subr.mxu0 0.0
    %2169 = vmatpush1.msra.mxu0 0.0
    %2170 = vmatprep.subr.mxu0 0.0
    %2171 = vmatpush1.msra.mxu0 0.0
    %2172 = vmatprep.subr.mxu0 0.0
    %2173 = vmatpush1.msra.mxu0 0.0
    %2174 = vmatprep.subr.mxu0 0.0
    %2175 = vmatpush1.msra.mxu0 0.0
    %2176 = vmatprep.subr.mxu0 0.0
    %2177 = vmatpush1.msra.mxu0 0.0
    %2178 = vmatprep.subr.mxu0 0.0
    %2179 = vmatpush1.msra.mxu0 0.0
    %2180 = vmatprep.subr.mxu0 0.0
    %2181 = vmatpush1.msra.mxu0 0.0
    %2182 = vmatprep.subr.mxu0 0.0
    %2183 = vmatpush1.msra.mxu0 0.0
    %2184 = vmatprep.subr.mxu0 0.0
    %2185 = vmatpush1.msra.mxu0 0.0
    %2186 = vmatprep.subr.mxu0 0.0
    %2187 = vmatpush1.msra.mxu0 0.0
    %2188 = vmatprep.subr.mxu0 0.0
    %2189 = vmatpush1.msra.mxu0 0.0
    %2190 = vmatprep.subr.mxu0 0.0
    %2191 = vmatpush1.msra.mxu0 0.0
    %2192 = vmatprep.subr.mxu0 0.0
    %2193 = vmatpush1.msra.mxu0 0.0
    %2194 = vmatprep.subr.mxu0 0.0
    %2195 = vmatpush1.msra.mxu0 0.0
    %2196 = vmatprep.subr.mxu0 0.0
    %2197 = vmatpush1.msra.mxu0 0.0
    %2198 = vmatprep.subr.mxu0 0.0
    %2199 = vmatpush1.msra.mxu0 0.0
    %2200 = vmatprep.subr.mxu0 0.0
    %2201 = vmatpush1.msra.mxu0 0.0
    %2202 = vmatprep.subr.mxu0 0.0
    %2203 = vmatpush1.msra.mxu0 0.0
    %2204 = vmatprep.subr.mxu0 0.0
    %2205 = vmatpush1.msra.mxu0 0.0
    %2206 = vmatprep.subr.mxu0 0.0
    %2207 = vmatpush1.msra.mxu0 0.0
    %2208 = vmatprep.subr.mxu0 0.0
    %2209 = vmatpush1.msra.mxu0 0.0
    %2210 = vmatprep.subr.mxu0 0.0
    %2211 = vmatpush1.msra.mxu0 0.0
    %2212 = vmatprep.subr.mxu0 0.0
    %2213 = vmatpush1.msra.mxu0 0.0
    %2214 = vmatprep.mubr.f32.mxu0 0.0
    %2215 = vmatmul.mubr.f32.gmra.mrb[0].mxu0 %v2145
    %v2216 = vpop.f32.mrb[0].mxu0
    %v2217 = vadd.f32 %v2142, %v2216
    %v2218 = vpop.f32.mrb[0].mxu0
    %2219 = vmatprep.mubr.f32.mxu0 0.0
    %2220 = vmatmul.mubr.f32.gmra.mrb[0].mxu0 %v2148
    %v2221 = vpop.f32.mrb[0].mxu0
    %v2222 = vadd.f32 %v2142, %v2221
    %v2223 = vpop.f32.mrb[0].mxu0
    %2224 = vdwg.mxu0
    %v2225 = vmul.f32 %v2217, %v2217
    %v2226 = vmul.f32 %v2222, %v2222
    %v2227 = vmul.f32 %v2217, %v2225
    %v2228 = vmul.f32 %v2222, %v2226
    %v2229 = vmul.f32 %v2227, 0.044715
    %v2230 = vmul.f32 %v2228, 0.044715
    %v2231 = vadd.f32 %v2217, %v2229
    %v2232 = vadd.f32 %v2222, %v2230
    %v2233 = vmul.f32 %v2231, 0.7978846
    %v2234 = vmul.f32 %v2232, 0.7978846
    %v2235 = vtanh.pop %v2233
    %v2236 = vtanh.pop %v2234
    %v2237 = vadd.f32 %v2235, 1.0
    %v2238 = vadd.f32 %v2236, 1.0
    %v2239 = vmul.f32 %v2237, 0.5
    %v2240 = vmul.f32 %v2238, 0.5
    %v2241 = vmul.f32 %v2217, %v2239
    %v2242 = vmul.f32 %v2222, %v2240
    %v2243 = vlaneseq
    %v2244 = vshrl.u32 %v2243, 7
    %v2245 = vsub.s32 3, %v2244
    %v2246 = vrot.slane %v1241, %v2245
    %v2248 = vsel %vm1090, %v2241, 0
    %v2251 = vsel %vm1090, %v2242, 0
    %2253 = vmatprep.subr.mxu0 0.0
    %2254 = vmatpush1.msra.mxu0 %v1232
    %2255 = vmatprep.subr.mxu0 0.0
    %2256 = vmatpush1.msra.mxu0 %v1233
    %2257 = vmatprep.subr.mxu0 0.0
    %2258 = vmatpush1.msra.mxu0 %v1234
    %2259 = vmatprep.subr.mxu0 0.0
    %2260 = vmatpush1.msra.mxu0 %v1235
    %2261 = vmatprep.subr.mxu0 0.0
    %2262 = vmatpush1.msra.mxu0 %v1236
    %2263 = vmatprep.subr.mxu0 0.0
    %2264 = vmatpush1.msra.mxu0 %v1237
    %2265 = vmatprep.subr.mxu0 0.0
    %2266 = vmatpush1.msra.mxu0 %v1238
    %2267 = vmatprep.subr.mxu0 0.0
    %2268 = vmatpush1.msra.mxu0 %v1239
    %2269 = vmatprep.subr.mxu0 0.0
    %2270 = vmatpush1.msra.mxu0 0.0
    %2271 = vmatprep.subr.mxu0 0.0
    %2272 = vmatpush1.msra.mxu0 0.0
    %2273 = vmatprep.subr.mxu0 0.0
    %2274 = vmatpush1.msra.mxu0 0.0
    %2275 = vmatprep.subr.mxu0 0.0
    %2276 = vmatpush1.msra.mxu0 0.0
    %2277 = vmatprep.subr.mxu0 0.0
    %2278 = vmatpush1.msra.mxu0 0.0
    %2279 = vmatprep.subr.mxu0 0.0
    %2280 = vmatpush1.msra.mxu0 0.0
    %2281 = vmatprep.subr.mxu0 0.0
    %2282 = vmatpush1.msra.mxu0 0.0
    %2283 = vmatprep.subr.mxu0 0.0
    %2284 = vmatpush1.msra.mxu0 0.0
    %2285 = vmatprep.subr.mxu0 0.0
    %2286 = vmatpush1.msra.mxu0 0.0
    %2287 = vmatprep.subr.mxu0 0.0
    %2288 = vmatpush1.msra.mxu0 0.0
    %2289 = vmatprep.subr.mxu0 0.0
    %2290 = vmatpush1.msra.mxu0 0.0
    %2291 = vmatprep.subr.mxu0 0.0
    %2292 = vmatpush1.msra.mxu0 0.0
    %2293 = vmatprep.subr.mxu0 0.0
    %2294 = vmatpush1.msra.mxu0 0.0
    %2295 = vmatprep.subr.mxu0 0.0
    %2296 = vmatpush1.msra.mxu0 0.0
    %2297 = vmatprep.subr.mxu0 0.0
    %2298 = vmatpush1.msra.mxu0 0.0
    %2299 = vmatprep.subr.mxu0 0.0
    %2300 = vmatpush1.msra.mxu0 0.0
    %2301 = vmatprep.subr.mxu0 0.0
    %2302 = vmatpush1.msra.mxu0 0.0
    %2303 = vmatprep.subr.mxu0 0.0
    %2304 = vmatpush1.msra.mxu0 0.0
    %2305 = vmatprep.subr.mxu0 0.0
    %2306 = vmatpush1.msra.mxu0 0.0
    %2307 = vmatprep.subr.mxu0 0.0
    %2308 = vmatpush1.msra.mxu0 0.0
    %2309 = vmatprep.subr.mxu0 0.0
    %2310 = vmatpush1.msra.mxu0 0.0
    %2311 = vmatprep.subr.mxu0 0.0
    %2312 = vmatpush1.msra.mxu0 0.0
    %2313 = vmatprep.subr.mxu0 0.0
    %2314 = vmatpush1.msra.mxu0 0.0
    %2315 = vmatprep.subr.mxu0 0.0
    %2316 = vmatpush1.msra.mxu0 0.0
    %2317 = vmatprep.mubr.f32.mxu0 0.0
    %2318 = vmatmul.mubr.f32.gmra.mrb[0].mxu0 %v2248
    %v2319 = vpop.f32.mrb[0].mxu0
    %v2320 = vadd.f32 %v2246, %v2319
    %v2321 = vpop.f32.mrb[0].mxu0
    %2322 = vmatprep.mubr.f32.mxu0 0.0
    %2323 = vmatmul.mubr.f32.gmra.mrb[0].mxu0 %v2251
    %v2324 = vpop.f32.mrb[0].mxu0
    %v2325 = vadd.f32 %v2246, %v2324
    %v2326 = vpop.f32.mrb[0].mxu0
    %2327 = vdwg.mxu0
    %v2328 = vadd.f32 %v2136, %v2320
    %v2329 = vadd.f32 %v2137, %v2325
    %v2330 = vsel %vm76, %v2328, 0.0
    %2331 = vadd.xlane.f32.xlu0 %v2330
    %v2332 = vpop.xlane.xlu0 %2331
    %v2333 = vsel %vm76, %v2329, 0.0
    %2334 = vadd.xlane.f32.xlu0 %v2333
    %v2335 = vpop.xlane.xlu0 %2334
    %v2336 = vmul.f32 %v2332, %v948
    %v2337 = vmul.f32 %v2335, %v948
    %v2338 = vsub.f32 %v2328, %v2336
    %v2339 = vsub.f32 %v2329, %v2337
    %v2340 = vmul.f32 %v2338, %v2338
    %v2341 = vmul.f32 %v2339, %v2339
    %v2342 = vsel %vm76, %v2340, 0.0
    %2343 = vadd.xlane.f32.xlu0 %v2342
    %v2344 = vpop.xlane.xlu0 %2343
    %v2345 = vsel %vm76, %v2341, 0.0
    %2346 = vadd.xlane.f32.xlu0 %v2345
    %v2347 = vpop.xlane.xlu0 %2346
    %v2348 = vmul.f32 %v2344, %v948
    %v2349 = vmul.f32 %v2347, %v948
    %v2350 = vadd.f32 %v2348, 1e-12
    %v2351 = vadd.f32 %v2349, 1e-12
    %v2352 = vrsqrt.pop %v2350
    %v2353 = vrsqrt.pop %v2351
    %v2354 = vmul.f32 %v2338, %v2352
    %v2355 = vmul.f32 %v2339, %v2353
    %v2356 = vlaneseq
    %v2357 = vshrl.u32 %v2356, 7
    %v2358 = vsub.s32 4, %v2357
    %v2359 = vrot.slane %v1241, %v2358
    %v2360 = vmul.f32 %v2354, %v2359
    %v2361 = vmul.f32 %v2355, %v2359
    %v2362 = vlaneseq
    %v2363 = vshrl.u32 %v2362, 7
    %v2364 = vsub.s32 5, %v2363
    %v2365 = vrot.slane %v1241, %v2364
    %v2366 = vadd.f32 %v2360, %v2365
    %v2367 = vadd.f32 %v2361, %v2365
    %v2369 = vrot.slane %v2367, 7
    %vm2371 = vcmask 1040384
    %v2372 = vsel %vm2371, %v2366, %v2369
    %v2373 = vld [vmem:[%s9] sm:$0xff]
    %v2374 = vld [vmem:[%s9 + $0x8] sm:$0xff]
    %v2375 = vld [vmem:[%s9 + $0x10] sm:$0xff]
    %v2376 = vld [vmem:[%s9 + $0x18] sm:$0xff]
    %v2377 = vld [vmem:[%s10] sm:$0x1]
    %v2379 = vlaneseq
    %v2380 = vshrl.u32 %v2379, 7
    %v2381 = vsub.s32 0, %v2380
    %v2382 = vrot.slane %v2377, %v2381
    %v2385 = vsel %vm76, %v2372, 0
    %2387 = vmatprep.subr.mxu0 0.0
    %2388 = vmatpush1.msra.mxu0 %v2373
    %2389 = vmatprep.subr.mxu0 0.0
    %2390 = vmatpush1.msra.mxu0 %v2374
    %2391 = vmatprep.subr.mxu0 0.0
    %2392 = vmatpush1.msra.mxu0 %v2375
    %2393 = vmatprep.subr.mxu0 0.0
    %2394 = vmatpush1.msra.mxu0 %v2376
    %2395 = vmatprep.subr.mxu0 0.0
    %2396 = vmatpush1.msra.mxu0 0.0
    %2397 = vmatprep.subr.mxu0 0.0
    %2398 = vmatpush1.msra.mxu0 0.0
    %2399 = vmatprep.subr.mxu0 0.0
    %2400 = vmatpush1.msra.mxu0 0.0
    %2401 = vmatprep.subr.mxu0 0.0
    %2402 = vmatpush1.msra.mxu0 0.0
    %2403 = vmatprep.subr.mxu0 0.0
    %2404 = vmatpush1.msra.mxu0 0.0
    %2405 = vmatprep.subr.mxu0 0.0
    %2406 = vmatpush1.msra.mxu0 0.0
    %2407 = vmatprep.subr.mxu0 0.0
    %2408 = vmatpush1.msra.mxu0 0.0
    %2409 = vmatprep.subr.mxu0 0.0
    %2410 = vmatpush1.msra.mxu0 0.0
    %2411 = vmatprep.subr.mxu0 0.0
    %2412 = vmatpush1.msra.mxu0 0.0
    %2413 = vmatprep.subr.mxu0 0.0
    %2414 = vmatpush1.msra.mxu0 0.0
    %2415 = vmatprep.subr.mxu0 0.0
    %2416 = vmatpush1.msra.mxu0 0.0
    %2417 = vmatprep.subr.mxu0 0.0
    %2418 = vmatpush1.msra.mxu0 0.0
    %2419 = vmatprep.subr.mxu0 0.0
    %2420 = vmatpush1.msra.mxu0 0.0
    %2421 = vmatprep.subr.mxu0 0.0
    %2422 = vmatpush1.msra.mxu0 0.0
    %2423 = vmatprep.subr.mxu0 0.0
    %2424 = vmatpush1.msra.mxu0 0.0
    %2425 = vmatprep.subr.mxu0 0.0
    %2426 = vmatpush1.msra.mxu0 0.0
    %2427 = vmatprep.subr.mxu0 0.0
    %2428 = vmatpush1.msra.mxu0 0.0
    %2429 = vmatprep.subr.mxu0 0.0
    %2430 = vmatpush1.msra.mxu0 0.0
    %2431 = vmatprep.subr.mxu0 0.0
    %2432 = vmatpush1.msra.mxu0 0.0
    %2433 = vmatprep.subr.mxu0 0.0
    %2434 = vmatpush1.msra.mxu0 0.0
    %2435 = vmatprep.subr.mxu0 0.0
    %2436 = vmatpush1.msra.mxu0 0.0
    %2437 = vmatprep.subr.mxu0 0.0
    %2438 = vmatpush1.msra.mxu0 0.0
    %2439 = vmatprep.subr.mxu0 0.0
    %2440 = vmatpush1.msra.mxu0 0.0
    %2441 = vmatprep.subr.mxu0 0.0
    %2442 = vmatpush1.msra.mxu0 0.0
    %2443 = vmatprep.subr.mxu0 0.0
    %2444 = vmatpush1.msra.mxu0 0.0
    %2445 = vmatprep.subr.mxu0 0.0
    %2446 = vmatpush1.msra.mxu0 0.0
    %2447 = vmatprep.subr.mxu0 0.0
    %2448 = vmatpush1.msra.mxu0 0.0
    %2449 = vmatprep.subr.mxu0 0.0
    %2450 = vmatpush1.msra.mxu0 0.0
    %2451 = vmatprep.mubr.f32.mxu0 0.0
    %2452 = vmatmul.mubr.f32.gmra.mrb[0].mxu0 %v2385
    %v2453 = vpop.f32.mrb[0].mxu0
    %v2454 = vadd.f32 %v2382, %v2453
    %v2455 = vpop.f32.mrb[0].mxu0
    %2456 = vdwg.mxu0
    %v2457 = vtanh.pop %v2454
    %v2458 = vld [vmem:[%s11] sm:$0xff]
    %v2459 = vld [vmem:[%s11 + $0x8] sm:$0xff]
    %v2460 = vld [vmem:[%s11 + $0x10] sm:$0xff]
    %v2461 = vld [vmem:[%s11 + $0x18] sm:$0xff]
    %v2463 = vsel %vm76, %v2457, 0
    %2465 = vmatprep.subr.mxu0 0.0
    %2466 = vmatpush1.msra.mxu0 %v2458
    %2467 = vmatprep.subr.mxu0 0.0
    %2468 = vmatpush1.msra.mxu0 %v2459
    %2469 = vmatprep.subr.mxu0 0.0
    %2470 = vmatpush1.msra.mxu0 %v2460
    %2471 = vmatprep.subr.mxu0 0.0
    %2472 = vmatpush1.msra.mxu0 %v2461
    %2473 = vmatprep.subr.mxu0 0.0
    %2474 = vmatpush1.msra.mxu0 0.0
    %2475 = vmatprep.subr.mxu0 0.0
    %2476 = vmatpush1.msra.mxu0 0.0
    %2477 = vmatprep.subr.mxu0 0.0
    %2478 = vmatpush1.msra.mxu0 0.0
    %2479 = vmatprep.subr.mxu0 0.0
    %2480 = vmatpush1.msra.mxu0 0.0
    %2481 = vmatprep.subr.mxu0 0.0
    %2482 = vmatpush1.msra.mxu0 0.0
    %2483 = vmatprep.subr.mxu0 0.0
    %2484 = vmatpush1.msra.mxu0 0.0
    %2485 = vmatprep.subr.mxu0 0.0
    %2486 = vmatpush1.msra.mxu0 0.0
    %2487 = vmatprep.subr.mxu0 0.0
    %2488 = vmatpush1.msra.mxu0 0.0
    %2489 = vmatprep.subr.mxu0 0.0
    %2490 = vmatpush1.msra.mxu0 0.0
    %2491 = vmatprep.subr.mxu0 0.0
    %2492 = vmatpush1.msra.mxu0 0.0
    %2493 = vmatprep.subr.mxu0 0.0
    %2494 = vmatpush1.msra.mxu0 0.0
    %2495 = vmatprep.subr.mxu0 0.0
    %2496 = vmatpush1.msra.mxu0 0.0
    %2497 = vmatprep.subr.mxu0 0.0
    %2498 = vmatpush1.msra.mxu0 0.0
    %2499 = vmatprep.subr.mxu0 0.0
    %2500 = vmatpush1.msra.mxu0 0.0
    %2501 = vmatprep.subr.mxu0 0.0
    %2502 = vmatpush1.msra.mxu0 0.0
    %2503 = vmatprep.subr.mxu0 0.0
    %2504 = vmatpush1.msra.mxu0 0.0
    %2505 = vmatprep.subr.mxu0 0.0
    %2506 = vmatpush1.msra.mxu0 0.0
    %2507 = vmatprep.subr.mxu0 0.0
    %2508 = vmatpush1.msra.mxu0 0.0
    %2509 = vmatprep.subr.mxu0 0.0
    %2510 = vmatpush1.msra.mxu0 0.0
    %2511 = vmatprep.subr.mxu0 0.0
    %2512 = vmatpush1.msra.mxu0 0.0
    %2513 = vmatprep.subr.mxu0 0.0
    %2514 = vmatpush1.msra.mxu0 0.0
    %2515 = vmatprep.subr.mxu0 0.0
    %2516 = vmatpush1.msra.mxu0 0.0
    %2517 = vmatprep.subr.mxu0 0.0
    %2518 = vmatpush1.msra.mxu0 0.0
    %2519 = vmatprep.subr.mxu0 0.0
    %2520 = vmatpush1.msra.mxu0 0.0
    %2521 = vmatprep.subr.mxu0 0.0
    %2522 = vmatpush1.msra.mxu0 0.0
    %2523 = vmatprep.subr.mxu0 0.0
    %2524 = vmatpush1.msra.mxu0 0.0
    %2525 = vmatprep.subr.mxu0 0.0
    %2526 = vmatpush1.msra.mxu0 0.0
    %2527 = vmatprep.subr.mxu0 0.0
    %2528 = vmatpush1.msra.mxu0 0.0
    %2529 = vmatprep.mubr.f32.mxu0 0.0
    %2530 = vmatmul.mubr.f32.gmra.mrb[0].mxu0 %v2463
    %v2531 = vpop.f32.mrb[0].mxu0
    %v2532 = vadd.f32 0.0, %v2531
    %v2533 = vpop.f32.mrb[0].mxu0
    %2534 = vdwg.mxu0
    %vm2535 = vcmask 25600
    %2536 = vst.msk [vmem:[#allocation2] sm:$0x3] %vm2535, %v2532
    // Predicated region
    $region50: #{movie_classification_forward.1} parent=1 // pred_check
      _
    $region51: #{movie_classification_forward.1} parent=1 // pred_check_branch
      %2538 = sbr.rel (0) target = $region53
    $region52: #{movie_classification_forward.1} parent=1 // pred_region
      %s2540 = ssub.s32 32, 32
      %2541 = vsyncadd [#allocation3], %s2540
      %s2543 = sshll.u32 [#allocation2], 4
      %s2544 = int_to_ptr.vmem [resolvable:$true] %s2543
      %2546 = dma.vmem_to_hbm [thread:$0]  %s2544, 32, %s12, [#allocation3]
    $region53: #{movie_classification_forward.1} parent=1 // pred_fallthru
      _
    // Predicated region
    $region54: #{movie_classification_forward.1} parent=1 // pred_check
      _
    $region55: #{movie_classification_forward.1} parent=1 // pred_check_branch
      %2548 = sbr.rel (0) target = $region57
    $region56: #{movie_classification_forward.1} parent=1 // pred_region
      _
    $region57: #{movie_classification_forward.1} parent=1 // pred_fallthru
      _
    // Predicated region
    $region58: #{movie_classification_forward.1} parent=1 // pred_check
      _
    $region59: #{movie_classification_forward.1} parent=1 // pred_check_branch
      %2550 = sbr.rel (0) target = $region61
    $region60: #{movie_classification_forward.1} parent=1 // pred_region
      %2551 = dma.done [#allocation3], 32
    $region61: #{movie_classification_forward.1} parent=1 // pred_fallthru
      _
    // Predicated region
    $region62: #{movie_classification_forward.1} parent=1 // pred_check
      _
    $region63: #{movie_classification_forward.1} parent=1 // pred_check_branch
      %2553 = sbr.rel (0) target = $region65
    $region64: #{movie_classification_forward.1} parent=1 // pred_region
      _
    $region65: #{movie_classification_forward.1} parent=1 // pred_fallthru
      _
    %2554 = vsyncpa [#allocation3], 1

</llo_original>
